<compile_context>
chip_gen: v6e
topology: v6e:2x2x1
jax: 0.10.0
libtpu: 0.0.40
codegen_flags: <defaults>
</compile_context>

<pallas_src>
import jax
import jax.numpy as jnp
from jax.experimental import pallas as pl
from jax.experimental.pallas import tpu as pltpu

HIDDEN = 128
GATES = 4 * HIDDEN  # 512


# ----------------------------------------------------------------------------
# Fused Pallas kernel
# ----------------------------------------------------------------------------
def _encoder_kernel(x_ref, w0_ref, b0_ref, whh0f_ref, whh0b_ref,
                    wih1f_ref, b1f_ref, wih1b_ref, b1b_ref,
                    o_ref, gates_scr):
    # x_ref:      (T*N, 6)     time-major flattened input (row t*N + n)
    # w0_ref:     (6, 1024)    composed head+layer0 input projection [fwd | bwd]
    # b0_ref:     (1, 1024)
    # whh0{f,b}:  (128, 512)   layer-0 recurrent weights (transposed)
    # wih1{f,b}:  (256, 512)   layer-1 input weights (transposed)
    # b1{f,b}:    (1, 512)     layer-1  b_ih + b_hh
    # o_ref:      (N, 256)
    # gates_scr:  (T*N, 1024)  VMEM scratch: hoisted input-projection gates
    H = HIDDEN
    N = o_ref.shape[0]
    T = x_ref.shape[0] // N

    # Hoisted input projection (6->128 head folded in), both directions at once.
    gates_scr[...] = (
        jnp.dot(x_ref[...], w0_ref[...], preferred_element_type=jnp.float32)
        + b0_ref[...]
    )

    def cell(gates, c_prev):
        # PyTorch gate order: i, f, g, o
        i_g = jax.nn.sigmoid(gates[:, 0:H])
        f_g = jax.nn.sigmoid(gates[:, H:2 * H])
        g_g = jnp.tanh(gates[:, 2 * H:3 * H])
        o_g = jax.nn.sigmoid(gates[:, 3 * H:4 * H])
        c_new = f_g * c_prev + i_g * g_g
        return o_g * jnp.tanh(c_new), c_new

    def first_cell(gates):
        # h_prev = c_prev = 0: the forget-gate term vanishes exactly and there
        # is no h @ W_hh contribution.
        i_g = jax.nn.sigmoid(gates[:, 0:H])
        g_g = jnp.tanh(gates[:, 2 * H:3 * H])
        o_g = jax.nn.sigmoid(gates[:, 3 * H:4 * H])
        c_new = i_g * g_g
        return o_g * jnp.tanh(c_new), c_new

    def run_layer0_dir(col, whh_ref, reverse):
        # Full recurrence of one layer-0 direction.  T is static, so the loop
        # is fully unrolled (static, tile-aligned slices of gates_scr) and the
        # per-step work is just one (N,128)x(128,512) dot + elementwise.
        def gx(t):
            return gates_scr[t * N:(t + 1) * N, col:col + GATES]

        t0 = T - 1 if reverse else 0
        h, c = first_cell(gx(t0))
        h_first = h
        for k in range(1, T):
            t = T - 1 - k if reverse else k
            gates = gx(t) + jnp.dot(h, whh_ref[...],
                                    preferred_element_type=jnp.float32)
            h, c = cell(gates, c)
        return h_first, h   # (h at first processed timestep, h at last one)

    h0f_t0, h0f_tl = run_layer0_dir(0, whh0f_ref, reverse=False)      # fwd: t=0 .. T-1
    h0b_tl, h0b_t0 = run_layer0_dir(GATES, whh0b_ref, reverse=True)   # bwd: t=T-1 .. 0

    # Layer 1: only the forward cell at t=0 and the backward cell at t=T-1 are
    # ever read by the module; both start from h0=c0=0 so each is one cell
    # evaluation.  The (N, 256) layer-0 outputs are fed via split-K dots,
    # avoiding any in-kernel concatenation.
    g1f = (jnp.dot(h0f_t0, wih1f_ref[0:H, :], preferred_element_type=jnp.float32)
           + jnp.dot(h0b_t0, wih1f_ref[H:2 * H, :], preferred_element_type=jnp.float32)
           + b1f_ref[...])
    h1f, _ = first_cell(g1f)

    g1b = (jnp.dot(h0f_tl, wih1b_ref[0:H, :], preferred_element_type=jnp.float32)
           + jnp.dot(h0b_tl, wih1b_ref[H:2 * H, :], preferred_element_type=jnp.float32)
           + b1b_ref[...])
    h1b, _ = first_cell(g1b)

    o_ref[:, 0:H] = h1f.astype(o_ref.dtype)
    o_ref[:, H:2 * H] = h1b.astype(o_ref.dtype)


def _encoder_pallas(x_tm, w0, b0, whh0f, whh0b, wih1f, b1f, wih1b, b1b, *, n, t):
    tn = t * n
    return pl.pallas_call(
        _encoder_kernel,
        out_shape=jax.ShapeDtypeStruct((n, 2 * HIDDEN), jnp.float32),
        grid_spec=pltpu.PrefetchScalarGridSpec(
            num_scalar_prefetch=0,
            grid=(1,),
            in_specs=[
                pl.BlockSpec((tn, 6), lambda i: (0, 0)),
                pl.BlockSpec((6, 2 * GATES), lambda i: (0, 0)),
                pl.BlockSpec((1, 2 * GATES), lambda i: (0, 0)),
                pl.BlockSpec((HIDDEN, GATES), lambda i: (0, 0)),
                pl.BlockSpec((HIDDEN, GATES), lambda i: (0, 0)),
                pl.BlockSpec((2 * HIDDEN, GATES), lambda i: (0, 0)),
                pl.BlockSpec((1, GATES), lambda i: (0, 0)),
                pl.BlockSpec((2 * HIDDEN, GATES), lambda i: (0, 0)),
                pl.BlockSpec((1, GATES), lambda i: (0, 0)),
            ],
            out_specs=pl.BlockSpec((n, 2 * HIDDEN), lambda i: (0, 0)),
            scratch_shapes=[pltpu.VMEM((tn, 2 * GATES), jnp.float32)],
        ),
        compiler_params=pltpu.CompilerParams(dimension_semantics=("arbitrary",)),
    )(x_tm, w0, b0, whh0f, whh0b, wih1f, b1f, wih1b, b1b)


# ----------------------------------------------------------------------------
# Module: parameter init + forward
# ----------------------------------------------------------------------------
def init_params(key):
    """Deterministic init mimicking PyTorch uniform(-1/sqrt(H), 1/sqrt(H))."""
    k = 1.0 / jnp.sqrt(jnp.float32(HIDDEN))

    def u(key, shape):
        return jax.random.uniform(key, shape, jnp.float32, -k, k)

    keys = jax.random.split(key, 32)
    ki = iter(keys)
    params = {
        # rnn_imu_head: Linear(6, 128) -- stored transposed (Din, Dout)
        "w_head": u(next(ki), (6, HIDDEN)),
        "b_head": u(next(ki), (HIDDEN,)),
    }
    # LSTM: 2 layers, bidirectional.  Layer 0 input = 128, layer 1 input = 256.
    for layer, din in ((0, HIDDEN), (1, 2 * HIDDEN)):
        for direction in ("fwd", "bwd"):
            w_ih_t = u(next(ki), (din, 4 * HIDDEN))      # transposed W_ih
            w_hh_t = u(next(ki), (HIDDEN, 4 * HIDDEN))   # transposed W_hh
            b_ih = u(next(ki), (4 * HIDDEN,))
            b_hh = u(next(ki), (4 * HIDDEN,))
            params[f"l{layer}_{direction}"] = (w_ih_t, w_hh_t, b_ih + b_hh)
    return params


@jax.jit
def inertial_encoder_forward(x, params):
    # x: (B, S, T, 6)
    B, S, T, C = x.shape
    N = B * S
    hi = jax.lax.Precision.HIGHEST

    # Fold the Linear(6,128) head into the layer-0 input projection and fuse
    # both directions along the output (lane) axis: W0 (6, 1024), b0 (1024,).
    wih0 = jnp.concatenate([params["l0_fwd"][0], params["l0_bwd"][0]], axis=1)
    b0_cat = jnp.concatenate([params["l0_fwd"][2], params["l0_bwd"][2]], axis=0)
    w0 = jnp.dot(params["w_head"], wih0, precision=hi)
    b0 = jnp.dot(params["b_head"], wih0, precision=hi) + b0_cat

    # time-major flatten: row t*N + n  <->  (timestep t, sample n)
    x_tm = x.reshape(N, T, C).transpose(1, 0, 2).reshape(T * N, C)

    out = _encoder_pallas(
        x_tm, w0, b0.reshape(1, -1),
        params["l0_fwd"][1], params["l0_bwd"][1],
        params["l1_fwd"][0], params["l1_fwd"][2].reshape(1, -1),
        params["l1_bwd"][0], params["l1_bwd"][2].reshape(1, -1),
        n=N, t=T)
    return out.reshape(B, S, 2 * HIDDEN)


# ----------------------------------------------------------------------------
# Pure-JAX reference (full, unoptimized bi-LSTM) for a tolerance check
# ----------------------------------------------------------------------------
@jax.jit
def reference_forward(x, params):
    B, S, T, C = x.shape
    N = B * S
    H = HIDDEN
    hi = jax.lax.Precision.HIGHEST

    h = jnp.dot(x.reshape(N * T, C), params["w_head"], precision=hi) + params["b_head"]
    layer_in = h.reshape(N, T, H)

    for layer in range(2):
        dir_outs = []
        for direction, reverse in (("fwd", False), ("bwd", True)):
            w_ih_t, w_hh_t, b = params[f"l{layer}_{direction}"]
            hh = jnp.zeros((N, H), jnp.float32)
            cc = jnp.zeros((N, H), jnp.float32)
            outs = [None] * T
            order = range(T - 1, -1, -1) if reverse else range(T)
            for t in order:
                gates = (jnp.dot(layer_in[:, t, :], w_ih_t, precision=hi)
                         + jnp.dot(hh, w_hh_t, precision=hi) + b)
                i_g = jax.nn.sigmoid(gates[:, 0:H])
                f_g = jax.nn.sigmoid(gates[:, H:2 * H])
                g_g = jnp.tanh(gates[:, 2 * H:3 * H])
                o_g = jax.nn.sigmoid(gates[:, 3 * H:4 * H])
                cc = f_g * cc + i_g * g_g
                hh = o_g * jnp.tanh(cc)
                outs[t] = hh
            dir_outs.append(jnp.stack(outs, axis=1))  # (N, T, H)
        layer_in = jnp.concatenate(dir_outs, axis=-1)  # (N, T, 2H)
        # nn.LSTM inter-layer dropout(0.2) is training-only; eval = identity.

    out = jnp.concatenate(
        [layer_in[:, 0, 0:H], layer_in[:, -1, H:2 * H]], axis=-1)
    return out.reshape(B, S, 2 * H)


if __name__ == "__main__":
    key = jax.random.PRNGKey(0)
    pkey, xkey = jax.random.split(key)

    params = init_params(pkey)

    B, S, T, C = 2, 4, 8, 6  # batch, seq, imu-window, imu-channels
    x = jax.random.normal(xkey, (B, S, T, C), jnp.float32)

    out = inertial_encoder_forward(x, params)
    out = jax.block_until_ready(out)

    ref = jax.block_until_ready(reference_forward(x, params))

    assert out.shape == (B, S, 256), out.shape
    assert jnp.all(jnp.isfinite(out))
    max_err = float(jnp.max(jnp.abs(out - ref)))
    assert max_err < 5e-2, max_err
    print("KERNEL_OK")
</pallas_src>

<mosaic_0001>
module attributes {stable_mosaic.version = 11 : i64} {
  func.func @_encoder_kernel(%arg0: i32, %arg1: memref<64x6xf32, #tpu.memory_space<vmem>>, %arg2: memref<6x1024xf32, #tpu.memory_space<vmem>>, %arg3: memref<1x1024xf32, #tpu.memory_space<vmem>>, %arg4: memref<128x512xf32, #tpu.memory_space<vmem>>, %arg5: memref<128x512xf32, #tpu.memory_space<vmem>>, %arg6: memref<256x512xf32, #tpu.memory_space<vmem>>, %arg7: memref<1x512xf32, #tpu.memory_space<vmem>>, %arg8: memref<256x512xf32, #tpu.memory_space<vmem>>, %arg9: memref<1x512xf32, #tpu.memory_space<vmem>>, %arg10: memref<8x256xf32, #tpu.memory_space<vmem>>, %arg11: memref<64x1024xf32, #tpu.memory_space<vmem>>) attributes {dimension_semantics = [#tpu.dimension_semantics<arbitrary>], iteration_bounds = array<i64: 1>, scalar_prefetch = 0 : i64, scratch_operands = 1 : i64, tpu.core_type = #tpu.core_type<tc>, window_params = [{pipeline_mode = #tpu.pipeline_mode<synchronous>, transform_indices = @transform_0, window_bounds = array<i64: 64, 6>}, {pipeline_mode = #tpu.pipeline_mode<synchronous>, transform_indices = @transform_1, window_bounds = array<i64: 6, 1024>}, {pipeline_mode = #tpu.pipeline_mode<synchronous>, transform_indices = @transform_2, window_bounds = array<i64: 1, 1024>}, {pipeline_mode = #tpu.pipeline_mode<synchronous>, transform_indices = @transform_3, window_bounds = array<i64: 128, 512>}, {pipeline_mode = #tpu.pipeline_mode<synchronous>, transform_indices = @transform_4, window_bounds = array<i64: 128, 512>}, {pipeline_mode = #tpu.pipeline_mode<synchronous>, transform_indices = @transform_5, window_bounds = array<i64: 256, 512>}, {pipeline_mode = #tpu.pipeline_mode<synchronous>, transform_indices = @transform_6, window_bounds = array<i64: 1, 512>}, {pipeline_mode = #tpu.pipeline_mode<synchronous>, transform_indices = @transform_7, window_bounds = array<i64: 256, 512>}, {pipeline_mode = #tpu.pipeline_mode<synchronous>, transform_indices = @transform_8, window_bounds = array<i64: 1, 512>}, {pipeline_mode = #tpu.pipeline_mode<synchronous>, transform_indices = @transform_9, window_bounds = array<i64: 8, 256>}]} {
    %c0 = arith.constant 0 : index
    %c0_0 = arith.constant 0 : index
    %0 = vector.load %arg1[%c0, %c0_0] : memref<64x6xf32, #tpu.memory_space<vmem>>, vector<64x6xf32>
    %c0_1 = arith.constant 0 : index
    %c0_2 = arith.constant 0 : index
    %1 = vector.load %arg2[%c0_1, %c0_2] : memref<6x1024xf32, #tpu.memory_space<vmem>>, vector<6x1024xf32>
    %cst = arith.constant dense<0.000000e+00> : vector<64x1024xf32>
    %2 = tpu.matmul %0, %1, %cst {dimension_numbers = #tpu.dot_dimension_numbers<[1], [0], [0], [1], [0, 0, 1, 1], [], []>} : vector<64x6xf32>, vector<6x1024xf32>, vector<64x1024xf32> -> vector<64x1024xf32>
    %c0_3 = arith.constant 0 : index
    %c0_4 = arith.constant 0 : index
    %3 = vector.load %arg3[%c0_3, %c0_4] : memref<1x1024xf32, #tpu.memory_space<vmem>>, vector<1x1024xf32>
    %4 = vector.broadcast %3 : vector<1x1024xf32> to vector<64x1024xf32>
    %5 = arith.addf %2, %4 : vector<64x1024xf32>
    %c0_5 = arith.constant 0 : index
    %c0_6 = arith.constant 0 : index
    %6 = vector.load %arg11[%c0_5, %c0_6] : memref<64x1024xf32, #tpu.memory_space<vmem>>, vector<64x1024xf32>
    tpu.vector_store %arg11[%c0_5, %c0_6], %5 {strides = array<i32>} : memref<64x1024xf32, #tpu.memory_space<vmem>>, vector<64x1024xf32>,
    %c0_7 = arith.constant 0 : index
    %c0_8 = arith.constant 0 : index
    %7 = vector.load %arg11[%c0_7, %c0_8] : memref<64x1024xf32, #tpu.memory_space<vmem>>, vector<8x512xf32>
    %8 = vector.extract_strided_slice %7 {offsets = [0, 0], sizes = [8, 128], strides = [1, 1]} : vector<8x512xf32> to vector<8x128xf32>
    %9 = arith.negf %8 : vector<8x128xf32>
    %10 = math.exp %9 : vector<8x128xf32>
    %cst_9 = arith.constant 1.000000e+00 : f32
    %11 = vector.broadcast %cst_9 : f32 to vector<8x128xf32>
    %12 = arith.addf %11, %10 : vector<8x128xf32>
    %13 = arith.divf %11, %12 : vector<8x128xf32>
    %14 = vector.extract_strided_slice %7 {offsets = [0, 256], sizes = [8, 128], strides = [1, 1]} : vector<8x512xf32> to vector<8x128xf32>
    %15 = math.tanh %14 : vector<8x128xf32>
    %16 = vector.extract_strided_slice %7 {offsets = [0, 384], sizes = [8, 128], strides = [1, 1]} : vector<8x512xf32> to vector<8x128xf32>
    %17 = arith.negf %16 : vector<8x128xf32>
    %18 = math.exp %17 : vector<8x128xf32>
    %cst_10 = arith.constant 1.000000e+00 : f32
    %19 = vector.broadcast %cst_10 : f32 to vector<8x128xf32>
    %20 = arith.addf %19, %18 : vector<8x128xf32>
    %21 = arith.divf %19, %20 : vector<8x128xf32>
    %22 = arith.mulf %13, %15 : vector<8x128xf32>
    %23 = math.tanh %22 : vector<8x128xf32>
    %24 = arith.mulf %21, %23 : vector<8x128xf32>
    %c8 = arith.constant 8 : index
    %c0_11 = arith.constant 0 : index
    %25 = vector.load %arg11[%c8, %c0_11] : memref<64x1024xf32, #tpu.memory_space<vmem>>, vector<8x512xf32>
    %c0_12 = arith.constant 0 : index
    %c0_13 = arith.constant 0 : index
    %26 = vector.load %arg4[%c0_12, %c0_13] : memref<128x512xf32, #tpu.memory_space<vmem>>, vector<128x512xf32>
    %cst_14 = arith.constant dense<0.000000e+00> : vector<8x512xf32>
    %27 = tpu.matmul %24, %26, %cst_14 {dimension_numbers = #tpu.dot_dimension_numbers<[1], [0], [0], [1], [0, 0, 1, 1], [], []>} : vector<8x128xf32>, vector<128x512xf32>, vector<8x512xf32> -> vector<8x512xf32>
    %28 = arith.addf %25, %27 : vector<8x512xf32>
    %29 = vector.extract_strided_slice %28 {offsets = [0, 0], sizes = [8, 128], strides = [1, 1]} : vector<8x512xf32> to vector<8x128xf32>
    %30 = arith.negf %29 : vector<8x128xf32>
    %31 = math.exp %30 : vector<8x128xf32>
    %cst_15 = arith.constant 1.000000e+00 : f32
    %32 = vector.broadcast %cst_15 : f32 to vector<8x128xf32>
    %33 = arith.addf %32, %31 : vector<8x128xf32>
    %34 = arith.divf %32, %33 : vector<8x128xf32>
    %35 = vector.extract_strided_slice %28 {offsets = [0, 128], sizes = [8, 128], strides = [1, 1]} : vector<8x512xf32> to vector<8x128xf32>
    %36 = arith.negf %35 : vector<8x128xf32>
    %37 = math.exp %36 : vector<8x128xf32>
    %cst_16 = arith.constant 1.000000e+00 : f32
    %38 = vector.broadcast %cst_16 : f32 to vector<8x128xf32>
    %39 = arith.addf %38, %37 : vector<8x128xf32>
    %40 = arith.divf %38, %39 : vector<8x128xf32>
    %41 = vector.extract_strided_slice %28 {offsets = [0, 256], sizes = [8, 128], strides = [1, 1]} : vector<8x512xf32> to vector<8x128xf32>
    %42 = math.tanh %41 : vector<8x128xf32>
    %43 = vector.extract_strided_slice %28 {offsets = [0, 384], sizes = [8, 128], strides = [1, 1]} : vector<8x512xf32> to vector<8x128xf32>
    %44 = arith.negf %43 : vector<8x128xf32>
    %45 = math.exp %44 : vector<8x128xf32>
    %cst_17 = arith.constant 1.000000e+00 : f32
    %46 = vector.broadcast %cst_17 : f32 to vector<8x128xf32>
    %47 = arith.addf %46, %45 : vector<8x128xf32>
    %48 = arith.divf %46, %47 : vector<8x128xf32>
    %49 = arith.mulf %40, %22 : vector<8x128xf32>
    %50 = arith.mulf %34, %42 : vector<8x128xf32>
    %51 = arith.addf %49, %50 : vector<8x128xf32>
    %52 = math.tanh %51 : vector<8x128xf32>
    %53 = arith.mulf %48, %52 : vector<8x128xf32>
    %c16 = arith.constant 16 : index
    %c0_18 = arith.constant 0 : index
    %54 = vector.load %arg11[%c16, %c0_18] : memref<64x1024xf32, #tpu.memory_space<vmem>>, vector<8x512xf32>
    %c0_19 = arith.constant 0 : index
    %c0_20 = arith.constant 0 : index
    %55 = vector.load %arg4[%c0_19, %c0_20] : memref<128x512xf32, #tpu.memory_space<vmem>>, vector<128x512xf32>
    %cst_21 = arith.constant dense<0.000000e+00> : vector<8x512xf32>
    %56 = tpu.matmul %53, %55, %cst_21 {dimension_numbers = #tpu.dot_dimension_numbers<[1], [0], [0], [1], [0, 0, 1, 1], [], []>} : vector<8x128xf32>, vector<128x512xf32>, vector<8x512xf32> -> vector<8x512xf32>
    %57 = arith.addf %54, %56 : vector<8x512xf32>
    %58 = vector.extract_strided_slice %57 {offsets = [0, 0], sizes = [8, 128], strides = [1, 1]} : vector<8x512xf32> to vector<8x128xf32>
    %59 = arith.negf %58 : vector<8x128xf32>
    %60 = math.exp %59 : vector<8x128xf32>
    %cst_22 = arith.constant 1.000000e+00 : f32
    %61 = vector.broadcast %cst_22 : f32 to vector<8x128xf32>
    %62 = arith.addf %61, %60 : vector<8x128xf32>
    %63 = arith.divf %61, %62 : vector<8x128xf32>
    %64 = vector.extract_strided_slice %57 {offsets = [0, 128], sizes = [8, 128], strides = [1, 1]} : vector<8x512xf32> to vector<8x128xf32>
    %65 = arith.negf %64 : vector<8x128xf32>
    %66 = math.exp %65 : vector<8x128xf32>
    %cst_23 = arith.constant 1.000000e+00 : f32
    %67 = vector.broadcast %cst_23 : f32 to vector<8x128xf32>
    %68 = arith.addf %67, %66 : vector<8x128xf32>
    %69 = arith.divf %67, %68 : vector<8x128xf32>
    %70 = vector.extract_strided_slice %57 {offsets = [0, 256], sizes = [8, 128], strides = [1, 1]} : vector<8x512xf32> to vector<8x128xf32>
    %71 = math.tanh %70 : vector<8x128xf32>
    %72 = vector.extract_strided_slice %57 {offsets = [0, 384], sizes = [8, 128], strides = [1, 1]} : vector<8x512xf32> to vector<8x128xf32>
    %73 = arith.negf %72 : vector<8x128xf32>
    %74 = math.exp %73 : vector<8x128xf32>
    %cst_24 = arith.constant 1.000000e+00 : f32
    %75 = vector.broadcast %cst_24 : f32 to vector<8x128xf32>
    %76 = arith.addf %75, %74 : vector<8x128xf32>
    %77 = arith.divf %75, %76 : vector<8x128xf32>
    %78 = arith.mulf %69, %51 : vector<8x128xf32>
    %79 = arith.mulf %63, %71 : vector<8x128xf32>
    %80 = arith.addf %78, %79 : vector<8x128xf32>
    %81 = math.tanh %80 : vector<8x128xf32>
    %82 = arith.mulf %77, %81 : vector<8x128xf32>
    %c24 = arith.constant 24 : index
    %c0_25 = arith.constant 0 : index
    %83 = vector.load %arg11[%c24, %c0_25] : memref<64x1024xf32, #tpu.memory_space<vmem>>, vector<8x512xf32>
    %c0_26 = arith.constant 0 : index
    %c0_27 = arith.constant 0 : index
    %84 = vector.load %arg4[%c0_26, %c0_27] : memref<128x512xf32, #tpu.memory_space<vmem>>, vector<128x512xf32>
    %cst_28 = arith.constant dense<0.000000e+00> : vector<8x512xf32>
    %85 = tpu.matmul %82, %84, %cst_28 {dimension_numbers = #tpu.dot_dimension_numbers<[1], [0], [0], [1], [0, 0, 1, 1], [], []>} : vector<8x128xf32>, vector<128x512xf32>, vector<8x512xf32> -> vector<8x512xf32>
    %86 = arith.addf %83, %85 : vector<8x512xf32>
    %87 = vector.extract_strided_slice %86 {offsets = [0, 0], sizes = [8, 128], strides = [1, 1]} : vector<8x512xf32> to vector<8x128xf32>
    %88 = arith.negf %87 : vector<8x128xf32>
    %89 = math.exp %88 : vector<8x128xf32>
    %cst_29 = arith.constant 1.000000e+00 : f32
    %90 = vector.broadcast %cst_29 : f32 to vector<8x128xf32>
    %91 = arith.addf %90, %89 : vector<8x128xf32>
    %92 = arith.divf %90, %91 : vector<8x128xf32>
    %93 = vector.extract_strided_slice %86 {offsets = [0, 128], sizes = [8, 128], strides = [1, 1]} : vector<8x512xf32> to vector<8x128xf32>
    %94 = arith.negf %93 : vector<8x128xf32>
    %95 = math.exp %94 : vector<8x128xf32>
    %cst_30 = arith.constant 1.000000e+00 : f32
    %96 = vector.broadcast %cst_30 : f32 to vector<8x128xf32>
    %97 = arith.addf %96, %95 : vector<8x128xf32>
    %98 = arith.divf %96, %97 : vector<8x128xf32>
    %99 = vector.extract_strided_slice %86 {offsets = [0, 256], sizes = [8, 128], strides = [1, 1]} : vector<8x512xf32> to vector<8x128xf32>
    %100 = math.tanh %99 : vector<8x128xf32>
    %101 = vector.extract_strided_slice %86 {offsets = [0, 384], sizes = [8, 128], strides = [1, 1]} : vector<8x512xf32> to vector<8x128xf32>
    %102 = arith.negf %101 : vector<8x128xf32>
    %103 = math.exp %102 : vector<8x128xf32>
    %cst_31 = arith.constant 1.000000e+00 : f32
    %104 = vector.broadcast %cst_31 : f32 to vector<8x128xf32>
    %105 = arith.addf %104, %103 : vector<8x128xf32>
    %106 = arith.divf %104, %105 : vector<8x128xf32>
    %107 = arith.mulf %98, %80 : vector<8x128xf32>
    %108 = arith.mulf %92, %100 : vector<8x128xf32>
    %109 = arith.addf %107, %108 : vector<8x128xf32>
    %110 = math.tanh %109 : vector<8x128xf32>
    %111 = arith.mulf %106, %110 : vector<8x128xf32>
    %c32 = arith.constant 32 : index
    %c0_32 = arith.constant 0 : index
    %112 = vector.load %arg11[%c32, %c0_32] : memref<64x1024xf32, #tpu.memory_space<vmem>>, vector<8x512xf32>
    %c0_33 = arith.constant 0 : index
    %c0_34 = arith.constant 0 : index
    %113 = vector.load %arg4[%c0_33, %c0_34] : memref<128x512xf32, #tpu.memory_space<vmem>>, vector<128x512xf32>
    %cst_35 = arith.constant dense<0.000000e+00> : vector<8x512xf32>
    %114 = tpu.matmul %111, %113, %cst_35 {dimension_numbers = #tpu.dot_dimension_numbers<[1], [0], [0], [1], [0, 0, 1, 1], [], []>} : vector<8x128xf32>, vector<128x512xf32>, vector<8x512xf32> -> vector<8x512xf32>
    %115 = arith.addf %112, %114 : vector<8x512xf32>
    %116 = vector.extract_strided_slice %115 {offsets = [0, 0], sizes = [8, 128], strides = [1, 1]} : vector<8x512xf32> to vector<8x128xf32>
    %117 = arith.negf %116 : vector<8x128xf32>
    %118 = math.exp %117 : vector<8x128xf32>
    %cst_36 = arith.constant 1.000000e+00 : f32
    %119 = vector.broadcast %cst_36 : f32 to vector<8x128xf32>
    %120 = arith.addf %119, %118 : vector<8x128xf32>
    %121 = arith.divf %119, %120 : vector<8x128xf32>
    %122 = vector.extract_strided_slice %115 {offsets = [0, 128], sizes = [8, 128], strides = [1, 1]} : vector<8x512xf32> to vector<8x128xf32>
    %123 = arith.negf %122 : vector<8x128xf32>
    %124 = math.exp %123 : vector<8x128xf32>
    %cst_37 = arith.constant 1.000000e+00 : f32
    %125 = vector.broadcast %cst_37 : f32 to vector<8x128xf32>
    %126 = arith.addf %125, %124 : vector<8x128xf32>
    %127 = arith.divf %125, %126 : vector<8x128xf32>
    %128 = vector.extract_strided_slice %115 {offsets = [0, 256], sizes = [8, 128], strides = [1, 1]} : vector<8x512xf32> to vector<8x128xf32>
    %129 = math.tanh %128 : vector<8x128xf32>
    %130 = vector.extract_strided_slice %115 {offsets = [0, 384], sizes = [8, 128], strides = [1, 1]} : vector<8x512xf32> to vector<8x128xf32>
    %131 = arith.negf %130 : vector<8x128xf32>
    %132 = math.exp %131 : vector<8x128xf32>
    %cst_38 = arith.constant 1.000000e+00 : f32
    %133 = vector.broadcast %cst_38 : f32 to vector<8x128xf32>
    %134 = arith.addf %133, %132 : vector<8x128xf32>
    %135 = arith.divf %133, %134 : vector<8x128xf32>
    %136 = arith.mulf %127, %109 : vector<8x128xf32>
    %137 = arith.mulf %121, %129 : vector<8x128xf32>
    %138 = arith.addf %136, %137 : vector<8x128xf32>
    %139 = math.tanh %138 : vector<8x128xf32>
    %140 = arith.mulf %135, %139 : vector<8x128xf32>
    %c40 = arith.constant 40 : index
    %c0_39 = arith.constant 0 : index
    %141 = vector.load %arg11[%c40, %c0_39] : memref<64x1024xf32, #tpu.memory_space<vmem>>, vector<8x512xf32>
    %c0_40 = arith.constant 0 : index
    %c0_41 = arith.constant 0 : index
    %142 = vector.load %arg4[%c0_40, %c0_41] : memref<128x512xf32, #tpu.memory_space<vmem>>, vector<128x512xf32>
    %cst_42 = arith.constant dense<0.000000e+00> : vector<8x512xf32>
    %143 = tpu.matmul %140, %142, %cst_42 {dimension_numbers = #tpu.dot_dimension_numbers<[1], [0], [0], [1], [0, 0, 1, 1], [], []>} : vector<8x128xf32>, vector<128x512xf32>, vector<8x512xf32> -> vector<8x512xf32>
    %144 = arith.addf %141, %143 : vector<8x512xf32>
    %145 = vector.extract_strided_slice %144 {offsets = [0, 0], sizes = [8, 128], strides = [1, 1]} : vector<8x512xf32> to vector<8x128xf32>
    %146 = arith.negf %145 : vector<8x128xf32>
    %147 = math.exp %146 : vector<8x128xf32>
    %cst_43 = arith.constant 1.000000e+00 : f32
    %148 = vector.broadcast %cst_43 : f32 to vector<8x128xf32>
    %149 = arith.addf %148, %147 : vector<8x128xf32>
    %150 = arith.divf %148, %149 : vector<8x128xf32>
    %151 = vector.extract_strided_slice %144 {offsets = [0, 128], sizes = [8, 128], strides = [1, 1]} : vector<8x512xf32> to vector<8x128xf32>
    %152 = arith.negf %151 : vector<8x128xf32>
    %153 = math.exp %152 : vector<8x128xf32>
    %cst_44 = arith.constant 1.000000e+00 : f32
    %154 = vector.broadcast %cst_44 : f32 to vector<8x128xf32>
    %155 = arith.addf %154, %153 : vector<8x128xf32>
    %156 = arith.divf %154, %155 : vector<8x128xf32>
    %157 = vector.extract_strided_slice %144 {offsets = [0, 256], sizes = [8, 128], strides = [1, 1]} : vector<8x512xf32> to vector<8x128xf32>
    %158 = math.tanh %157 : vector<8x128xf32>
    %159 = vector.extract_strided_slice %144 {offsets = [0, 384], sizes = [8, 128], strides = [1, 1]} : vector<8x512xf32> to vector<8x128xf32>
    %160 = arith.negf %159 : vector<8x128xf32>
    %161 = math.exp %160 : vector<8x128xf32>
    %cst_45 = arith.constant 1.000000e+00 : f32
    %162 = vector.broadcast %cst_45 : f32 to vector<8x128xf32>
    %163 = arith.addf %162, %161 : vector<8x128xf32>
    %164 = arith.divf %162, %163 : vector<8x128xf32>
    %165 = arith.mulf %156, %138 : vector<8x128xf32>
    %166 = arith.mulf %150, %158 : vector<8x128xf32>
    %167 = arith.addf %165, %166 : vector<8x128xf32>
    %168 = math.tanh %167 : vector<8x128xf32>
    %169 = arith.mulf %164, %168 : vector<8x128xf32>
    %c48 = arith.constant 48 : index
    %c0_46 = arith.constant 0 : index
    %170 = vector.load %arg11[%c48, %c0_46] : memref<64x1024xf32, #tpu.memory_space<vmem>>, vector<8x512xf32>
    %c0_47 = arith.constant 0 : index
    %c0_48 = arith.constant 0 : index
    %171 = vector.load %arg4[%c0_47, %c0_48] : memref<128x512xf32, #tpu.memory_space<vmem>>, vector<128x512xf32>
    %cst_49 = arith.constant dense<0.000000e+00> : vector<8x512xf32>
    %172 = tpu.matmul %169, %171, %cst_49 {dimension_numbers = #tpu.dot_dimension_numbers<[1], [0], [0], [1], [0, 0, 1, 1], [], []>} : vector<8x128xf32>, vector<128x512xf32>, vector<8x512xf32> -> vector<8x512xf32>
    %173 = arith.addf %170, %172 : vector<8x512xf32>
    %174 = vector.extract_strided_slice %173 {offsets = [0, 0], sizes = [8, 128], strides = [1, 1]} : vector<8x512xf32> to vector<8x128xf32>
    %175 = arith.negf %174 : vector<8x128xf32>
    %176 = math.exp %175 : vector<8x128xf32>
    %cst_50 = arith.constant 1.000000e+00 : f32
    %177 = vector.broadcast %cst_50 : f32 to vector<8x128xf32>
    %178 = arith.addf %177, %176 : vector<8x128xf32>
    %179 = arith.divf %177, %178 : vector<8x128xf32>
    %180 = vector.extract_strided_slice %173 {offsets = [0, 128], sizes = [8, 128], strides = [1, 1]} : vector<8x512xf32> to vector<8x128xf32>
    %181 = arith.negf %180 : vector<8x128xf32>
    %182 = math.exp %181 : vector<8x128xf32>
    %cst_51 = arith.constant 1.000000e+00 : f32
    %183 = vector.broadcast %cst_51 : f32 to vector<8x128xf32>
    %184 = arith.addf %183, %182 : vector<8x128xf32>
    %185 = arith.divf %183, %184 : vector<8x128xf32>
    %186 = vector.extract_strided_slice %173 {offsets = [0, 256], sizes = [8, 128], strides = [1, 1]} : vector<8x512xf32> to vector<8x128xf32>
    %187 = math.tanh %186 : vector<8x128xf32>
    %188 = vector.extract_strided_slice %173 {offsets = [0, 384], sizes = [8, 128], strides = [1, 1]} : vector<8x512xf32> to vector<8x128xf32>
    %189 = arith.negf %188 : vector<8x128xf32>
    %190 = math.exp %189 : vector<8x128xf32>
    %cst_52 = arith.constant 1.000000e+00 : f32
    %191 = vector.broadcast %cst_52 : f32 to vector<8x128xf32>
    %192 = arith.addf %191, %190 : vector<8x128xf32>
    %193 = arith.divf %191, %192 : vector<8x128xf32>
    %194 = arith.mulf %185, %167 : vector<8x128xf32>
    %195 = arith.mulf %179, %187 : vector<8x128xf32>
    %196 = arith.addf %194, %195 : vector<8x128xf32>
    %197 = math.tanh %196 : vector<8x128xf32>
    %198 = arith.mulf %193, %197 : vector<8x128xf32>
    %c56 = arith.constant 56 : index
    %c0_53 = arith.constant 0 : index
    %199 = vector.load %arg11[%c56, %c0_53] : memref<64x1024xf32, #tpu.memory_space<vmem>>, vector<8x512xf32>
    %c0_54 = arith.constant 0 : index
    %c0_55 = arith.constant 0 : index
    %200 = vector.load %arg4[%c0_54, %c0_55] : memref<128x512xf32, #tpu.memory_space<vmem>>, vector<128x512xf32>
    %cst_56 = arith.constant dense<0.000000e+00> : vector<8x512xf32>
    %201 = tpu.matmul %198, %200, %cst_56 {dimension_numbers = #tpu.dot_dimension_numbers<[1], [0], [0], [1], [0, 0, 1, 1], [], []>} : vector<8x128xf32>, vector<128x512xf32>, vector<8x512xf32> -> vector<8x512xf32>
    %202 = arith.addf %199, %201 : vector<8x512xf32>
    %203 = vector.extract_strided_slice %202 {offsets = [0, 0], sizes = [8, 128], strides = [1, 1]} : vector<8x512xf32> to vector<8x128xf32>
    %204 = arith.negf %203 : vector<8x128xf32>
    %205 = math.exp %204 : vector<8x128xf32>
    %cst_57 = arith.constant 1.000000e+00 : f32
    %206 = vector.broadcast %cst_57 : f32 to vector<8x128xf32>
    %207 = arith.addf %206, %205 : vector<8x128xf32>
    %208 = arith.divf %206, %207 : vector<8x128xf32>
    %209 = vector.extract_strided_slice %202 {offsets = [0, 128], sizes = [8, 128], strides = [1, 1]} : vector<8x512xf32> to vector<8x128xf32>
    %210 = arith.negf %209 : vector<8x128xf32>
    %211 = math.exp %210 : vector<8x128xf32>
    %cst_58 = arith.constant 1.000000e+00 : f32
    %212 = vector.broadcast %cst_58 : f32 to vector<8x128xf32>
    %213 = arith.addf %212, %211 : vector<8x128xf32>
    %214 = arith.divf %212, %213 : vector<8x128xf32>
    %215 = vector.extract_strided_slice %202 {offsets = [0, 256], sizes = [8, 128], strides = [1, 1]} : vector<8x512xf32> to vector<8x128xf32>
    %216 = math.tanh %215 : vector<8x128xf32>
    %217 = vector.extract_strided_slice %202 {offsets = [0, 384], sizes = [8, 128], strides = [1, 1]} : vector<8x512xf32> to vector<8x128xf32>
    %218 = arith.negf %217 : vector<8x128xf32>
    %219 = math.exp %218 : vector<8x128xf32>
    %cst_59 = arith.constant 1.000000e+00 : f32
    %220 = vector.broadcast %cst_59 : f32 to vector<8x128xf32>
    %221 = arith.addf %220, %219 : vector<8x128xf32>
    %222 = arith.divf %220, %221 : vector<8x128xf32>
    %223 = arith.mulf %214, %196 : vector<8x128xf32>
    %224 = arith.mulf %208, %216 : vector<8x128xf32>
    %225 = arith.addf %223, %224 : vector<8x128xf32>
    %226 = math.tanh %225 : vector<8x128xf32>
    %227 = arith.mulf %222, %226 : vector<8x128xf32>
    %c56_60 = arith.constant 56 : index
    %c512 = arith.constant 512 : index
    %228 = vector.load %arg11[%c56_60, %c512] : memref<64x1024xf32, #tpu.memory_space<vmem>>, vector<8x512xf32>
    %229 = vector.extract_strided_slice %228 {offsets = [0, 0], sizes = [8, 128], strides = [1, 1]} : vector<8x512xf32> to vector<8x128xf32>
    %230 = arith.negf %229 : vector<8x128xf32>
    %231 = math.exp %230 : vector<8x128xf32>
    %cst_61 = arith.constant 1.000000e+00 : f32
    %232 = vector.broadcast %cst_61 : f32 to vector<8x128xf32>
    %233 = arith.addf %232, %231 : vector<8x128xf32>
    %234 = arith.divf %232, %233 : vector<8x128xf32>
    %235 = vector.extract_strided_slice %228 {offsets = [0, 256], sizes = [8, 128], strides = [1, 1]} : vector<8x512xf32> to vector<8x128xf32>
    %236 = math.tanh %235 : vector<8x128xf32>
    %237 = vector.extract_strided_slice %228 {offsets = [0, 384], sizes = [8, 128], strides = [1, 1]} : vector<8x512xf32> to vector<8x128xf32>
    %238 = arith.negf %237 : vector<8x128xf32>
    %239 = math.exp %238 : vector<8x128xf32>
    %cst_62 = arith.constant 1.000000e+00 : f32
    %240 = vector.broadcast %cst_62 : f32 to vector<8x128xf32>
    %241 = arith.addf %240, %239 : vector<8x128xf32>
    %242 = arith.divf %240, %241 : vector<8x128xf32>
    %243 = arith.mulf %234, %236 : vector<8x128xf32>
    %244 = math.tanh %243 : vector<8x128xf32>
    %245 = arith.mulf %242, %244 : vector<8x128xf32>
    %c48_63 = arith.constant 48 : index
    %c512_64 = arith.constant 512 : index
    %246 = vector.load %arg11[%c48_63, %c512_64] : memref<64x1024xf32, #tpu.memory_space<vmem>>, vector<8x512xf32>
    %c0_65 = arith.constant 0 : index
    %c0_66 = arith.constant 0 : index
    %247 = vector.load %arg5[%c0_65, %c0_66] : memref<128x512xf32, #tpu.memory_space<vmem>>, vector<128x512xf32>
    %cst_67 = arith.constant dense<0.000000e+00> : vector<8x512xf32>
    %248 = tpu.matmul %245, %247, %cst_67 {dimension_numbers = #tpu.dot_dimension_numbers<[1], [0], [0], [1], [0, 0, 1, 1], [], []>} : vector<8x128xf32>, vector<128x512xf32>, vector<8x512xf32> -> vector<8x512xf32>
    %249 = arith.addf %246, %248 : vector<8x512xf32>
    %250 = vector.extract_strided_slice %249 {offsets = [0, 0], sizes = [8, 128], strides = [1, 1]} : vector<8x512xf32> to vector<8x128xf32>
    %251 = arith.negf %250 : vector<8x128xf32>
    %252 = math.exp %251 : vector<8x128xf32>
    %cst_68 = arith.constant 1.000000e+00 : f32
    %253 = vector.broadcast %cst_68 : f32 to vector<8x128xf32>
    %254 = arith.addf %253, %252 : vector<8x128xf32>
    %255 = arith.divf %253, %254 : vector<8x128xf32>
    %256 = vector.extract_strided_slice %249 {offsets = [0, 128], sizes = [8, 128], strides = [1, 1]} : vector<8x512xf32> to vector<8x128xf32>
    %257 = arith.negf %256 : vector<8x128xf32>
    %258 = math.exp %257 : vector<8x128xf32>
    %cst_69 = arith.constant 1.000000e+00 : f32
    %259 = vector.broadcast %cst_69 : f32 to vector<8x128xf32>
    %260 = arith.addf %259, %258 : vector<8x128xf32>
    %261 = arith.divf %259, %260 : vector<8x128xf32>
    %262 = vector.extract_strided_slice %249 {offsets = [0, 256], sizes = [8, 128], strides = [1, 1]} : vector<8x512xf32> to vector<8x128xf32>
    %263 = math.tanh %262 : vector<8x128xf32>
    %264 = vector.extract_strided_slice %249 {offsets = [0, 384], sizes = [8, 128], strides = [1, 1]} : vector<8x512xf32> to vector<8x128xf32>
    %265 = arith.negf %264 : vector<8x128xf32>
    %266 = math.exp %265 : vector<8x128xf32>
    %cst_70 = arith.constant 1.000000e+00 : f32
    %267 = vector.broadcast %cst_70 : f32 to vector<8x128xf32>
    %268 = arith.addf %267, %266 : vector<8x128xf32>
    %269 = arith.divf %267, %268 : vector<8x128xf32>
    %270 = arith.mulf %261, %243 : vector<8x128xf32>
    %271 = arith.mulf %255, %263 : vector<8x128xf32>
    %272 = arith.addf %270, %271 : vector<8x128xf32>
    %273 = math.tanh %272 : vector<8x128xf32>
    %274 = arith.mulf %269, %273 : vector<8x128xf32>
    %c40_71 = arith.constant 40 : index
    %c512_72 = arith.constant 512 : index
    %275 = vector.load %arg11[%c40_71, %c512_72] : memref<64x1024xf32, #tpu.memory_space<vmem>>, vector<8x512xf32>
    %c0_73 = arith.constant 0 : index
    %c0_74 = arith.constant 0 : index
    %276 = vector.load %arg5[%c0_73, %c0_74] : memref<128x512xf32, #tpu.memory_space<vmem>>, vector<128x512xf32>
    %cst_75 = arith.constant dense<0.000000e+00> : vector<8x512xf32>
    %277 = tpu.matmul %274, %276, %cst_75 {dimension_numbers = #tpu.dot_dimension_numbers<[1], [0], [0], [1], [0, 0, 1, 1], [], []>} : vector<8x128xf32>, vector<128x512xf32>, vector<8x512xf32> -> vector<8x512xf32>
    %278 = arith.addf %275, %277 : vector<8x512xf32>
    %279 = vector.extract_strided_slice %278 {offsets = [0, 0], sizes = [8, 128], strides = [1, 1]} : vector<8x512xf32> to vector<8x128xf32>
    %280 = arith.negf %279 : vector<8x128xf32>
    %281 = math.exp %280 : vector<8x128xf32>
    %cst_76 = arith.constant 1.000000e+00 : f32
    %282 = vector.broadcast %cst_76 : f32 to vector<8x128xf32>
    %283 = arith.addf %282, %281 : vector<8x128xf32>
    %284 = arith.divf %282, %283 : vector<8x128xf32>
    %285 = vector.extract_strided_slice %278 {offsets = [0, 128], sizes = [8, 128], strides = [1, 1]} : vector<8x512xf32> to vector<8x128xf32>
    %286 = arith.negf %285 : vector<8x128xf32>
    %287 = math.exp %286 : vector<8x128xf32>
    %cst_77 = arith.constant 1.000000e+00 : f32
    %288 = vector.broadcast %cst_77 : f32 to vector<8x128xf32>
    %289 = arith.addf %288, %287 : vector<8x128xf32>
    %290 = arith.divf %288, %289 : vector<8x128xf32>
    %291 = vector.extract_strided_slice %278 {offsets = [0, 256], sizes = [8, 128], strides = [1, 1]} : vector<8x512xf32> to vector<8x128xf32>
    %292 = math.tanh %291 : vector<8x128xf32>
    %293 = vector.extract_strided_slice %278 {offsets = [0, 384], sizes = [8, 128], strides = [1, 1]} : vector<8x512xf32> to vector<8x128xf32>
    %294 = arith.negf %293 : vector<8x128xf32>
    %295 = math.exp %294 : vector<8x128xf32>
    %cst_78 = arith.constant 1.000000e+00 : f32
    %296 = vector.broadcast %cst_78 : f32 to vector<8x128xf32>
    %297 = arith.addf %296, %295 : vector<8x128xf32>
    %298 = arith.divf %296, %297 : vector<8x128xf32>
    %299 = arith.mulf %290, %272 : vector<8x128xf32>
    %300 = arith.mulf %284, %292 : vector<8x128xf32>
    %301 = arith.addf %299, %300 : vector<8x128xf32>
    %302 = math.tanh %301 : vector<8x128xf32>
    %303 = arith.mulf %298, %302 : vector<8x128xf32>
    %c32_79 = arith.constant 32 : index
    %c512_80 = arith.constant 512 : index
    %304 = vector.load %arg11[%c32_79, %c512_80] : memref<64x1024xf32, #tpu.memory_space<vmem>>, vector<8x512xf32>
    %c0_81 = arith.constant 0 : index
    %c0_82 = arith.constant 0 : index
    %305 = vector.load %arg5[%c0_81, %c0_82] : memref<128x512xf32, #tpu.memory_space<vmem>>, vector<128x512xf32>
    %cst_83 = arith.constant dense<0.000000e+00> : vector<8x512xf32>
    %306 = tpu.matmul %303, %305, %cst_83 {dimension_numbers = #tpu.dot_dimension_numbers<[1], [0], [0], [1], [0, 0, 1, 1], [], []>} : vector<8x128xf32>, vector<128x512xf32>, vector<8x512xf32> -> vector<8x512xf32>
    %307 = arith.addf %304, %306 : vector<8x512xf32>
    %308 = vector.extract_strided_slice %307 {offsets = [0, 0], sizes = [8, 128], strides = [1, 1]} : vector<8x512xf32> to vector<8x128xf32>
    %309 = arith.negf %308 : vector<8x128xf32>
    %310 = math.exp %309 : vector<8x128xf32>
    %cst_84 = arith.constant 1.000000e+00 : f32
    %311 = vector.broadcast %cst_84 : f32 to vector<8x128xf32>
    %312 = arith.addf %311, %310 : vector<8x128xf32>
    %313 = arith.divf %311, %312 : vector<8x128xf32>
    %314 = vector.extract_strided_slice %307 {offsets = [0, 128], sizes = [8, 128], strides = [1, 1]} : vector<8x512xf32> to vector<8x128xf32>
    %315 = arith.negf %314 : vector<8x128xf32>
    %316 = math.exp %315 : vector<8x128xf32>
    %cst_85 = arith.constant 1.000000e+00 : f32
    %317 = vector.broadcast %cst_85 : f32 to vector<8x128xf32>
    %318 = arith.addf %317, %316 : vector<8x128xf32>
    %319 = arith.divf %317, %318 : vector<8x128xf32>
    %320 = vector.extract_strided_slice %307 {offsets = [0, 256], sizes = [8, 128], strides = [1, 1]} : vector<8x512xf32> to vector<8x128xf32>
    %321 = math.tanh %320 : vector<8x128xf32>
    %322 = vector.extract_strided_slice %307 {offsets = [0, 384], sizes = [8, 128], strides = [1, 1]} : vector<8x512xf32> to vector<8x128xf32>
    %323 = arith.negf %322 : vector<8x128xf32>
    %324 = math.exp %323 : vector<8x128xf32>
    %cst_86 = arith.constant 1.000000e+00 : f32
    %325 = vector.broadcast %cst_86 : f32 to vector<8x128xf32>
    %326 = arith.addf %325, %324 : vector<8x128xf32>
    %327 = arith.divf %325, %326 : vector<8x128xf32>
    %328 = arith.mulf %319, %301 : vector<8x128xf32>
    %329 = arith.mulf %313, %321 : vector<8x128xf32>
    %330 = arith.addf %328, %329 : vector<8x128xf32>
    %331 = math.tanh %330 : vector<8x128xf32>
    %332 = arith.mulf %327, %331 : vector<8x128xf32>
    %c24_87 = arith.constant 24 : index
    %c512_88 = arith.constant 512 : index
    %333 = vector.load %arg11[%c24_87, %c512_88] : memref<64x1024xf32, #tpu.memory_space<vmem>>, vector<8x512xf32>
    %c0_89 = arith.constant 0 : index
    %c0_90 = arith.constant 0 : index
    %334 = vector.load %arg5[%c0_89, %c0_90] : memref<128x512xf32, #tpu.memory_space<vmem>>, vector<128x512xf32>
    %cst_91 = arith.constant dense<0.000000e+00> : vector<8x512xf32>
    %335 = tpu.matmul %332, %334, %cst_91 {dimension_numbers = #tpu.dot_dimension_numbers<[1], [0], [0], [1], [0, 0, 1, 1], [], []>} : vector<8x128xf32>, vector<128x512xf32>, vector<8x512xf32> -> vector<8x512xf32>
    %336 = arith.addf %333, %335 : vector<8x512xf32>
    %337 = vector.extract_strided_slice %336 {offsets = [0, 0], sizes = [8, 128], strides = [1, 1]} : vector<8x512xf32> to vector<8x128xf32>
    %338 = arith.negf %337 : vector<8x128xf32>
    %339 = math.exp %338 : vector<8x128xf32>
    %cst_92 = arith.constant 1.000000e+00 : f32
    %340 = vector.broadcast %cst_92 : f32 to vector<8x128xf32>
    %341 = arith.addf %340, %339 : vector<8x128xf32>
    %342 = arith.divf %340, %341 : vector<8x128xf32>
    %343 = vector.extract_strided_slice %336 {offsets = [0, 128], sizes = [8, 128], strides = [1, 1]} : vector<8x512xf32> to vector<8x128xf32>
    %344 = arith.negf %343 : vector<8x128xf32>
    %345 = math.exp %344 : vector<8x128xf32>
    %cst_93 = arith.constant 1.000000e+00 : f32
    %346 = vector.broadcast %cst_93 : f32 to vector<8x128xf32>
    %347 = arith.addf %346, %345 : vector<8x128xf32>
    %348 = arith.divf %346, %347 : vector<8x128xf32>
    %349 = vector.extract_strided_slice %336 {offsets = [0, 256], sizes = [8, 128], strides = [1, 1]} : vector<8x512xf32> to vector<8x128xf32>
    %350 = math.tanh %349 : vector<8x128xf32>
    %351 = vector.extract_strided_slice %336 {offsets = [0, 384], sizes = [8, 128], strides = [1, 1]} : vector<8x512xf32> to vector<8x128xf32>
    %352 = arith.negf %351 : vector<8x128xf32>
    %353 = math.exp %352 : vector<8x128xf32>
    %cst_94 = arith.constant 1.000000e+00 : f32
    %354 = vector.broadcast %cst_94 : f32 to vector<8x128xf32>
    %355 = arith.addf %354, %353 : vector<8x128xf32>
    %356 = arith.divf %354, %355 : vector<8x128xf32>
    %357 = arith.mulf %348, %330 : vector<8x128xf32>
    %358 = arith.mulf %342, %350 : vector<8x128xf32>
    %359 = arith.addf %357, %358 : vector<8x128xf32>
    %360 = math.tanh %359 : vector<8x128xf32>
    %361 = arith.mulf %356, %360 : vector<8x128xf32>
    %c16_95 = arith.constant 16 : index
    %c512_96 = arith.constant 512 : index
    %362 = vector.load %arg11[%c16_95, %c512_96] : memref<64x1024xf32, #tpu.memory_space<vmem>>, vector<8x512xf32>
    %c0_97 = arith.constant 0 : index
    %c0_98 = arith.constant 0 : index
    %363 = vector.load %arg5[%c0_97, %c0_98] : memref<128x512xf32, #tpu.memory_space<vmem>>, vector<128x512xf32>
    %cst_99 = arith.constant dense<0.000000e+00> : vector<8x512xf32>
    %364 = tpu.matmul %361, %363, %cst_99 {dimension_numbers = #tpu.dot_dimension_numbers<[1], [0], [0], [1], [0, 0, 1, 1], [], []>} : vector<8x128xf32>, vector<128x512xf32>, vector<8x512xf32> -> vector<8x512xf32>
    %365 = arith.addf %362, %364 : vector<8x512xf32>
    %366 = vector.extract_strided_slice %365 {offsets = [0, 0], sizes = [8, 128], strides = [1, 1]} : vector<8x512xf32> to vector<8x128xf32>
    %367 = arith.negf %366 : vector<8x128xf32>
    %368 = math.exp %367 : vector<8x128xf32>
    %cst_100 = arith.constant 1.000000e+00 : f32
    %369 = vector.broadcast %cst_100 : f32 to vector<8x128xf32>
    %370 = arith.addf %369, %368 : vector<8x128xf32>
    %371 = arith.divf %369, %370 : vector<8x128xf32>
    %372 = vector.extract_strided_slice %365 {offsets = [0, 128], sizes = [8, 128], strides = [1, 1]} : vector<8x512xf32> to vector<8x128xf32>
    %373 = arith.negf %372 : vector<8x128xf32>
    %374 = math.exp %373 : vector<8x128xf32>
    %cst_101 = arith.constant 1.000000e+00 : f32
    %375 = vector.broadcast %cst_101 : f32 to vector<8x128xf32>
    %376 = arith.addf %375, %374 : vector<8x128xf32>
    %377 = arith.divf %375, %376 : vector<8x128xf32>
    %378 = vector.extract_strided_slice %365 {offsets = [0, 256], sizes = [8, 128], strides = [1, 1]} : vector<8x512xf32> to vector<8x128xf32>
    %379 = math.tanh %378 : vector<8x128xf32>
    %380 = vector.extract_strided_slice %365 {offsets = [0, 384], sizes = [8, 128], strides = [1, 1]} : vector<8x512xf32> to vector<8x128xf32>
    %381 = arith.negf %380 : vector<8x128xf32>
    %382 = math.exp %381 : vector<8x128xf32>
    %cst_102 = arith.constant 1.000000e+00 : f32
    %383 = vector.broadcast %cst_102 : f32 to vector<8x128xf32>
    %384 = arith.addf %383, %382 : vector<8x128xf32>
    %385 = arith.divf %383, %384 : vector<8x128xf32>
    %386 = arith.mulf %377, %359 : vector<8x128xf32>
    %387 = arith.mulf %371, %379 : vector<8x128xf32>
    %388 = arith.addf %386, %387 : vector<8x128xf32>
    %389 = math.tanh %388 : vector<8x128xf32>
    %390 = arith.mulf %385, %389 : vector<8x128xf32>
    %c8_103 = arith.constant 8 : index
    %c512_104 = arith.constant 512 : index
    %391 = vector.load %arg11[%c8_103, %c512_104] : memref<64x1024xf32, #tpu.memory_space<vmem>>, vector<8x512xf32>
    %c0_105 = arith.constant 0 : index
    %c0_106 = arith.constant 0 : index
    %392 = vector.load %arg5[%c0_105, %c0_106] : memref<128x512xf32, #tpu.memory_space<vmem>>, vector<128x512xf32>
    %cst_107 = arith.constant dense<0.000000e+00> : vector<8x512xf32>
    %393 = tpu.matmul %390, %392, %cst_107 {dimension_numbers = #tpu.dot_dimension_numbers<[1], [0], [0], [1], [0, 0, 1, 1], [], []>} : vector<8x128xf32>, vector<128x512xf32>, vector<8x512xf32> -> vector<8x512xf32>
    %394 = arith.addf %391, %393 : vector<8x512xf32>
    %395 = vector.extract_strided_slice %394 {offsets = [0, 0], sizes = [8, 128], strides = [1, 1]} : vector<8x512xf32> to vector<8x128xf32>
    %396 = arith.negf %395 : vector<8x128xf32>
    %397 = math.exp %396 : vector<8x128xf32>
    %cst_108 = arith.constant 1.000000e+00 : f32
    %398 = vector.broadcast %cst_108 : f32 to vector<8x128xf32>
    %399 = arith.addf %398, %397 : vector<8x128xf32>
    %400 = arith.divf %398, %399 : vector<8x128xf32>
    %401 = vector.extract_strided_slice %394 {offsets = [0, 128], sizes = [8, 128], strides = [1, 1]} : vector<8x512xf32> to vector<8x128xf32>
    %402 = arith.negf %401 : vector<8x128xf32>
    %403 = math.exp %402 : vector<8x128xf32>
    %cst_109 = arith.constant 1.000000e+00 : f32
    %404 = vector.broadcast %cst_109 : f32 to vector<8x128xf32>
    %405 = arith.addf %404, %403 : vector<8x128xf32>
    %406 = arith.divf %404, %405 : vector<8x128xf32>
    %407 = vector.extract_strided_slice %394 {offsets = [0, 256], sizes = [8, 128], strides = [1, 1]} : vector<8x512xf32> to vector<8x128xf32>
    %408 = math.tanh %407 : vector<8x128xf32>
    %409 = vector.extract_strided_slice %394 {offsets = [0, 384], sizes = [8, 128], strides = [1, 1]} : vector<8x512xf32> to vector<8x128xf32>
    %410 = arith.negf %409 : vector<8x128xf32>
    %411 = math.exp %410 : vector<8x128xf32>
    %cst_110 = arith.constant 1.000000e+00 : f32
    %412 = vector.broadcast %cst_110 : f32 to vector<8x128xf32>
    %413 = arith.addf %412, %411 : vector<8x128xf32>
    %414 = arith.divf %412, %413 : vector<8x128xf32>
    %415 = arith.mulf %406, %388 : vector<8x128xf32>
    %416 = arith.mulf %400, %408 : vector<8x128xf32>
    %417 = arith.addf %415, %416 : vector<8x128xf32>
    %418 = math.tanh %417 : vector<8x128xf32>
    %419 = arith.mulf %414, %418 : vector<8x128xf32>
    %c0_111 = arith.constant 0 : index
    %c512_112 = arith.constant 512 : index
    %420 = vector.load %arg11[%c0_111, %c512_112] : memref<64x1024xf32, #tpu.memory_space<vmem>>, vector<8x512xf32>
    %c0_113 = arith.constant 0 : index
    %c0_114 = arith.constant 0 : index
    %421 = vector.load %arg5[%c0_113, %c0_114] : memref<128x512xf32, #tpu.memory_space<vmem>>, vector<128x512xf32>
    %cst_115 = arith.constant dense<0.000000e+00> : vector<8x512xf32>
    %422 = tpu.matmul %419, %421, %cst_115 {dimension_numbers = #tpu.dot_dimension_numbers<[1], [0], [0], [1], [0, 0, 1, 1], [], []>} : vector<8x128xf32>, vector<128x512xf32>, vector<8x512xf32> -> vector<8x512xf32>
    %423 = arith.addf %420, %422 : vector<8x512xf32>
    %424 = vector.extract_strided_slice %423 {offsets = [0, 0], sizes = [8, 128], strides = [1, 1]} : vector<8x512xf32> to vector<8x128xf32>
    %425 = arith.negf %424 : vector<8x128xf32>
    %426 = math.exp %425 : vector<8x128xf32>
    %cst_116 = arith.constant 1.000000e+00 : f32
    %427 = vector.broadcast %cst_116 : f32 to vector<8x128xf32>
    %428 = arith.addf %427, %426 : vector<8x128xf32>
    %429 = arith.divf %427, %428 : vector<8x128xf32>
    %430 = vector.extract_strided_slice %423 {offsets = [0, 128], sizes = [8, 128], strides = [1, 1]} : vector<8x512xf32> to vector<8x128xf32>
    %431 = arith.negf %430 : vector<8x128xf32>
    %432 = math.exp %431 : vector<8x128xf32>
    %cst_117 = arith.constant 1.000000e+00 : f32
    %433 = vector.broadcast %cst_117 : f32 to vector<8x128xf32>
    %434 = arith.addf %433, %432 : vector<8x128xf32>
    %435 = arith.divf %433, %434 : vector<8x128xf32>
    %436 = vector.extract_strided_slice %423 {offsets = [0, 256], sizes = [8, 128], strides = [1, 1]} : vector<8x512xf32> to vector<8x128xf32>
    %437 = math.tanh %436 : vector<8x128xf32>
    %438 = vector.extract_strided_slice %423 {offsets = [0, 384], sizes = [8, 128], strides = [1, 1]} : vector<8x512xf32> to vector<8x128xf32>
    %439 = arith.negf %438 : vector<8x128xf32>
    %440 = math.exp %439 : vector<8x128xf32>
    %cst_118 = arith.constant 1.000000e+00 : f32
    %441 = vector.broadcast %cst_118 : f32 to vector<8x128xf32>
    %442 = arith.addf %441, %440 : vector<8x128xf32>
    %443 = arith.divf %441, %442 : vector<8x128xf32>
    %444 = arith.mulf %435, %417 : vector<8x128xf32>
    %445 = arith.mulf %429, %437 : vector<8x128xf32>
    %446 = arith.addf %444, %445 : vector<8x128xf32>
    %447 = math.tanh %446 : vector<8x128xf32>
    %448 = arith.mulf %443, %447 : vector<8x128xf32>
    %c0_119 = arith.constant 0 : index
    %c0_120 = arith.constant 0 : index
    %449 = vector.load %arg6[%c0_119, %c0_120] : memref<256x512xf32, #tpu.memory_space<vmem>>, vector<128x512xf32>
    %cst_121 = arith.constant dense<0.000000e+00> : vector<8x512xf32>
    %450 = tpu.matmul %24, %449, %cst_121 {dimension_numbers = #tpu.dot_dimension_numbers<[1], [0], [0], [1], [0, 0, 1, 1], [], []>} : vector<8x128xf32>, vector<128x512xf32>, vector<8x512xf32> -> vector<8x512xf32>
    %c128 = arith.constant 128 : index
    %c0_122 = arith.constant 0 : index
    %451 = vector.load %arg6[%c128, %c0_122] : memref<256x512xf32, #tpu.memory_space<vmem>>, vector<128x512xf32>
    %cst_123 = arith.constant dense<0.000000e+00> : vector<8x512xf32>
    %452 = tpu.matmul %448, %451, %cst_123 {dimension_numbers = #tpu.dot_dimension_numbers<[1], [0], [0], [1], [0, 0, 1, 1], [], []>} : vector<8x128xf32>, vector<128x512xf32>, vector<8x512xf32> -> vector<8x512xf32>
    %453 = arith.addf %450, %452 : vector<8x512xf32>
    %c0_124 = arith.constant 0 : index
    %c0_125 = arith.constant 0 : index
    %454 = vector.load %arg7[%c0_124, %c0_125] : memref<1x512xf32, #tpu.memory_space<vmem>>, vector<1x512xf32>
    %455 = vector.broadcast %454 : vector<1x512xf32> to vector<8x512xf32>
    %456 = arith.addf %453, %455 : vector<8x512xf32>
    %457 = vector.extract_strided_slice %456 {offsets = [0, 0], sizes = [8, 128], strides = [1, 1]} : vector<8x512xf32> to vector<8x128xf32>
    %458 = arith.negf %457 : vector<8x128xf32>
    %459 = math.exp %458 : vector<8x128xf32>
    %cst_126 = arith.constant 1.000000e+00 : f32
    %460 = vector.broadcast %cst_126 : f32 to vector<8x128xf32>
    %461 = arith.addf %460, %459 : vector<8x128xf32>
    %462 = arith.divf %460, %461 : vector<8x128xf32>
    %463 = vector.extract_strided_slice %456 {offsets = [0, 256], sizes = [8, 128], strides = [1, 1]} : vector<8x512xf32> to vector<8x128xf32>
    %464 = math.tanh %463 : vector<8x128xf32>
    %465 = vector.extract_strided_slice %456 {offsets = [0, 384], sizes = [8, 128], strides = [1, 1]} : vector<8x512xf32> to vector<8x128xf32>
    %466 = arith.negf %465 : vector<8x128xf32>
    %467 = math.exp %466 : vector<8x128xf32>
    %cst_127 = arith.constant 1.000000e+00 : f32
    %468 = vector.broadcast %cst_127 : f32 to vector<8x128xf32>
    %469 = arith.addf %468, %467 : vector<8x128xf32>
    %470 = arith.divf %468, %469 : vector<8x128xf32>
    %471 = arith.mulf %462, %464 : vector<8x128xf32>
    %472 = math.tanh %471 : vector<8x128xf32>
    %473 = arith.mulf %470, %472 : vector<8x128xf32>
    %c0_128 = arith.constant 0 : index
    %c0_129 = arith.constant 0 : index
    %474 = vector.load %arg8[%c0_128, %c0_129] : memref<256x512xf32, #tpu.memory_space<vmem>>, vector<128x512xf32>
    %cst_130 = arith.constant dense<0.000000e+00> : vector<8x512xf32>
    %475 = tpu.matmul %227, %474, %cst_130 {dimension_numbers = #tpu.dot_dimension_numbers<[1], [0], [0], [1], [0, 0, 1, 1], [], []>} : vector<8x128xf32>, vector<128x512xf32>, vector<8x512xf32> -> vector<8x512xf32>
    %c128_131 = arith.constant 128 : index
    %c0_132 = arith.constant 0 : index
    %476 = vector.load %arg8[%c128_131, %c0_132] : memref<256x512xf32, #tpu.memory_space<vmem>>, vector<128x512xf32>
    %cst_133 = arith.constant dense<0.000000e+00> : vector<8x512xf32>
    %477 = tpu.matmul %245, %476, %cst_133 {dimension_numbers = #tpu.dot_dimension_numbers<[1], [0], [0], [1], [0, 0, 1, 1], [], []>} : vector<8x128xf32>, vector<128x512xf32>, vector<8x512xf32> -> vector<8x512xf32>
    %478 = arith.addf %475, %477 : vector<8x512xf32>
    %c0_134 = arith.constant 0 : index
    %c0_135 = arith.constant 0 : index
    %479 = vector.load %arg9[%c0_134, %c0_135] : memref<1x512xf32, #tpu.memory_space<vmem>>, vector<1x512xf32>
    %480 = vector.broadcast %479 : vector<1x512xf32> to vector<8x512xf32>
    %481 = arith.addf %478, %480 : vector<8x512xf32>
    %482 = vector.extract_strided_slice %481 {offsets = [0, 0], sizes = [8, 128], strides = [1, 1]} : vector<8x512xf32> to vector<8x128xf32>
    %483 = arith.negf %482 : vector<8x128xf32>
    %484 = math.exp %483 : vector<8x128xf32>
    %cst_136 = arith.constant 1.000000e+00 : f32
    %485 = vector.broadcast %cst_136 : f32 to vector<8x128xf32>
    %486 = arith.addf %485, %484 : vector<8x128xf32>
    %487 = arith.divf %485, %486 : vector<8x128xf32>
    %488 = vector.extract_strided_slice %481 {offsets = [0, 256], sizes = [8, 128], strides = [1, 1]} : vector<8x512xf32> to vector<8x128xf32>
    %489 = math.tanh %488 : vector<8x128xf32>
    %490 = vector.extract_strided_slice %481 {offsets = [0, 384], sizes = [8, 128], strides = [1, 1]} : vector<8x512xf32> to vector<8x128xf32>
    %491 = arith.negf %490 : vector<8x128xf32>
    %492 = math.exp %491 : vector<8x128xf32>
    %cst_137 = arith.constant 1.000000e+00 : f32
    %493 = vector.broadcast %cst_137 : f32 to vector<8x128xf32>
    %494 = arith.addf %493, %492 : vector<8x128xf32>
    %495 = arith.divf %493, %494 : vector<8x128xf32>
    %496 = arith.mulf %487, %489 : vector<8x128xf32>
    %497 = math.tanh %496 : vector<8x128xf32>
    %498 = arith.mulf %495, %497 : vector<8x128xf32>
    %c0_138 = arith.constant 0 : index
    %c0_139 = arith.constant 0 : index
    %499 = vector.load %arg10[%c0_138, %c0_139] : memref<8x256xf32, #tpu.memory_space<vmem>>, vector<8x128xf32>
    tpu.vector_store %arg10[%c0_138, %c0_139], %473 {strides = array<i32>} : memref<8x256xf32, #tpu.memory_space<vmem>>, vector<8x128xf32>,
    %c0_140 = arith.constant 0 : index
    %c128_141 = arith.constant 128 : index
    %500 = vector.load %arg10[%c0_140, %c128_141] : memref<8x256xf32, #tpu.memory_space<vmem>>, vector<8x128xf32>
    tpu.vector_store %arg10[%c0_140, %c128_141], %498 {strides = array<i32>} : memref<8x256xf32, #tpu.memory_space<vmem>>, vector<8x128xf32>,
    return
  }
  func.func @transform_0(%arg0: i32) -> (i32, i32) {
    %c0_i32 = arith.constant 0 : i32
    %c0_i32_0 = arith.constant 0 : i32
    %c0_i32_1 = arith.constant 0 : i32
    return %c0_i32, %c0_i32_0 : i32, i32
  }
  func.func @transform_1(%arg0: i32) -> (i32, i32) {
    %c0_i32 = arith.constant 0 : i32
    %c0_i32_0 = arith.constant 0 : i32
    %c0_i32_1 = arith.constant 0 : i32
    return %c0_i32, %c0_i32_0 : i32, i32
  }
  func.func @transform_2(%arg0: i32) -> (i32, i32) {
    %c0_i32 = arith.constant 0 : i32
    %c0_i32_0 = arith.constant 0 : i32
    %c0_i32_1 = arith.constant 0 : i32
    return %c0_i32, %c0_i32_0 : i32, i32
  }
  func.func @transform_3(%arg0: i32) -> (i32, i32) {
    %c0_i32 = arith.constant 0 : i32
    %c0_i32_0 = arith.constant 0 : i32
    %c0_i32_1 = arith.constant 0 : i32
    return %c0_i32, %c0_i32_0 : i32, i32
  }
  func.func @transform_4(%arg0: i32) -> (i32, i32) {
    %c0_i32 = arith.constant 0 : i32
    %c0_i32_0 = arith.constant 0 : i32
    %c0_i32_1 = arith.constant 0 : i32
    return %c0_i32, %c0_i32_0 : i32, i32
  }
  func.func @transform_5(%arg0: i32) -> (i32, i32) {
    %c0_i32 = arith.constant 0 : i32
    %c0_i32_0 = arith.constant 0 : i32
    %c0_i32_1 = arith.constant 0 : i32
    return %c0_i32, %c0_i32_0 : i32, i32
  }
  func.func @transform_6(%arg0: i32) -> (i32, i32) {
    %c0_i32 = arith.constant 0 : i32
    %c0_i32_0 = arith.constant 0 : i32
    %c0_i32_1 = arith.constant 0 : i32
    return %c0_i32, %c0_i32_0 : i32, i32
  }
  func.func @transform_7(%arg0: i32) -> (i32, i32) {
    %c0_i32 = arith.constant 0 : i32
    %c0_i32_0 = arith.constant 0 : i32
    %c0_i32_1 = arith.constant 0 : i32
    return %c0_i32, %c0_i32_0 : i32, i32
  }
  func.func @transform_8(%arg0: i32) -> (i32, i32) {
    %c0_i32 = arith.constant 0 : i32
    %c0_i32_0 = arith.constant 0 : i32
    %c0_i32_1 = arith.constant 0 : i32
    return %c0_i32, %c0_i32_0 : i32, i32
  }
  func.func @transform_9(%arg0: i32) -> (i32, i32) {
    %c0_i32 = arith.constant 0 : i32
    %c0_i32_0 = arith.constant 0 : i32
    %c0_i32_1 = arith.constant 0 : i32
    return %c0_i32, %c0_i32_0 : i32, i32
  }
}

</mosaic_0001>

<llo_original>
// kernel: inertial_encoder_forward.1
$region0: #{inertial_encoder_forward.1}
  #allocation0 [shape = 'u32[]', space=smem, size = 0x4, offset = 0x4, fixed_abs, tag = 'smem constant byte address 0x4 - core index']
  #allocation1 [shape = 'u32[144,128]{1,0:T(1,128)}', space=vmem, size = 0x12000, scoped, tag = 'internal scratch']
  #allocation2 [shape = 'f32[64,1024]{1,0:T(8,128)}', space=vmem, size = 0x40000, scoped, tag = 'scratch operand']
  %s0 = inlined_call_operand.vmem [shape: f32[64,6], index: 0, kind: input, shape index: {}]
  %s1 = inlined_call_operand.vmem [shape: f32[6,1024], index: 1, kind: input, shape index: {}]
  %s2 = inlined_call_operand.vmem [shape: f32[1,1024], index: 2, kind: input, shape index: {}]
  %s3 = inlined_call_operand.vmem [shape: f32[128,512], index: 3, kind: input, shape index: {}]
  %s4 = inlined_call_operand.vmem [shape: f32[128,512], index: 4, kind: input, shape index: {}]
  %s5 = inlined_call_operand.vmem [shape: f32[256,512], index: 5, kind: input, shape index: {}]
  %s6 = inlined_call_operand.vmem [shape: f32[1,512], index: 6, kind: input, shape index: {}]
  %s7 = inlined_call_operand.vmem [shape: f32[256,512], index: 7, kind: input, shape index: {}]
  %s8 = inlined_call_operand.vmem [shape: f32[1,512], index: 8, kind: input, shape index: {}]
  %s9 = inlined_call_operand.vmem [shape: f32[8,256], index: 9, kind: output, shape index: {}]
  %s10 = sld [smem:[#allocation0]]
  $region46: #{inertial_encoder_forward.1} parent=0
    _
  %s12 = ssub.s32 1, %s10
  %s13 = scalar_select 0, %s12, %s10
  // Predicated region
  $region2: #{inertial_encoder_forward.1} parent=0 // pred_check
    _
  $region3: #{inertial_encoder_forward.1} parent=0 // pred_check_branch
    %15 = sbr.rel (0) target = $region5
  $region4: #{inertial_encoder_forward.1} parent=0 // pred_region
    _
  $region5: #{inertial_encoder_forward.1} parent=0 // pred_fallthru
    _
  // Predicated region
  $region6: #{inertial_encoder_forward.1} parent=0 // pred_check
    _
  $region7: #{inertial_encoder_forward.1} parent=0 // pred_check_branch
    %17 = sbr.rel (0) target = $region9
  $region8: #{inertial_encoder_forward.1} parent=0 // pred_region
    _
  $region9: #{inertial_encoder_forward.1} parent=0 // pred_fallthru
    _
  // Predicated region
  $region10: #{inertial_encoder_forward.1} parent=0 // pred_check
    _
  $region11: #{inertial_encoder_forward.1} parent=0 // pred_check_branch
    %19 = sbr.rel (0) target = $region13
  $region12: #{inertial_encoder_forward.1} parent=0 // pred_region
    _
  $region13: #{inertial_encoder_forward.1} parent=0 // pred_fallthru
    _
  // Predicated region
  $region14: #{inertial_encoder_forward.1} parent=0 // pred_check
    _
  $region15: #{inertial_encoder_forward.1} parent=0 // pred_check_branch
    %21 = sbr.rel (0) target = $region17
  $region16: #{inertial_encoder_forward.1} parent=0 // pred_region
    _
  $region17: #{inertial_encoder_forward.1} parent=0 // pred_fallthru
    _
  // Predicated region
  $region18: #{inertial_encoder_forward.1} parent=0 // pred_check
    _
  $region19: #{inertial_encoder_forward.1} parent=0 // pred_check_branch
    %23 = sbr.rel (0) target = $region21
  $region20: #{inertial_encoder_forward.1} parent=0 // pred_region
    _
  $region21: #{inertial_encoder_forward.1} parent=0 // pred_fallthru
    _
  // Predicated region
  $region22: #{inertial_encoder_forward.1} parent=0 // pred_check
    _
  $region23: #{inertial_encoder_forward.1} parent=0 // pred_check_branch
    %25 = sbr.rel (0) target = $region25
  $region24: #{inertial_encoder_forward.1} parent=0 // pred_region
    _
  $region25: #{inertial_encoder_forward.1} parent=0 // pred_fallthru
    _
  // Predicated region
  $region26: #{inertial_encoder_forward.1} parent=0 // pred_check
    _
  $region27: #{inertial_encoder_forward.1} parent=0 // pred_check_branch
    %27 = sbr.rel (0) target = $region29
  $region28: #{inertial_encoder_forward.1} parent=0 // pred_region
    _
  $region29: #{inertial_encoder_forward.1} parent=0 // pred_fallthru
    _
  // Predicated region
  $region30: #{inertial_encoder_forward.1} parent=0 // pred_check
    _
  $region31: #{inertial_encoder_forward.1} parent=0 // pred_check_branch
    %29 = sbr.rel (0) target = $region33
  $region32: #{inertial_encoder_forward.1} parent=0 // pred_region
    _
  $region33: #{inertial_encoder_forward.1} parent=0 // pred_fallthru
    _
  // Predicated region
  $region34: #{inertial_encoder_forward.1} parent=0 // pred_check
    _
  $region35: #{inertial_encoder_forward.1} parent=0 // pred_check_branch
    %31 = sbr.rel (0) target = $region37
  $region36: #{inertial_encoder_forward.1} parent=0 // pred_region
    _
  $region37: #{inertial_encoder_forward.1} parent=0 // pred_fallthru
    _
  %v32 = vld [vmem:[%s0] sm:$0xff]
  %v33 = vld [vmem:[%s0 + $0x8] sm:$0xff]
  %v34 = vld [vmem:[%s0 + $0x10] sm:$0xff]
  %v35 = vld [vmem:[%s0 + $0x18] sm:$0xff]
  %v36 = vld [vmem:[%s0 + $0x20] sm:$0xff]
  %v37 = vld [vmem:[%s0 + $0x28] sm:$0xff]
  %v38 = vld [vmem:[%s0 + $0x30] sm:$0xff]
  %v39 = vld [vmem:[%s0 + $0x38] sm:$0xff]
  %v40 = vld [vmem:[%s1] sm:$0x3f]
  %v41 = vld [vmem:[%s1 + $0x8] sm:$0x3f]
  %v42 = vld [vmem:[%s1 + $0x10] sm:$0x3f]
  %v43 = vld [vmem:[%s1 + $0x18] sm:$0x3f]
  %v44 = vld [vmem:[%s1 + $0x20] sm:$0x3f]
  %v45 = vld [vmem:[%s1 + $0x28] sm:$0x3f]
  %v46 = vld [vmem:[%s1 + $0x30] sm:$0x3f]
  %v47 = vld [vmem:[%s1 + $0x38] sm:$0x3f]
  %v48 = vld [vmem:[%s2] sm:$0xff]
  %v50 = vlaneseq
  %v51 = vshrl.u32 %v50, 7
  %v52 = vsub.s32 0, %v51
  %v53 = vrot.slane %v48, %v52
  %v54 = vlaneseq
  %v55 = vshrl.u32 %v54, 7
  %v56 = vsub.s32 1, %v55
  %v57 = vrot.slane %v48, %v56
  %v58 = vlaneseq
  %v59 = vshrl.u32 %v58, 7
  %v60 = vsub.s32 2, %v59
  %v61 = vrot.slane %v48, %v60
  %v62 = vlaneseq
  %v63 = vshrl.u32 %v62, 7
  %v64 = vsub.s32 3, %v63
  %v65 = vrot.slane %v48, %v64
  %v66 = vlaneseq
  %v67 = vshrl.u32 %v66, 7
  %v68 = vsub.s32 4, %v67
  %v69 = vrot.slane %v48, %v68
  %v70 = vlaneseq
  %v71 = vshrl.u32 %v70, 7
  %v72 = vsub.s32 5, %v71
  %v73 = vrot.slane %v48, %v72
  %v74 = vlaneseq
  %v75 = vshrl.u32 %v74, 7
  %v76 = vsub.s32 6, %v75
  %v77 = vrot.slane %v48, %v76
  %v78 = vlaneseq
  %v79 = vshrl.u32 %v78, 7
  %v80 = vsub.s32 7, %v79
  %v81 = vrot.slane %v48, %v80
  %vm90 = vcmask 48128
  %v92 = vsel %vm90, %v32, 0
  %v95 = vsel %vm90, %v33, 0
  %v98 = vsel %vm90, %v34, 0
  %v101 = vsel %vm90, %v35, 0
  %v104 = vsel %vm90, %v36, 0
  %v107 = vsel %vm90, %v37, 0
  %v110 = vsel %vm90, %v38, 0
  %v113 = vsel %vm90, %v39, 0
  %vm115 = vcmask 1045504
  %v117 = vsel %vm115, %v40, 0
  %v120 = vsel %vm115, %v41, 0
  %v123 = vsel %vm115, %v42, 0
  %v126 = vsel %vm115, %v43, 0
  %v129 = vsel %vm115, %v44, 0
  %v132 = vsel %vm115, %v45, 0
  %v135 = vsel %vm115, %v46, 0
  %v138 = vsel %vm115, %v47, 0
  %140 = vmatprep.subr.mxu0 0.0
  %141 = vmatpush1.msra.mxu0 0.0
  %142 = vmatprep.subr.mxu0 0.0
  %143 = vmatpush1.msra.mxu0 0.0
  %144 = vmatprep.subr.mxu0 0.0
  %145 = vmatpush1.msra.mxu0 0.0
  %146 = vmatprep.subr.mxu0 0.0
  %147 = vmatpush1.msra.mxu0 0.0
  %148 = vmatprep.subr.mxu0 0.0
  %149 = vmatpush1.msra.mxu0 0.0
  %150 = vmatprep.subr.mxu0 0.0
  %151 = vmatpush1.msra.mxu0 0.0
  %152 = vmatprep.subr.mxu0 0.0
  %153 = vmatpush1.msra.mxu0 0.0
  %154 = vmatprep.subr.mxu0 0.0
  %155 = vmatpush1.msra.mxu0 0.0
  %156 = vmatprep.subr.mxu0 0.0
  %157 = vmatpush1.msra.mxu0 0.0
  %158 = vmatprep.subr.mxu0 0.0
  %159 = vmatpush1.msra.mxu0 0.0
  %160 = vmatprep.subr.mxu0 0.0
  %161 = vmatpush1.msra.mxu0 0.0
  %162 = vmatprep.subr.mxu0 0.0
  %163 = vmatpush1.msra.mxu0 0.0
  %164 = vmatprep.subr.mxu0 0.0
  %165 = vmatpush1.msra.mxu0 0.0
  %166 = vmatprep.subr.mxu0 0.0
  %167 = vmatpush1.msra.mxu0 0.0
  %168 = vmatprep.subr.mxu0 0.0
  %169 = vmatpush1.msra.mxu0 0.0
  %170 = vmatprep.subr.mxu0 %v120
  %171 = vmatpush1.msra.mxu0 %v117
  %172 = vmatprep.subr.mxu0 0.0
  %173 = vmatpush2.msra.mxu0 0.0
  %174 = vmatprep.subr.mxu0 0.0
  %175 = vmatpush2.msra.mxu0 0.0
  %176 = vmatprep.subr.mxu0 0.0
  %177 = vmatpush2.msra.mxu0 0.0
  %178 = vmatprep.subr.mxu0 0.0
  %179 = vmatpush2.msra.mxu0 0.0
  %180 = vmatprep.subr.mxu0 0.0
  %181 = vmatpush2.msra.mxu0 0.0
  %182 = vmatprep.subr.mxu0 0.0
  %183 = vmatpush2.msra.mxu0 0.0
  %184 = vmatprep.subr.mxu0 0.0
  %185 = vmatpush2.msra.mxu0 0.0
  %186 = vmatprep.subr.mxu0 0.0
  %187 = vmatpush2.msra.mxu0 0.0
  %188 = vmatprep.subr.mxu0 0.0
  %189 = vmatpush2.msra.mxu0 0.0
  %190 = vmatprep.subr.mxu0 0.0
  %191 = vmatpush2.msra.mxu0 0.0
  %192 = vmatprep.subr.mxu0 0.0
  %193 = vmatpush2.msra.mxu0 0.0
  %194 = vmatprep.subr.mxu0 0.0
  %195 = vmatpush2.msra.mxu0 0.0
  %196 = vmatprep.subr.mxu0 0.0
  %197 = vmatpush2.msra.mxu0 0.0
  %198 = vmatprep.subr.mxu0 0.0
  %199 = vmatpush2.msra.mxu0 0.0
  %200 = vmatprep.subr.mxu0 0.0
  %201 = vmatpush2.msra.mxu0 0.0
  %202 = vmatprep.subr.mxu0 0.0
  %203 = vmatpush2.msra.mxu0 0.0
  %204 = vmatprep.mubr.f32.mxu0 0.0
  %205 = vmatmul.mubr.f32.gmra.mxu0 %v92
  %v206 = vpop.f32.mrf.mxu0
  %v207 = vadd.f32 %v53, %v206
  %v208 = vpop.f32.mrf.mxu0
  %v209 = vadd.f32 %v57, %v208
  %210 = vmatprep.mubr.f32.mxu0 0.0
  %211 = vmatmul.mubr.f32.gmra.mxu0 %v95
  %v212 = vpop.f32.mrf.mxu0
  %v213 = vadd.f32 %v53, %v212
  %v214 = vpop.f32.mrf.mxu0
  %v215 = vadd.f32 %v57, %v214
  %216 = vmatprep.mubr.f32.mxu0 0.0
  %217 = vmatmul.mubr.f32.gmra.mxu0 %v98
  %v218 = vpop.f32.mrf.mxu0
  %v219 = vadd.f32 %v53, %v218
  %v220 = vpop.f32.mrf.mxu0
  %v221 = vadd.f32 %v57, %v220
  %222 = vmatprep.mubr.f32.mxu0 0.0
  %223 = vmatmul.mubr.f32.gmra.mxu0 %v101
  %v224 = vpop.f32.mrf.mxu0
  %v225 = vadd.f32 %v53, %v224
  %v226 = vpop.f32.mrf.mxu0
  %v227 = vadd.f32 %v57, %v226
  %228 = vmatprep.mubr.f32.mxu0 0.0
  %229 = vmatmul.mubr.f32.gmra.mxu0 %v104
  %v230 = vpop.f32.mrf.mxu0
  %v231 = vadd.f32 %v53, %v230
  %v232 = vpop.f32.mrf.mxu0
  %v233 = vadd.f32 %v57, %v232
  %234 = vmatprep.mubr.f32.mxu0 0.0
  %235 = vmatmul.mubr.f32.gmra.mxu0 %v107
  %v236 = vpop.f32.mrf.mxu0
  %v237 = vadd.f32 %v53, %v236
  %v238 = vpop.f32.mrf.mxu0
  %v239 = vadd.f32 %v57, %v238
  %240 = vmatprep.mubr.f32.mxu0 0.0
  %241 = vmatmul.mubr.f32.gmra.mxu0 %v110
  %v242 = vpop.f32.mrf.mxu0
  %v243 = vadd.f32 %v53, %v242
  %v244 = vpop.f32.mrf.mxu0
  %v245 = vadd.f32 %v57, %v244
  %246 = vmatprep.mubr.f32.mxu0 0.0
  %247 = vmatmul.mubr.f32.gmra.mxu0 %v113
  %v248 = vpop.f32.mrf.mxu0
  %v249 = vadd.f32 %v53, %v248
  %v250 = vpop.f32.mrf.mxu0
  %v251 = vadd.f32 %v57, %v250
  %252 = vdwg.mxu0
  %253 = vmatprep.subr.mxu0 0.0
  %254 = vmatpush1.msra.mxu0 0.0
  %255 = vmatprep.subr.mxu0 0.0
  %256 = vmatpush1.msra.mxu0 0.0
  %257 = vmatprep.subr.mxu0 0.0
  %258 = vmatpush1.msra.mxu0 0.0
  %259 = vmatprep.subr.mxu0 0.0
  %260 = vmatpush1.msra.mxu0 0.0
  %261 = vmatprep.subr.mxu0 0.0
  %262 = vmatpush1.msra.mxu0 0.0
  %263 = vmatprep.subr.mxu0 0.0
  %264 = vmatpush1.msra.mxu0 0.0
  %265 = vmatprep.subr.mxu0 0.0
  %266 = vmatpush1.msra.mxu0 0.0
  %267 = vmatprep.subr.mxu0 0.0
  %268 = vmatpush1.msra.mxu0 0.0
  %269 = vmatprep.subr.mxu0 0.0
  %270 = vmatpush1.msra.mxu0 0.0
  %271 = vmatprep.subr.mxu0 0.0
  %272 = vmatpush1.msra.mxu0 0.0
  %273 = vmatprep.subr.mxu0 0.0
  %274 = vmatpush1.msra.mxu0 0.0
  %275 = vmatprep.subr.mxu0 0.0
  %276 = vmatpush1.msra.mxu0 0.0
  %277 = vmatprep.subr.mxu0 0.0
  %278 = vmatpush1.msra.mxu0 0.0
  %279 = vmatprep.subr.mxu0 0.0
  %280 = vmatpush1.msra.mxu0 0.0
  %281 = vmatprep.subr.mxu0 0.0
  %282 = vmatpush1.msra.mxu0 0.0
  %283 = vmatprep.subr.mxu0 %v126
  %284 = vmatpush1.msra.mxu0 %v123
  %285 = vmatprep.subr.mxu0 0.0
  %286 = vmatpush2.msra.mxu0 0.0
  %287 = vmatprep.subr.mxu0 0.0
  %288 = vmatpush2.msra.mxu0 0.0
  %289 = vmatprep.subr.mxu0 0.0
  %290 = vmatpush2.msra.mxu0 0.0
  %291 = vmatprep.subr.mxu0 0.0
  %292 = vmatpush2.msra.mxu0 0.0
  %293 = vmatprep.subr.mxu0 0.0
  %294 = vmatpush2.msra.mxu0 0.0
  %295 = vmatprep.subr.mxu0 0.0
  %296 = vmatpush2.msra.mxu0 0.0
  %297 = vmatprep.subr.mxu0 0.0
  %298 = vmatpush2.msra.mxu0 0.0
  %299 = vmatprep.subr.mxu0 0.0
  %300 = vmatpush2.msra.mxu0 0.0
  %301 = vmatprep.subr.mxu0 0.0
  %302 = vmatpush2.msra.mxu0 0.0
  %303 = vmatprep.subr.mxu0 0.0
  %304 = vmatpush2.msra.mxu0 0.0
  %305 = vmatprep.subr.mxu0 0.0
  %306 = vmatpush2.msra.mxu0 0.0
  %307 = vmatprep.subr.mxu0 0.0
  %308 = vmatpush2.msra.mxu0 0.0
  %309 = vmatprep.subr.mxu0 0.0
  %310 = vmatpush2.msra.mxu0 0.0
  %311 = vmatprep.subr.mxu0 0.0
  %312 = vmatpush2.msra.mxu0 0.0
  %313 = vmatprep.subr.mxu0 0.0
  %314 = vmatpush2.msra.mxu0 0.0
  %315 = vmatprep.subr.mxu0 0.0
  %316 = vmatpush2.msra.mxu0 0.0
  %317 = vmatprep.mubr.f32.mxu0 0.0
  %318 = vmatmul.mubr.f32.gmra.mxu0 %v92
  %v319 = vpop.f32.mrf.mxu0
  %v320 = vadd.f32 %v61, %v319
  %v321 = vpop.f32.mrf.mxu0
  %v322 = vadd.f32 %v65, %v321
  %323 = vmatprep.mubr.f32.mxu0 0.0
  %324 = vmatmul.mubr.f32.gmra.mxu0 %v95
  %v325 = vpop.f32.mrf.mxu0
  %v326 = vadd.f32 %v61, %v325
  %v327 = vpop.f32.mrf.mxu0
  %v328 = vadd.f32 %v65, %v327
  %329 = vmatprep.mubr.f32.mxu0 0.0
  %330 = vmatmul.mubr.f32.gmra.mxu0 %v98
  %v331 = vpop.f32.mrf.mxu0
  %v332 = vadd.f32 %v61, %v331
  %v333 = vpop.f32.mrf.mxu0
  %v334 = vadd.f32 %v65, %v333
  %335 = vmatprep.mubr.f32.mxu0 0.0
  %336 = vmatmul.mubr.f32.gmra.mxu0 %v101
  %v337 = vpop.f32.mrf.mxu0
  %v338 = vadd.f32 %v61, %v337
  %v339 = vpop.f32.mrf.mxu0
  %v340 = vadd.f32 %v65, %v339
  %341 = vmatprep.mubr.f32.mxu0 0.0
  %342 = vmatmul.mubr.f32.gmra.mxu0 %v104
  %v343 = vpop.f32.mrf.mxu0
  %v344 = vadd.f32 %v61, %v343
  %v345 = vpop.f32.mrf.mxu0
  %v346 = vadd.f32 %v65, %v345
  %347 = vmatprep.mubr.f32.mxu0 0.0
  %348 = vmatmul.mubr.f32.gmra.mxu0 %v107
  %v349 = vpop.f32.mrf.mxu0
  %v350 = vadd.f32 %v61, %v349
  %v351 = vpop.f32.mrf.mxu0
  %v352 = vadd.f32 %v65, %v351
  %353 = vmatprep.mubr.f32.mxu0 0.0
  %354 = vmatmul.mubr.f32.gmra.mxu0 %v110
  %v355 = vpop.f32.mrf.mxu0
  %v356 = vadd.f32 %v61, %v355
  %v357 = vpop.f32.mrf.mxu0
  %v358 = vadd.f32 %v65, %v357
  %359 = vmatprep.mubr.f32.mxu0 0.0
  %360 = vmatmul.mubr.f32.gmra.mxu0 %v113
  %v361 = vpop.f32.mrf.mxu0
  %v362 = vadd.f32 %v61, %v361
  %v363 = vpop.f32.mrf.mxu0
  %v364 = vadd.f32 %v65, %v363
  %365 = vdwg.mxu0
  %366 = vmatprep.subr.mxu0 0.0
  %367 = vmatpush1.msra.mxu0 0.0
  %368 = vmatprep.subr.mxu0 0.0
  %369 = vmatpush1.msra.mxu0 0.0
  %370 = vmatprep.subr.mxu0 0.0
  %371 = vmatpush1.msra.mxu0 0.0
  %372 = vmatprep.subr.mxu0 0.0
  %373 = vmatpush1.msra.mxu0 0.0
  %374 = vmatprep.subr.mxu0 0.0
  %375 = vmatpush1.msra.mxu0 0.0
  %376 = vmatprep.subr.mxu0 0.0
  %377 = vmatpush1.msra.mxu0 0.0
  %378 = vmatprep.subr.mxu0 0.0
  %379 = vmatpush1.msra.mxu0 0.0
  %380 = vmatprep.subr.mxu0 0.0
  %381 = vmatpush1.msra.mxu0 0.0
  %382 = vmatprep.subr.mxu0 0.0
  %383 = vmatpush1.msra.mxu0 0.0
  %384 = vmatprep.subr.mxu0 0.0
  %385 = vmatpush1.msra.mxu0 0.0
  %386 = vmatprep.subr.mxu0 0.0
  %387 = vmatpush1.msra.mxu0 0.0
  %388 = vmatprep.subr.mxu0 0.0
  %389 = vmatpush1.msra.mxu0 0.0
  %390 = vmatprep.subr.mxu0 0.0
  %391 = vmatpush1.msra.mxu0 0.0
  %392 = vmatprep.subr.mxu0 0.0
  %393 = vmatpush1.msra.mxu0 0.0
  %394 = vmatprep.subr.mxu0 0.0
  %395 = vmatpush1.msra.mxu0 0.0
  %396 = vmatprep.subr.mxu0 %v132
  %397 = vmatpush1.msra.mxu0 %v129
  %398 = vmatprep.subr.mxu0 0.0
  %399 = vmatpush2.msra.mxu0 0.0
  %400 = vmatprep.subr.mxu0 0.0
  %401 = vmatpush2.msra.mxu0 0.0
  %402 = vmatprep.subr.mxu0 0.0
  %403 = vmatpush2.msra.mxu0 0.0
  %404 = vmatprep.subr.mxu0 0.0
  %405 = vmatpush2.msra.mxu0 0.0
  %406 = vmatprep.subr.mxu0 0.0
  %407 = vmatpush2.msra.mxu0 0.0
  %408 = vmatprep.subr.mxu0 0.0
  %409 = vmatpush2.msra.mxu0 0.0
  %410 = vmatprep.subr.mxu0 0.0
  %411 = vmatpush2.msra.mxu0 0.0
  %412 = vmatprep.subr.mxu0 0.0
  %413 = vmatpush2.msra.mxu0 0.0
  %414 = vmatprep.subr.mxu0 0.0
  %415 = vmatpush2.msra.mxu0 0.0
  %416 = vmatprep.subr.mxu0 0.0
  %417 = vmatpush2.msra.mxu0 0.0
  %418 = vmatprep.subr.mxu0 0.0
  %419 = vmatpush2.msra.mxu0 0.0
  %420 = vmatprep.subr.mxu0 0.0
  %421 = vmatpush2.msra.mxu0 0.0
  %422 = vmatprep.subr.mxu0 0.0
  %423 = vmatpush2.msra.mxu0 0.0
  %424 = vmatprep.subr.mxu0 0.0
  %425 = vmatpush2.msra.mxu0 0.0
  %426 = vmatprep.subr.mxu0 0.0
  %427 = vmatpush2.msra.mxu0 0.0
  %428 = vmatprep.subr.mxu0 0.0
  %429 = vmatpush2.msra.mxu0 0.0
  %430 = vmatprep.mubr.f32.mxu0 0.0
  %431 = vmatmul.mubr.f32.gmra.mxu0 %v92
  %v432 = vpop.f32.mrf.mxu0
  %v433 = vadd.f32 %v69, %v432
  %v434 = vpop.f32.mrf.mxu0
  %v435 = vadd.f32 %v73, %v434
  %436 = vmatprep.mubr.f32.mxu0 0.0
  %437 = vmatmul.mubr.f32.gmra.mxu0 %v95
  %v438 = vpop.f32.mrf.mxu0
  %v439 = vadd.f32 %v69, %v438
  %v440 = vpop.f32.mrf.mxu0
  %v441 = vadd.f32 %v73, %v440
  %442 = vmatprep.mubr.f32.mxu0 0.0
  %443 = vmatmul.mubr.f32.gmra.mxu0 %v98
  %v444 = vpop.f32.mrf.mxu0
  %v445 = vadd.f32 %v69, %v444
  %v446 = vpop.f32.mrf.mxu0
  %v447 = vadd.f32 %v73, %v446
  %448 = vmatprep.mubr.f32.mxu0 0.0
  %449 = vmatmul.mubr.f32.gmra.mxu0 %v101
  %v450 = vpop.f32.mrf.mxu0
  %v451 = vadd.f32 %v69, %v450
  %v452 = vpop.f32.mrf.mxu0
  %v453 = vadd.f32 %v73, %v452
  %454 = vmatprep.mubr.f32.mxu0 0.0
  %455 = vmatmul.mubr.f32.gmra.mxu0 %v104
  %v456 = vpop.f32.mrf.mxu0
  %v457 = vadd.f32 %v69, %v456
  %v458 = vpop.f32.mrf.mxu0
  %v459 = vadd.f32 %v73, %v458
  %460 = vmatprep.mubr.f32.mxu0 0.0
  %461 = vmatmul.mubr.f32.gmra.mxu0 %v107
  %v462 = vpop.f32.mrf.mxu0
  %v463 = vadd.f32 %v69, %v462
  %v464 = vpop.f32.mrf.mxu0
  %v465 = vadd.f32 %v73, %v464
  %466 = vmatprep.mubr.f32.mxu0 0.0
  %467 = vmatmul.mubr.f32.gmra.mxu0 %v110
  %v468 = vpop.f32.mrf.mxu0
  %v469 = vadd.f32 %v69, %v468
  %v470 = vpop.f32.mrf.mxu0
  %v471 = vadd.f32 %v73, %v470
  %472 = vmatprep.mubr.f32.mxu0 0.0
  %473 = vmatmul.mubr.f32.gmra.mxu0 %v113
  %v474 = vpop.f32.mrf.mxu0
  %v475 = vadd.f32 %v69, %v474
  %v476 = vpop.f32.mrf.mxu0
  %v477 = vadd.f32 %v73, %v476
  %478 = vdwg.mxu0
  %479 = vmatprep.subr.mxu0 0.0
  %480 = vmatpush1.msra.mxu0 0.0
  %481 = vmatprep.subr.mxu0 0.0
  %482 = vmatpush1.msra.mxu0 0.0
  %483 = vmatprep.subr.mxu0 0.0
  %484 = vmatpush1.msra.mxu0 0.0
  %485 = vmatprep.subr.mxu0 0.0
  %486 = vmatpush1.msra.mxu0 0.0
  %487 = vmatprep.subr.mxu0 0.0
  %488 = vmatpush1.msra.mxu0 0.0
  %489 = vmatprep.subr.mxu0 0.0
  %490 = vmatpush1.msra.mxu0 0.0
  %491 = vmatprep.subr.mxu0 0.0
  %492 = vmatpush1.msra.mxu0 0.0
  %493 = vmatprep.subr.mxu0 0.0
  %494 = vmatpush1.msra.mxu0 0.0
  %495 = vmatprep.subr.mxu0 0.0
  %496 = vmatpush1.msra.mxu0 0.0
  %497 = vmatprep.subr.mxu0 0.0
  %498 = vmatpush1.msra.mxu0 0.0
  %499 = vmatprep.subr.mxu0 0.0
  %500 = vmatpush1.msra.mxu0 0.0
  %501 = vmatprep.subr.mxu0 0.0
  %502 = vmatpush1.msra.mxu0 0.0
  %503 = vmatprep.subr.mxu0 0.0
  %504 = vmatpush1.msra.mxu0 0.0
  %505 = vmatprep.subr.mxu0 0.0
  %506 = vmatpush1.msra.mxu0 0.0
  %507 = vmatprep.subr.mxu0 0.0
  %508 = vmatpush1.msra.mxu0 0.0
  %509 = vmatprep.subr.mxu0 %v138
  %510 = vmatpush1.msra.mxu0 %v135
  %511 = vmatprep.subr.mxu0 0.0
  %512 = vmatpush2.msra.mxu0 0.0
  %513 = vmatprep.subr.mxu0 0.0
  %514 = vmatpush2.msra.mxu0 0.0
  %515 = vmatprep.subr.mxu0 0.0
  %516 = vmatpush2.msra.mxu0 0.0
  %517 = vmatprep.subr.mxu0 0.0
  %518 = vmatpush2.msra.mxu0 0.0
  %519 = vmatprep.subr.mxu0 0.0
  %520 = vmatpush2.msra.mxu0 0.0
  %521 = vmatprep.subr.mxu0 0.0
  %522 = vmatpush2.msra.mxu0 0.0
  %523 = vmatprep.subr.mxu0 0.0
  %524 = vmatpush2.msra.mxu0 0.0
  %525 = vmatprep.subr.mxu0 0.0
  %526 = vmatpush2.msra.mxu0 0.0
  %527 = vmatprep.subr.mxu0 0.0
  %528 = vmatpush2.msra.mxu0 0.0
  %529 = vmatprep.subr.mxu0 0.0
  %530 = vmatpush2.msra.mxu0 0.0
  %531 = vmatprep.subr.mxu0 0.0
  %532 = vmatpush2.msra.mxu0 0.0
  %533 = vmatprep.subr.mxu0 0.0
  %534 = vmatpush2.msra.mxu0 0.0
  %535 = vmatprep.subr.mxu0 0.0
  %536 = vmatpush2.msra.mxu0 0.0
  %537 = vmatprep.subr.mxu0 0.0
  %538 = vmatpush2.msra.mxu0 0.0
  %539 = vmatprep.subr.mxu0 0.0
  %540 = vmatpush2.msra.mxu0 0.0
  %541 = vmatprep.subr.mxu0 0.0
  %542 = vmatpush2.msra.mxu0 0.0
  %543 = vmatprep.mubr.f32.mxu0 0.0
  %544 = vmatmul.mubr.f32.gmra.mxu0 %v92
  %v545 = vpop.f32.mrf.mxu0
  %v546 = vadd.f32 %v77, %v545
  %v547 = vpop.f32.mrf.mxu0
  %v548 = vadd.f32 %v81, %v547
  %549 = vmatprep.mubr.f32.mxu0 0.0
  %550 = vmatmul.mubr.f32.gmra.mxu0 %v95
  %v551 = vpop.f32.mrf.mxu0
  %v552 = vadd.f32 %v77, %v551
  %v553 = vpop.f32.mrf.mxu0
  %v554 = vadd.f32 %v81, %v553
  %555 = vmatprep.mubr.f32.mxu0 0.0
  %556 = vmatmul.mubr.f32.gmra.mxu0 %v98
  %v557 = vpop.f32.mrf.mxu0
  %v558 = vadd.f32 %v77, %v557
  %v559 = vpop.f32.mrf.mxu0
  %v560 = vadd.f32 %v81, %v559
  %561 = vmatprep.mubr.f32.mxu0 0.0
  %562 = vmatmul.mubr.f32.gmra.mxu0 %v101
  %v563 = vpop.f32.mrf.mxu0
  %v564 = vadd.f32 %v77, %v563
  %v565 = vpop.f32.mrf.mxu0
  %v566 = vadd.f32 %v81, %v565
  %567 = vmatprep.mubr.f32.mxu0 0.0
  %568 = vmatmul.mubr.f32.gmra.mxu0 %v104
  %v569 = vpop.f32.mrf.mxu0
  %v570 = vadd.f32 %v77, %v569
  %v571 = vpop.f32.mrf.mxu0
  %v572 = vadd.f32 %v81, %v571
  %573 = vmatprep.mubr.f32.mxu0 0.0
  %574 = vmatmul.mubr.f32.gmra.mxu0 %v107
  %v575 = vpop.f32.mrf.mxu0
  %v576 = vadd.f32 %v77, %v575
  %v577 = vpop.f32.mrf.mxu0
  %v578 = vadd.f32 %v81, %v577
  %579 = vmatprep.mubr.f32.mxu0 0.0
  %580 = vmatmul.mubr.f32.gmra.mxu0 %v110
  %v581 = vpop.f32.mrf.mxu0
  %v582 = vadd.f32 %v77, %v581
  %v583 = vpop.f32.mrf.mxu0
  %v584 = vadd.f32 %v81, %v583
  %585 = vmatprep.mubr.f32.mxu0 0.0
  %586 = vmatmul.mubr.f32.gmra.mxu0 %v113
  %v587 = vpop.f32.mrf.mxu0
  %v588 = vadd.f32 %v77, %v587
  %v589 = vpop.f32.mrf.mxu0
  %v590 = vadd.f32 %v81, %v589
  %591 = vdwg.mxu0
  %592 = vst [vmem:[#allocation2] sm:$0xff] %v207
  %593 = vst [vmem:[#allocation2 + $0x8] sm:$0xff] %v209
  %594 = vst [vmem:[#allocation2 + $0x10] sm:$0xff] %v320
  %595 = vst [vmem:[#allocation2 + $0x18] sm:$0xff] %v322
  %596 = vst [vmem:[#allocation2 + $0x20] sm:$0xff] %v433
  %597 = vst [vmem:[#allocation2 + $0x28] sm:$0xff] %v435
  %598 = vst [vmem:[#allocation2 + $0x30] sm:$0xff] %v546
  %599 = vst [vmem:[#allocation2 + $0x38] sm:$0xff] %v548
  %600 = vst [vmem:[#allocation2 + $0x40] sm:$0xff] %v213
  %601 = vst [vmem:[#allocation2 + $0x48] sm:$0xff] %v215
  %602 = vst [vmem:[#allocation2 + $0x50] sm:$0xff] %v326
  %603 = vst [vmem:[#allocation2 + $0x58] sm:$0xff] %v328
  %604 = vst [vmem:[#allocation2 + $0x60] sm:$0xff] %v439
  %605 = vst [vmem:[#allocation2 + $0x68] sm:$0xff] %v441
  %606 = vst [vmem:[#allocation2 + $0x70] sm:$0xff] %v552
  %607 = vst [vmem:[#allocation2 + $0x78] sm:$0xff] %v554
  %608 = vst [vmem:[#allocation2 + $0x80] sm:$0xff] %v219
  %609 = vst [vmem:[#allocation2 + $0x88] sm:$0xff] %v221
  %610 = vst [vmem:[#allocation2 + $0x90] sm:$0xff] %v332
  %611 = vst [vmem:[#allocation2 + $0x98] sm:$0xff] %v334
  %612 = vst [vmem:[#allocation2 + $0xa0] sm:$0xff] %v445
  %613 = vst [vmem:[#allocation2 + $0xa8] sm:$0xff] %v447
  %614 = vst [vmem:[#allocation2 + $0xb0] sm:$0xff] %v558
  %615 = vst [vmem:[#allocation2 + $0xb8] sm:$0xff] %v560
  %616 = vst [vmem:[#allocation2 + $0xc0] sm:$0xff] %v225
  %617 = vst [vmem:[#allocation2 + $0xc8] sm:$0xff] %v227
  %618 = vst [vmem:[#allocation2 + $0xd0] sm:$0xff] %v338
  %619 = vst [vmem:[#allocation2 + $0xd8] sm:$0xff] %v340
  %620 = vst [vmem:[#allocation2 + $0xe0] sm:$0xff] %v451
  %621 = vst [vmem:[#allocation2 + $0xe8] sm:$0xff] %v453
  %622 = vst [vmem:[#allocation2 + $0xf0] sm:$0xff] %v564
  %623 = vst [vmem:[#allocation2 + $0xf8] sm:$0xff] %v566
  %624 = vst [vmem:[#allocation2 + $0x100] sm:$0xff] %v231
  %625 = vst [vmem:[#allocation2 + $0x108] sm:$0xff] %v233
  %626 = vst [vmem:[#allocation2 + $0x110] sm:$0xff] %v344
  %627 = vst [vmem:[#allocation2 + $0x118] sm:$0xff] %v346
  %628 = vst [vmem:[#allocation2 + $0x120] sm:$0xff] %v457
  %629 = vst [vmem:[#allocation2 + $0x128] sm:$0xff] %v459
  %630 = vst [vmem:[#allocation2 + $0x130] sm:$0xff] %v570
  %631 = vst [vmem:[#allocation2 + $0x138] sm:$0xff] %v572
  %632 = vst [vmem:[#allocation2 + $0x140] sm:$0xff] %v237
  %633 = vst [vmem:[#allocation2 + $0x148] sm:$0xff] %v239
  %634 = vst [vmem:[#allocation2 + $0x150] sm:$0xff] %v350
  %635 = vst [vmem:[#allocation2 + $0x158] sm:$0xff] %v352
  %636 = vst [vmem:[#allocation2 + $0x160] sm:$0xff] %v463
  %637 = vst [vmem:[#allocation2 + $0x168] sm:$0xff] %v465
  %638 = vst [vmem:[#allocation2 + $0x170] sm:$0xff] %v576
  %639 = vst [vmem:[#allocation2 + $0x178] sm:$0xff] %v578
  %640 = vst [vmem:[#allocation2 + $0x180] sm:$0xff] %v243
  %641 = vst [vmem:[#allocation2 + $0x188] sm:$0xff] %v245
  %642 = vst [vmem:[#allocation2 + $0x190] sm:$0xff] %v356
  %643 = vst [vmem:[#allocation2 + $0x198] sm:$0xff] %v358
  %644 = vst [vmem:[#allocation2 + $0x1a0] sm:$0xff] %v469
  %645 = vst [vmem:[#allocation2 + $0x1a8] sm:$0xff] %v471
  %646 = vst [vmem:[#allocation2 + $0x1b0] sm:$0xff] %v582
  %647 = vst [vmem:[#allocation2 + $0x1b8] sm:$0xff] %v584
  %648 = vst [vmem:[#allocation2 + $0x1c0] sm:$0xff] %v249
  %649 = vst [vmem:[#allocation2 + $0x1c8] sm:$0xff] %v251
  %650 = vst [vmem:[#allocation2 + $0x1d0] sm:$0xff] %v362
  %651 = vst [vmem:[#allocation2 + $0x1d8] sm:$0xff] %v364
  %652 = vst [vmem:[#allocation2 + $0x1e0] sm:$0xff] %v475
  %653 = vst [vmem:[#allocation2 + $0x1e8] sm:$0xff] %v477
  %654 = vst [vmem:[#allocation2 + $0x1f0] sm:$0xff] %v588
  %655 = vst [vmem:[#allocation2 + $0x1f8] sm:$0xff] %v590
  %v656 = vld [vmem:[#allocation2] sm:$0xff]
  %v657 = vld [vmem:[#allocation2 + $0x10] sm:$0xff]
  %v658 = vld [vmem:[#allocation2 + $0x18] sm:$0xff]
  %v659 = vxor.u32 %v656, 2147483648
  %v660 = vmul.f32 %v659, 1.442695
  %v661 = vpow.pop %v660
  %v662 = vadd.f32 %v661, 1.0
  %v663 = vrcp.pop %v662
  %v664 = vmul.f32 1.0, %v663
  %v665 = vtanh.pop %v657
  %v666 = vxor.u32 %v658, 2147483648
  %v667 = vmul.f32 %v666, 1.442695
  %v668 = vpow.pop %v667
  %v669 = vadd.f32 %v668, 1.0
  %v670 = vrcp.pop %v669
  %v671 = vmul.f32 1.0, %v670
  %v672 = vmul.f32 %v664, %v665
  %v673 = vtanh.pop %v672
  %v674 = vmul.f32 %v671, %v673
  %v675 = vld [vmem:[#allocation2 + $0x40] sm:$0xff]
  %v676 = vld [vmem:[#allocation2 + $0x48] sm:$0xff]
  %v677 = vld [vmem:[#allocation2 + $0x50] sm:$0xff]
  %v678 = vld [vmem:[#allocation2 + $0x58] sm:$0xff]
  %v679 = vld [vmem:[%s3] sm:$0xff]
  %v680 = vld [vmem:[%s3 + $0x8] sm:$0xff]
  %v681 = vld [vmem:[%s3 + $0x10] sm:$0xff]
  %v682 = vld [vmem:[%s3 + $0x18] sm:$0xff]
  %v683 = vld [vmem:[%s3 + $0x20] sm:$0xff]
  %v684 = vld [vmem:[%s3 + $0x28] sm:$0xff]
  %v685 = vld [vmem:[%s3 + $0x30] sm:$0xff]
  %v686 = vld [vmem:[%s3 + $0x38] sm:$0xff]
  %v687 = vld [vmem:[%s3 + $0x40] sm:$0xff]
  %v688 = vld [vmem:[%s3 + $0x48] sm:$0xff]
  %v689 = vld [vmem:[%s3 + $0x50] sm:$0xff]
  %v690 = vld [vmem:[%s3 + $0x58] sm:$0xff]
  %v691 = vld [vmem:[%s3 + $0x60] sm:$0xff]
  %v692 = vld [vmem:[%s3 + $0x68] sm:$0xff]
  %v693 = vld [vmem:[%s3 + $0x70] sm:$0xff]
  %v694 = vld [vmem:[%s3 + $0x78] sm:$0xff]
  %v695 = vld [vmem:[%s3 + $0x80] sm:$0xff]
  %v696 = vld [vmem:[%s3 + $0x88] sm:$0xff]
  %v697 = vld [vmem:[%s3 + $0x90] sm:$0xff]
  %v698 = vld [vmem:[%s3 + $0x98] sm:$0xff]
  %v699 = vld [vmem:[%s3 + $0xa0] sm:$0xff]
  %v700 = vld [vmem:[%s3 + $0xa8] sm:$0xff]
  %v701 = vld [vmem:[%s3 + $0xb0] sm:$0xff]
  %v702 = vld [vmem:[%s3 + $0xb8] sm:$0xff]
  %v703 = vld [vmem:[%s3 + $0xc0] sm:$0xff]
  %v704 = vld [vmem:[%s3 + $0xc8] sm:$0xff]
  %v705 = vld [vmem:[%s3 + $0xd0] sm:$0xff]
  %v706 = vld [vmem:[%s3 + $0xd8] sm:$0xff]
  %v707 = vld [vmem:[%s3 + $0xe0] sm:$0xff]
  %v708 = vld [vmem:[%s3 + $0xe8] sm:$0xff]
  %v709 = vld [vmem:[%s3 + $0xf0] sm:$0xff]
  %v710 = vld [vmem:[%s3 + $0xf8] sm:$0xff]
  %v711 = vld [vmem:[%s3 + $0x100] sm:$0xff]
  %v712 = vld [vmem:[%s3 + $0x108] sm:$0xff]
  %v713 = vld [vmem:[%s3 + $0x110] sm:$0xff]
  %v714 = vld [vmem:[%s3 + $0x118] sm:$0xff]
  %v715 = vld [vmem:[%s3 + $0x120] sm:$0xff]
  %v716 = vld [vmem:[%s3 + $0x128] sm:$0xff]
  %v717 = vld [vmem:[%s3 + $0x130] sm:$0xff]
  %v718 = vld [vmem:[%s3 + $0x138] sm:$0xff]
  %v719 = vld [vmem:[%s3 + $0x140] sm:$0xff]
  %v720 = vld [vmem:[%s3 + $0x148] sm:$0xff]
  %v721 = vld [vmem:[%s3 + $0x150] sm:$0xff]
  %v722 = vld [vmem:[%s3 + $0x158] sm:$0xff]
  %v723 = vld [vmem:[%s3 + $0x160] sm:$0xff]
  %v724 = vld [vmem:[%s3 + $0x168] sm:$0xff]
  %v725 = vld [vmem:[%s3 + $0x170] sm:$0xff]
  %v726 = vld [vmem:[%s3 + $0x178] sm:$0xff]
  %v727 = vld [vmem:[%s3 + $0x180] sm:$0xff]
  %v728 = vld [vmem:[%s3 + $0x188] sm:$0xff]
  %v729 = vld [vmem:[%s3 + $0x190] sm:$0xff]
  %v730 = vld [vmem:[%s3 + $0x198] sm:$0xff]
  %v731 = vld [vmem:[%s3 + $0x1a0] sm:$0xff]
  %v732 = vld [vmem:[%s3 + $0x1a8] sm:$0xff]
  %v733 = vld [vmem:[%s3 + $0x1b0] sm:$0xff]
  %v734 = vld [vmem:[%s3 + $0x1b8] sm:$0xff]
  %v735 = vld [vmem:[%s3 + $0x1c0] sm:$0xff]
  %v736 = vld [vmem:[%s3 + $0x1c8] sm:$0xff]
  %v737 = vld [vmem:[%s3 + $0x1d0] sm:$0xff]
  %v738 = vld [vmem:[%s3 + $0x1d8] sm:$0xff]
  %v739 = vld [vmem:[%s3 + $0x1e0] sm:$0xff]
  %v740 = vld [vmem:[%s3 + $0x1e8] sm:$0xff]
  %v741 = vld [vmem:[%s3 + $0x1f0] sm:$0xff]
  %v742 = vld [vmem:[%s3 + $0x1f8] sm:$0xff]
  %743 = vmatprep.subr.mxu0 %v740
  %744 = vmatpush1.msra.mxu0 %v739
  %745 = vmatprep.subr.mxu0 %v736
  %746 = vmatpush1.msra.mxu0 %v735
  %747 = vmatprep.subr.mxu0 %v732
  %748 = vmatpush1.msra.mxu0 %v731
  %749 = vmatprep.subr.mxu0 %v728
  %750 = vmatpush1.msra.mxu0 %v727
  %751 = vmatprep.subr.mxu0 %v724
  %752 = vmatpush1.msra.mxu0 %v723
  %753 = vmatprep.subr.mxu0 %v720
  %754 = vmatpush1.msra.mxu0 %v719
  %755 = vmatprep.subr.mxu0 %v716
  %756 = vmatpush1.msra.mxu0 %v715
  %757 = vmatprep.subr.mxu0 %v712
  %758 = vmatpush1.msra.mxu0 %v711
  %759 = vmatprep.subr.mxu0 %v708
  %760 = vmatpush1.msra.mxu0 %v707
  %761 = vmatprep.subr.mxu0 %v704
  %762 = vmatpush1.msra.mxu0 %v703
  %763 = vmatprep.subr.mxu0 %v700
  %764 = vmatpush1.msra.mxu0 %v699
  %765 = vmatprep.subr.mxu0 %v696
  %766 = vmatpush1.msra.mxu0 %v695
  %767 = vmatprep.subr.mxu0 %v692
  %768 = vmatpush1.msra.mxu0 %v691
  %769 = vmatprep.subr.mxu0 %v688
  %770 = vmatpush1.msra.mxu0 %v687
  %771 = vmatprep.subr.mxu0 %v684
  %772 = vmatpush1.msra.mxu0 %v683
  %773 = vmatprep.subr.mxu0 %v680
  %774 = vmatpush1.msra.mxu0 %v679
  %775 = vmatprep.subr.mxu0 0.0
  %776 = vmatpush2.msra.mxu0 0.0
  %777 = vmatprep.subr.mxu0 0.0
  %778 = vmatpush2.msra.mxu0 0.0
  %779 = vmatprep.subr.mxu0 0.0
  %780 = vmatpush2.msra.mxu0 0.0
  %781 = vmatprep.subr.mxu0 0.0
  %782 = vmatpush2.msra.mxu0 0.0
  %783 = vmatprep.subr.mxu0 0.0
  %784 = vmatpush2.msra.mxu0 0.0
  %785 = vmatprep.subr.mxu0 0.0
  %786 = vmatpush2.msra.mxu0 0.0
  %787 = vmatprep.subr.mxu0 0.0
  %788 = vmatpush2.msra.mxu0 0.0
  %789 = vmatprep.subr.mxu0 0.0
  %790 = vmatpush2.msra.mxu0 0.0
  %791 = vmatprep.subr.mxu0 0.0
  %792 = vmatpush2.msra.mxu0 0.0
  %793 = vmatprep.subr.mxu0 0.0
  %794 = vmatpush2.msra.mxu0 0.0
  %795 = vmatprep.subr.mxu0 0.0
  %796 = vmatpush2.msra.mxu0 0.0
  %797 = vmatprep.subr.mxu0 0.0
  %798 = vmatpush2.msra.mxu0 0.0
  %799 = vmatprep.subr.mxu0 0.0
  %800 = vmatpush2.msra.mxu0 0.0
  %801 = vmatprep.subr.mxu0 0.0
  %802 = vmatpush2.msra.mxu0 0.0
  %803 = vmatprep.subr.mxu0 0.0
  %804 = vmatpush2.msra.mxu0 0.0
  %805 = vmatprep.subr.mxu0 0.0
  %806 = vmatpush2.msra.mxu0 0.0
  %807 = vmatprep.mubr.f32.mxu0 0.0
  %808 = vmatmul.mubr.f32.gmra.mxu0 %v674
  %v809 = vpop.f32.mrf.mxu0
  %v810 = vadd.f32 0.0, %v809
  %v811 = vpop.f32.mrf.mxu0
  %v812 = vadd.f32 0.0, %v811
  %813 = vdwg.mxu0
  %814 = vmatprep.subr.mxu0 %v742
  %815 = vmatpush1.msra.mxu0 %v741
  %816 = vmatprep.subr.mxu0 %v738
  %817 = vmatpush1.msra.mxu0 %v737
  %818 = vmatprep.subr.mxu0 %v734
  %819 = vmatpush1.msra.mxu0 %v733
  %820 = vmatprep.subr.mxu0 %v730
  %821 = vmatpush1.msra.mxu0 %v729
  %822 = vmatprep.subr.mxu0 %v726
  %823 = vmatpush1.msra.mxu0 %v725
  %824 = vmatprep.subr.mxu0 %v722
  %825 = vmatpush1.msra.mxu0 %v721
  %826 = vmatprep.subr.mxu0 %v718
  %827 = vmatpush1.msra.mxu0 %v717
  %828 = vmatprep.subr.mxu0 %v714
  %829 = vmatpush1.msra.mxu0 %v713
  %830 = vmatprep.subr.mxu0 %v710
  %831 = vmatpush1.msra.mxu0 %v709
  %832 = vmatprep.subr.mxu0 %v706
  %833 = vmatpush1.msra.mxu0 %v705
  %834 = vmatprep.subr.mxu0 %v702
  %835 = vmatpush1.msra.mxu0 %v701
  %836 = vmatprep.subr.mxu0 %v698
  %837 = vmatpush1.msra.mxu0 %v697
  %838 = vmatprep.subr.mxu0 %v694
  %839 = vmatpush1.msra.mxu0 %v693
  %840 = vmatprep.subr.mxu0 %v690
  %841 = vmatpush1.msra.mxu0 %v689
  %842 = vmatprep.subr.mxu0 %v686
  %843 = vmatpush1.msra.mxu0 %v685
  %844 = vmatprep.subr.mxu0 %v682
  %845 = vmatpush1.msra.mxu0 %v681
  %846 = vmatprep.subr.mxu0 0.0
  %847 = vmatpush2.msra.mxu0 0.0
  %848 = vmatprep.subr.mxu0 0.0
  %849 = vmatpush2.msra.mxu0 0.0
  %850 = vmatprep.subr.mxu0 0.0
  %851 = vmatpush2.msra.mxu0 0.0
  %852 = vmatprep.subr.mxu0 0.0
  %853 = vmatpush2.msra.mxu0 0.0
  %854 = vmatprep.subr.mxu0 0.0
  %855 = vmatpush2.msra.mxu0 0.0
  %856 = vmatprep.subr.mxu0 0.0
  %857 = vmatpush2.msra.mxu0 0.0
  %858 = vmatprep.subr.mxu0 0.0
  %859 = vmatpush2.msra.mxu0 0.0
  %860 = vmatprep.subr.mxu0 0.0
  %861 = vmatpush2.msra.mxu0 0.0
  %862 = vmatprep.subr.mxu0 0.0
  %863 = vmatpush2.msra.mxu0 0.0
  %864 = vmatprep.subr.mxu0 0.0
  %865 = vmatpush2.msra.mxu0 0.0
  %866 = vmatprep.subr.mxu0 0.0
  %867 = vmatpush2.msra.mxu0 0.0
  %868 = vmatprep.subr.mxu0 0.0
  %869 = vmatpush2.msra.mxu0 0.0
  %870 = vmatprep.subr.mxu0 0.0
  %871 = vmatpush2.msra.mxu0 0.0
  %872 = vmatprep.subr.mxu0 0.0
  %873 = vmatpush2.msra.mxu0 0.0
  %874 = vmatprep.subr.mxu0 0.0
  %875 = vmatpush2.msra.mxu0 0.0
  %876 = vmatprep.subr.mxu0 0.0
  %877 = vmatpush2.msra.mxu0 0.0
  %878 = vmatprep.mubr.f32.mxu0 0.0
  %879 = vmatmul.mubr.f32.gmra.mxu0 %v674
  %v880 = vpop.f32.mrf.mxu0
  %v881 = vadd.f32 0.0, %v880
  %v882 = vpop.f32.mrf.mxu0
  %v883 = vadd.f32 0.0, %v882
  %884 = vdwg.mxu0
  %v885 = vadd.f32 %v675, %v810
  %v886 = vadd.f32 %v676, %v812
  %v887 = vadd.f32 %v677, %v881
  %v888 = vadd.f32 %v678, %v883
  %v889 = vxor.u32 %v885, 2147483648
  %v890 = vmul.f32 %v889, 1.442695
  %v891 = vpow.pop %v890
  %v892 = vadd.f32 %v891, 1.0
  %v893 = vrcp.pop %v892
  %v894 = vmul.f32 1.0, %v893
  %v895 = vxor.u32 %v886, 2147483648
  %v896 = vmul.f32 %v895, 1.442695
  %v897 = vpow.pop %v896
  %v898 = vadd.f32 %v897, 1.0
  %v899 = vrcp.pop %v898
  %v900 = vmul.f32 1.0, %v899
  %v901 = vtanh.pop %v887
  %v902 = vxor.u32 %v888, 2147483648
  %v903 = vmul.f32 %v902, 1.442695
  %v904 = vpow.pop %v903
  %v905 = vadd.f32 %v904, 1.0
  %v906 = vrcp.pop %v905
  %v907 = vmul.f32 1.0, %v906
  %v908 = vmul.f32 %v900, %v672
  %v909 = vmul.f32 %v894, %v901
  %v910 = vadd.f32 %v908, %v909
  %v911 = vtanh.pop %v910
  %v912 = vmul.f32 %v907, %v911
  %v913 = vld [vmem:[#allocation2 + $0x80] sm:$0xff]
  %v914 = vld [vmem:[#allocation2 + $0x88] sm:$0xff]
  %v915 = vld [vmem:[#allocation2 + $0x90] sm:$0xff]
  %v916 = vld [vmem:[#allocation2 + $0x98] sm:$0xff]
  %917 = vmatprep.subr.mxu0 %v740
  %918 = vmatpush1.msra.mxu0 %v739
  %919 = vmatprep.subr.mxu0 %v736
  %920 = vmatpush1.msra.mxu0 %v735
  %921 = vmatprep.subr.mxu0 %v732
  %922 = vmatpush1.msra.mxu0 %v731
  %923 = vmatprep.subr.mxu0 %v728
  %924 = vmatpush1.msra.mxu0 %v727
  %925 = vmatprep.subr.mxu0 %v724
  %926 = vmatpush1.msra.mxu0 %v723
  %927 = vmatprep.subr.mxu0 %v720
  %928 = vmatpush1.msra.mxu0 %v719
  %929 = vmatprep.subr.mxu0 %v716
  %930 = vmatpush1.msra.mxu0 %v715
  %931 = vmatprep.subr.mxu0 %v712
  %932 = vmatpush1.msra.mxu0 %v711
  %933 = vmatprep.subr.mxu0 %v708
  %934 = vmatpush1.msra.mxu0 %v707
  %935 = vmatprep.subr.mxu0 %v704
  %936 = vmatpush1.msra.mxu0 %v703
  %937 = vmatprep.subr.mxu0 %v700
  %938 = vmatpush1.msra.mxu0 %v699
  %939 = vmatprep.subr.mxu0 %v696
  %940 = vmatpush1.msra.mxu0 %v695
  %941 = vmatprep.subr.mxu0 %v692
  %942 = vmatpush1.msra.mxu0 %v691
  %943 = vmatprep.subr.mxu0 %v688
  %944 = vmatpush1.msra.mxu0 %v687
  %945 = vmatprep.subr.mxu0 %v684
  %946 = vmatpush1.msra.mxu0 %v683
  %947 = vmatprep.subr.mxu0 %v680
  %948 = vmatpush1.msra.mxu0 %v679
  %949 = vmatprep.subr.mxu0 0.0
  %950 = vmatpush2.msra.mxu0 0.0
  %951 = vmatprep.subr.mxu0 0.0
  %952 = vmatpush2.msra.mxu0 0.0
  %953 = vmatprep.subr.mxu0 0.0
  %954 = vmatpush2.msra.mxu0 0.0
  %955 = vmatprep.subr.mxu0 0.0
  %956 = vmatpush2.msra.mxu0 0.0
  %957 = vmatprep.subr.mxu0 0.0
  %958 = vmatpush2.msra.mxu0 0.0
  %959 = vmatprep.subr.mxu0 0.0
  %960 = vmatpush2.msra.mxu0 0.0
  %961 = vmatprep.subr.mxu0 0.0
  %962 = vmatpush2.msra.mxu0 0.0
  %963 = vmatprep.subr.mxu0 0.0
  %964 = vmatpush2.msra.mxu0 0.0
  %965 = vmatprep.subr.mxu0 0.0
  %966 = vmatpush2.msra.mxu0 0.0
  %967 = vmatprep.subr.mxu0 0.0
  %968 = vmatpush2.msra.mxu0 0.0
  %969 = vmatprep.subr.mxu0 0.0
  %970 = vmatpush2.msra.mxu0 0.0
  %971 = vmatprep.subr.mxu0 0.0
  %972 = vmatpush2.msra.mxu0 0.0
  %973 = vmatprep.subr.mxu0 0.0
  %974 = vmatpush2.msra.mxu0 0.0
  %975 = vmatprep.subr.mxu0 0.0
  %976 = vmatpush2.msra.mxu0 0.0
  %977 = vmatprep.subr.mxu0 0.0
  %978 = vmatpush2.msra.mxu0 0.0
  %979 = vmatprep.subr.mxu0 0.0
  %980 = vmatpush2.msra.mxu0 0.0
  %981 = vmatprep.mubr.f32.mxu0 0.0
  %982 = vmatmul.mubr.f32.gmra.mxu0 %v912
  %v983 = vpop.f32.mrf.mxu0
  %v984 = vadd.f32 0.0, %v983
  %v985 = vpop.f32.mrf.mxu0
  %v986 = vadd.f32 0.0, %v985
  %987 = vdwg.mxu0
  %988 = vmatprep.subr.mxu0 %v742
  %989 = vmatpush1.msra.mxu0 %v741
  %990 = vmatprep.subr.mxu0 %v738
  %991 = vmatpush1.msra.mxu0 %v737
  %992 = vmatprep.subr.mxu0 %v734
  %993 = vmatpush1.msra.mxu0 %v733
  %994 = vmatprep.subr.mxu0 %v730
  %995 = vmatpush1.msra.mxu0 %v729
  %996 = vmatprep.subr.mxu0 %v726
  %997 = vmatpush1.msra.mxu0 %v725
  %998 = vmatprep.subr.mxu0 %v722
  %999 = vmatpush1.msra.mxu0 %v721
  %1000 = vmatprep.subr.mxu0 %v718
  %1001 = vmatpush1.msra.mxu0 %v717
  %1002 = vmatprep.subr.mxu0 %v714
  %1003 = vmatpush1.msra.mxu0 %v713
  %1004 = vmatprep.subr.mxu0 %v710
  %1005 = vmatpush1.msra.mxu0 %v709
  %1006 = vmatprep.subr.mxu0 %v706
  %1007 = vmatpush1.msra.mxu0 %v705
  %1008 = vmatprep.subr.mxu0 %v702
  %1009 = vmatpush1.msra.mxu0 %v701
  %1010 = vmatprep.subr.mxu0 %v698
  %1011 = vmatpush1.msra.mxu0 %v697
  %1012 = vmatprep.subr.mxu0 %v694
  %1013 = vmatpush1.msra.mxu0 %v693
  %1014 = vmatprep.subr.mxu0 %v690
  %1015 = vmatpush1.msra.mxu0 %v689
  %1016 = vmatprep.subr.mxu0 %v686
  %1017 = vmatpush1.msra.mxu0 %v685
  %1018 = vmatprep.subr.mxu0 %v682
  %1019 = vmatpush1.msra.mxu0 %v681
  %1020 = vmatprep.subr.mxu0 0.0
  %1021 = vmatpush2.msra.mxu0 0.0
  %1022 = vmatprep.subr.mxu0 0.0
  %1023 = vmatpush2.msra.mxu0 0.0
  %1024 = vmatprep.subr.mxu0 0.0
  %1025 = vmatpush2.msra.mxu0 0.0
  %1026 = vmatprep.subr.mxu0 0.0
  %1027 = vmatpush2.msra.mxu0 0.0
  %1028 = vmatprep.subr.mxu0 0.0
  %1029 = vmatpush2.msra.mxu0 0.0
  %1030 = vmatprep.subr.mxu0 0.0
  %1031 = vmatpush2.msra.mxu0 0.0
  %1032 = vmatprep.subr.mxu0 0.0
  %1033 = vmatpush2.msra.mxu0 0.0
  %1034 = vmatprep.subr.mxu0 0.0
  %1035 = vmatpush2.msra.mxu0 0.0
  %1036 = vmatprep.subr.mxu0 0.0
  %1037 = vmatpush2.msra.mxu0 0.0
  %1038 = vmatprep.subr.mxu0 0.0
  %1039 = vmatpush2.msra.mxu0 0.0
  %1040 = vmatprep.subr.mxu0 0.0
  %1041 = vmatpush2.msra.mxu0 0.0
  %1042 = vmatprep.subr.mxu0 0.0
  %1043 = vmatpush2.msra.mxu0 0.0
  %1044 = vmatprep.subr.mxu0 0.0
  %1045 = vmatpush2.msra.mxu0 0.0
  %1046 = vmatprep.subr.mxu0 0.0
  %1047 = vmatpush2.msra.mxu0 0.0
  %1048 = vmatprep.subr.mxu0 0.0
  %1049 = vmatpush2.msra.mxu0 0.0
  %1050 = vmatprep.subr.mxu0 0.0
  %1051 = vmatpush2.msra.mxu0 0.0
  %1052 = vmatprep.mubr.f32.mxu0 0.0
  %1053 = vmatmul.mubr.f32.gmra.mxu0 %v912
  %v1054 = vpop.f32.mrf.mxu0
  %v1055 = vadd.f32 0.0, %v1054
  %v1056 = vpop.f32.mrf.mxu0
  %v1057 = vadd.f32 0.0, %v1056
  %1058 = vdwg.mxu0
  %v1059 = vadd.f32 %v913, %v984
  %v1060 = vadd.f32 %v914, %v986
  %v1061 = vadd.f32 %v915, %v1055
  %v1062 = vadd.f32 %v916, %v1057
  %v1063 = vxor.u32 %v1059, 2147483648
  %v1064 = vmul.f32 %v1063, 1.442695
  %v1065 = vpow.pop %v1064
  %v1066 = vadd.f32 %v1065, 1.0
  %v1067 = vrcp.pop %v1066
  %v1068 = vmul.f32 1.0, %v1067
  %v1069 = vxor.u32 %v1060, 2147483648
  %v1070 = vmul.f32 %v1069, 1.442695
  %v1071 = vpow.pop %v1070
  %v1072 = vadd.f32 %v1071, 1.0
  %v1073 = vrcp.pop %v1072
  %v1074 = vmul.f32 1.0, %v1073
  %v1075 = vtanh.pop %v1061
  %v1076 = vxor.u32 %v1062, 2147483648
  %v1077 = vmul.f32 %v1076, 1.442695
  %v1078 = vpow.pop %v1077
  %v1079 = vadd.f32 %v1078, 1.0
  %v1080 = vrcp.pop %v1079
  %v1081 = vmul.f32 1.0, %v1080
  %v1082 = vmul.f32 %v1074, %v910
  %v1083 = vmul.f32 %v1068, %v1075
  %v1084 = vadd.f32 %v1082, %v1083
  %v1085 = vtanh.pop %v1084
  %v1086 = vmul.f32 %v1081, %v1085
  %v1087 = vld [vmem:[#allocation2 + $0xc0] sm:$0xff]
  %v1088 = vld [vmem:[#allocation2 + $0xc8] sm:$0xff]
  %v1089 = vld [vmem:[#allocation2 + $0xd0] sm:$0xff]
  %v1090 = vld [vmem:[#allocation2 + $0xd8] sm:$0xff]
  %1091 = vmatprep.subr.mxu0 %v740
  %1092 = vmatpush1.msra.mxu0 %v739
  %1093 = vmatprep.subr.mxu0 %v736
  %1094 = vmatpush1.msra.mxu0 %v735
  %1095 = vmatprep.subr.mxu0 %v732
  %1096 = vmatpush1.msra.mxu0 %v731
  %1097 = vmatprep.subr.mxu0 %v728
  %1098 = vmatpush1.msra.mxu0 %v727
  %1099 = vmatprep.subr.mxu0 %v724
  %1100 = vmatpush1.msra.mxu0 %v723
  %1101 = vmatprep.subr.mxu0 %v720
  %1102 = vmatpush1.msra.mxu0 %v719
  %1103 = vmatprep.subr.mxu0 %v716
  %1104 = vmatpush1.msra.mxu0 %v715
  %1105 = vmatprep.subr.mxu0 %v712
  %1106 = vmatpush1.msra.mxu0 %v711
  %1107 = vmatprep.subr.mxu0 %v708
  %1108 = vmatpush1.msra.mxu0 %v707
  %1109 = vmatprep.subr.mxu0 %v704
  %1110 = vmatpush1.msra.mxu0 %v703
  %1111 = vmatprep.subr.mxu0 %v700
  %1112 = vmatpush1.msra.mxu0 %v699
  %1113 = vmatprep.subr.mxu0 %v696
  %1114 = vmatpush1.msra.mxu0 %v695
  %1115 = vmatprep.subr.mxu0 %v692
  %1116 = vmatpush1.msra.mxu0 %v691
  %1117 = vmatprep.subr.mxu0 %v688
  %1118 = vmatpush1.msra.mxu0 %v687
  %1119 = vmatprep.subr.mxu0 %v684
  %1120 = vmatpush1.msra.mxu0 %v683
  %1121 = vmatprep.subr.mxu0 %v680
  %1122 = vmatpush1.msra.mxu0 %v679
  %1123 = vmatprep.subr.mxu0 0.0
  %1124 = vmatpush2.msra.mxu0 0.0
  %1125 = vmatprep.subr.mxu0 0.0
  %1126 = vmatpush2.msra.mxu0 0.0
  %1127 = vmatprep.subr.mxu0 0.0
  %1128 = vmatpush2.msra.mxu0 0.0
  %1129 = vmatprep.subr.mxu0 0.0
  %1130 = vmatpush2.msra.mxu0 0.0
  %1131 = vmatprep.subr.mxu0 0.0
  %1132 = vmatpush2.msra.mxu0 0.0
  %1133 = vmatprep.subr.mxu0 0.0
  %1134 = vmatpush2.msra.mxu0 0.0
  %1135 = vmatprep.subr.mxu0 0.0
  %1136 = vmatpush2.msra.mxu0 0.0
  %1137 = vmatprep.subr.mxu0 0.0
  %1138 = vmatpush2.msra.mxu0 0.0
  %1139 = vmatprep.subr.mxu0 0.0
  %1140 = vmatpush2.msra.mxu0 0.0
  %1141 = vmatprep.subr.mxu0 0.0
  %1142 = vmatpush2.msra.mxu0 0.0
  %1143 = vmatprep.subr.mxu0 0.0
  %1144 = vmatpush2.msra.mxu0 0.0
  %1145 = vmatprep.subr.mxu0 0.0
  %1146 = vmatpush2.msra.mxu0 0.0
  %1147 = vmatprep.subr.mxu0 0.0
  %1148 = vmatpush2.msra.mxu0 0.0
  %1149 = vmatprep.subr.mxu0 0.0
  %1150 = vmatpush2.msra.mxu0 0.0
  %1151 = vmatprep.subr.mxu0 0.0
  %1152 = vmatpush2.msra.mxu0 0.0
  %1153 = vmatprep.subr.mxu0 0.0
  %1154 = vmatpush2.msra.mxu0 0.0
  %1155 = vmatprep.mubr.f32.mxu0 0.0
  %1156 = vmatmul.mubr.f32.gmra.mxu0 %v1086
  %v1157 = vpop.f32.mrf.mxu0
  %v1158 = vadd.f32 0.0, %v1157
  %v1159 = vpop.f32.mrf.mxu0
  %v1160 = vadd.f32 0.0, %v1159
  %1161 = vdwg.mxu0
  %1162 = vmatprep.subr.mxu0 %v742
  %1163 = vmatpush1.msra.mxu0 %v741
  %1164 = vmatprep.subr.mxu0 %v738
  %1165 = vmatpush1.msra.mxu0 %v737
  %1166 = vmatprep.subr.mxu0 %v734
  %1167 = vmatpush1.msra.mxu0 %v733
  %1168 = vmatprep.subr.mxu0 %v730
  %1169 = vmatpush1.msra.mxu0 %v729
  %1170 = vmatprep.subr.mxu0 %v726
  %1171 = vmatpush1.msra.mxu0 %v725
  %1172 = vmatprep.subr.mxu0 %v722
  %1173 = vmatpush1.msra.mxu0 %v721
  %1174 = vmatprep.subr.mxu0 %v718
  %1175 = vmatpush1.msra.mxu0 %v717
  %1176 = vmatprep.subr.mxu0 %v714
  %1177 = vmatpush1.msra.mxu0 %v713
  %1178 = vmatprep.subr.mxu0 %v710
  %1179 = vmatpush1.msra.mxu0 %v709
  %1180 = vmatprep.subr.mxu0 %v706
  %1181 = vmatpush1.msra.mxu0 %v705
  %1182 = vmatprep.subr.mxu0 %v702
  %1183 = vmatpush1.msra.mxu0 %v701
  %1184 = vmatprep.subr.mxu0 %v698
  %1185 = vmatpush1.msra.mxu0 %v697
  %1186 = vmatprep.subr.mxu0 %v694
  %1187 = vmatpush1.msra.mxu0 %v693
  %1188 = vmatprep.subr.mxu0 %v690
  %1189 = vmatpush1.msra.mxu0 %v689
  %1190 = vmatprep.subr.mxu0 %v686
  %1191 = vmatpush1.msra.mxu0 %v685
  %1192 = vmatprep.subr.mxu0 %v682
  %1193 = vmatpush1.msra.mxu0 %v681
  %1194 = vmatprep.subr.mxu0 0.0
  %1195 = vmatpush2.msra.mxu0 0.0
  %1196 = vmatprep.subr.mxu0 0.0
  %1197 = vmatpush2.msra.mxu0 0.0
  %1198 = vmatprep.subr.mxu0 0.0
  %1199 = vmatpush2.msra.mxu0 0.0
  %1200 = vmatprep.subr.mxu0 0.0
  %1201 = vmatpush2.msra.mxu0 0.0
  %1202 = vmatprep.subr.mxu0 0.0
  %1203 = vmatpush2.msra.mxu0 0.0
  %1204 = vmatprep.subr.mxu0 0.0
  %1205 = vmatpush2.msra.mxu0 0.0
  %1206 = vmatprep.subr.mxu0 0.0
  %1207 = vmatpush2.msra.mxu0 0.0
  %1208 = vmatprep.subr.mxu0 0.0
  %1209 = vmatpush2.msra.mxu0 0.0
  %1210 = vmatprep.subr.mxu0 0.0
  %1211 = vmatpush2.msra.mxu0 0.0
  %1212 = vmatprep.subr.mxu0 0.0
  %1213 = vmatpush2.msra.mxu0 0.0
  %1214 = vmatprep.subr.mxu0 0.0
  %1215 = vmatpush2.msra.mxu0 0.0
  %1216 = vmatprep.subr.mxu0 0.0
  %1217 = vmatpush2.msra.mxu0 0.0
  %1218 = vmatprep.subr.mxu0 0.0
  %1219 = vmatpush2.msra.mxu0 0.0
  %1220 = vmatprep.subr.mxu0 0.0
  %1221 = vmatpush2.msra.mxu0 0.0
  %1222 = vmatprep.subr.mxu0 0.0
  %1223 = vmatpush2.msra.mxu0 0.0
  %1224 = vmatprep.subr.mxu0 0.0
  %1225 = vmatpush2.msra.mxu0 0.0
  %1226 = vmatprep.mubr.f32.mxu0 0.0
  %1227 = vmatmul.mubr.f32.gmra.mxu0 %v1086
  %v1228 = vpop.f32.mrf.mxu0
  %v1229 = vadd.f32 0.0, %v1228
  %v1230 = vpop.f32.mrf.mxu0
  %v1231 = vadd.f32 0.0, %v1230
  %1232 = vdwg.mxu0
  %v1233 = vadd.f32 %v1087, %v1158
  %v1234 = vadd.f32 %v1088, %v1160
  %v1235 = vadd.f32 %v1089, %v1229
  %v1236 = vadd.f32 %v1090, %v1231
  %v1237 = vxor.u32 %v1233, 2147483648
  %v1238 = vmul.f32 %v1237, 1.442695
  %v1239 = vpow.pop %v1238
  %v1240 = vadd.f32 %v1239, 1.0
  %v1241 = vrcp.pop %v1240
  %v1242 = vmul.f32 1.0, %v1241
  %v1243 = vxor.u32 %v1234, 2147483648
  %v1244 = vmul.f32 %v1243, 1.442695
  %v1245 = vpow.pop %v1244
  %v1246 = vadd.f32 %v1245, 1.0
  %v1247 = vrcp.pop %v1246
  %v1248 = vmul.f32 1.0, %v1247
  %v1249 = vtanh.pop %v1235
  %v1250 = vxor.u32 %v1236, 2147483648
  %v1251 = vmul.f32 %v1250, 1.442695
  %v1252 = vpow.pop %v1251
  %v1253 = vadd.f32 %v1252, 1.0
  %v1254 = vrcp.pop %v1253
  %v1255 = vmul.f32 1.0, %v1254
  %v1256 = vmul.f32 %v1248, %v1084
  %v1257 = vmul.f32 %v1242, %v1249
  %v1258 = vadd.f32 %v1256, %v1257
  %v1259 = vtanh.pop %v1258
  %v1260 = vmul.f32 %v1255, %v1259
  %v1261 = vld [vmem:[#allocation2 + $0x100] sm:$0xff]
  %v1262 = vld [vmem:[#allocation2 + $0x108] sm:$0xff]
  %v1263 = vld [vmem:[#allocation2 + $0x110] sm:$0xff]
  %v1264 = vld [vmem:[#allocation2 + $0x118] sm:$0xff]
  %1265 = vmatprep.subr.mxu0 %v740
  %1266 = vmatpush1.msra.mxu0 %v739
  %1267 = vmatprep.subr.mxu0 %v736
  %1268 = vmatpush1.msra.mxu0 %v735
  %1269 = vmatprep.subr.mxu0 %v732
  %1270 = vmatpush1.msra.mxu0 %v731
  %1271 = vmatprep.subr.mxu0 %v728
  %1272 = vmatpush1.msra.mxu0 %v727
  %1273 = vmatprep.subr.mxu0 %v724
  %1274 = vmatpush1.msra.mxu0 %v723
  %1275 = vmatprep.subr.mxu0 %v720
  %1276 = vmatpush1.msra.mxu0 %v719
  %1277 = vmatprep.subr.mxu0 %v716
  %1278 = vmatpush1.msra.mxu0 %v715
  %1279 = vmatprep.subr.mxu0 %v712
  %1280 = vmatpush1.msra.mxu0 %v711
  %1281 = vmatprep.subr.mxu0 %v708
  %1282 = vmatpush1.msra.mxu0 %v707
  %1283 = vmatprep.subr.mxu0 %v704
  %1284 = vmatpush1.msra.mxu0 %v703
  %1285 = vmatprep.subr.mxu0 %v700
  %1286 = vmatpush1.msra.mxu0 %v699
  %1287 = vmatprep.subr.mxu0 %v696
  %1288 = vmatpush1.msra.mxu0 %v695
  %1289 = vmatprep.subr.mxu0 %v692
  %1290 = vmatpush1.msra.mxu0 %v691
  %1291 = vmatprep.subr.mxu0 %v688
  %1292 = vmatpush1.msra.mxu0 %v687
  %1293 = vmatprep.subr.mxu0 %v684
  %1294 = vmatpush1.msra.mxu0 %v683
  %1295 = vmatprep.subr.mxu0 %v680
  %1296 = vmatpush1.msra.mxu0 %v679
  %1297 = vmatprep.subr.mxu0 0.0
  %1298 = vmatpush2.msra.mxu0 0.0
  %1299 = vmatprep.subr.mxu0 0.0
  %1300 = vmatpush2.msra.mxu0 0.0
  %1301 = vmatprep.subr.mxu0 0.0
  %1302 = vmatpush2.msra.mxu0 0.0
  %1303 = vmatprep.subr.mxu0 0.0
  %1304 = vmatpush2.msra.mxu0 0.0
  %1305 = vmatprep.subr.mxu0 0.0
  %1306 = vmatpush2.msra.mxu0 0.0
  %1307 = vmatprep.subr.mxu0 0.0
  %1308 = vmatpush2.msra.mxu0 0.0
  %1309 = vmatprep.subr.mxu0 0.0
  %1310 = vmatpush2.msra.mxu0 0.0
  %1311 = vmatprep.subr.mxu0 0.0
  %1312 = vmatpush2.msra.mxu0 0.0
  %1313 = vmatprep.subr.mxu0 0.0
  %1314 = vmatpush2.msra.mxu0 0.0
  %1315 = vmatprep.subr.mxu0 0.0
  %1316 = vmatpush2.msra.mxu0 0.0
  %1317 = vmatprep.subr.mxu0 0.0
  %1318 = vmatpush2.msra.mxu0 0.0
  %1319 = vmatprep.subr.mxu0 0.0
  %1320 = vmatpush2.msra.mxu0 0.0
  %1321 = vmatprep.subr.mxu0 0.0
  %1322 = vmatpush2.msra.mxu0 0.0
  %1323 = vmatprep.subr.mxu0 0.0
  %1324 = vmatpush2.msra.mxu0 0.0
  %1325 = vmatprep.subr.mxu0 0.0
  %1326 = vmatpush2.msra.mxu0 0.0
  %1327 = vmatprep.subr.mxu0 0.0
  %1328 = vmatpush2.msra.mxu0 0.0
  %1329 = vmatprep.mubr.f32.mxu0 0.0
  %1330 = vmatmul.mubr.f32.gmra.mxu0 %v1260
  %v1331 = vpop.f32.mrf.mxu0
  %v1332 = vadd.f32 0.0, %v1331
  %v1333 = vpop.f32.mrf.mxu0
  %v1334 = vadd.f32 0.0, %v1333
  %1335 = vdwg.mxu0
  %1336 = vmatprep.subr.mxu0 %v742
  %1337 = vmatpush1.msra.mxu0 %v741
  %1338 = vmatprep.subr.mxu0 %v738
  %1339 = vmatpush1.msra.mxu0 %v737
  %1340 = vmatprep.subr.mxu0 %v734
  %1341 = vmatpush1.msra.mxu0 %v733
  %1342 = vmatprep.subr.mxu0 %v730
  %1343 = vmatpush1.msra.mxu0 %v729
  %1344 = vmatprep.subr.mxu0 %v726
  %1345 = vmatpush1.msra.mxu0 %v725
  %1346 = vmatprep.subr.mxu0 %v722
  %1347 = vmatpush1.msra.mxu0 %v721
  %1348 = vmatprep.subr.mxu0 %v718
  %1349 = vmatpush1.msra.mxu0 %v717
  %1350 = vmatprep.subr.mxu0 %v714
  %1351 = vmatpush1.msra.mxu0 %v713
  %1352 = vmatprep.subr.mxu0 %v710
  %1353 = vmatpush1.msra.mxu0 %v709
  %1354 = vmatprep.subr.mxu0 %v706
  %1355 = vmatpush1.msra.mxu0 %v705
  %1356 = vmatprep.subr.mxu0 %v702
  %1357 = vmatpush1.msra.mxu0 %v701
  %1358 = vmatprep.subr.mxu0 %v698
  %1359 = vmatpush1.msra.mxu0 %v697
  %1360 = vmatprep.subr.mxu0 %v694
  %1361 = vmatpush1.msra.mxu0 %v693
  %1362 = vmatprep.subr.mxu0 %v690
  %1363 = vmatpush1.msra.mxu0 %v689
  %1364 = vmatprep.subr.mxu0 %v686
  %1365 = vmatpush1.msra.mxu0 %v685
  %1366 = vmatprep.subr.mxu0 %v682
  %1367 = vmatpush1.msra.mxu0 %v681
  %1368 = vmatprep.subr.mxu0 0.0
  %1369 = vmatpush2.msra.mxu0 0.0
  %1370 = vmatprep.subr.mxu0 0.0
  %1371 = vmatpush2.msra.mxu0 0.0
  %1372 = vmatprep.subr.mxu0 0.0
  %1373 = vmatpush2.msra.mxu0 0.0
  %1374 = vmatprep.subr.mxu0 0.0
  %1375 = vmatpush2.msra.mxu0 0.0
  %1376 = vmatprep.subr.mxu0 0.0
  %1377 = vmatpush2.msra.mxu0 0.0
  %1378 = vmatprep.subr.mxu0 0.0
  %1379 = vmatpush2.msra.mxu0 0.0
  %1380 = vmatprep.subr.mxu0 0.0
  %1381 = vmatpush2.msra.mxu0 0.0
  %1382 = vmatprep.subr.mxu0 0.0
  %1383 = vmatpush2.msra.mxu0 0.0
  %1384 = vmatprep.subr.mxu0 0.0
  %1385 = vmatpush2.msra.mxu0 0.0
  %1386 = vmatprep.subr.mxu0 0.0
  %1387 = vmatpush2.msra.mxu0 0.0
  %1388 = vmatprep.subr.mxu0 0.0
  %1389 = vmatpush2.msra.mxu0 0.0
  %1390 = vmatprep.subr.mxu0 0.0
  %1391 = vmatpush2.msra.mxu0 0.0
  %1392 = vmatprep.subr.mxu0 0.0
  %1393 = vmatpush2.msra.mxu0 0.0
  %1394 = vmatprep.subr.mxu0 0.0
  %1395 = vmatpush2.msra.mxu0 0.0
  %1396 = vmatprep.subr.mxu0 0.0
  %1397 = vmatpush2.msra.mxu0 0.0
  %1398 = vmatprep.subr.mxu0 0.0
  %1399 = vmatpush2.msra.mxu0 0.0
  %1400 = vmatprep.mubr.f32.mxu0 0.0
  %1401 = vmatmul.mubr.f32.gmra.mxu0 %v1260
  %v1402 = vpop.f32.mrf.mxu0
  %v1403 = vadd.f32 0.0, %v1402
  %v1404 = vpop.f32.mrf.mxu0
  %v1405 = vadd.f32 0.0, %v1404
  %1406 = vdwg.mxu0
  %v1407 = vadd.f32 %v1261, %v1332
  %v1408 = vadd.f32 %v1262, %v1334
  %v1409 = vadd.f32 %v1263, %v1403
  %v1410 = vadd.f32 %v1264, %v1405
  %v1411 = vxor.u32 %v1407, 2147483648
  %v1412 = vmul.f32 %v1411, 1.442695
  %v1413 = vpow.pop %v1412
  %v1414 = vadd.f32 %v1413, 1.0
  %v1415 = vrcp.pop %v1414
  %v1416 = vmul.f32 1.0, %v1415
  %v1417 = vxor.u32 %v1408, 2147483648
  %v1418 = vmul.f32 %v1417, 1.442695
  %v1419 = vpow.pop %v1418
  %v1420 = vadd.f32 %v1419, 1.0
  %v1421 = vrcp.pop %v1420
  %v1422 = vmul.f32 1.0, %v1421
  %v1423 = vtanh.pop %v1409
  %v1424 = vxor.u32 %v1410, 2147483648
  %v1425 = vmul.f32 %v1424, 1.442695
  %v1426 = vpow.pop %v1425
  %v1427 = vadd.f32 %v1426, 1.0
  %v1428 = vrcp.pop %v1427
  %v1429 = vmul.f32 1.0, %v1428
  %v1430 = vmul.f32 %v1422, %v1258
  %v1431 = vmul.f32 %v1416, %v1423
  %v1432 = vadd.f32 %v1430, %v1431
  %v1433 = vtanh.pop %v1432
  %v1434 = vmul.f32 %v1429, %v1433
  %v1435 = vld [vmem:[#allocation2 + $0x140] sm:$0xff]
  %v1436 = vld [vmem:[#allocation2 + $0x148] sm:$0xff]
  %v1437 = vld [vmem:[#allocation2 + $0x150] sm:$0xff]
  %v1438 = vld [vmem:[#allocation2 + $0x158] sm:$0xff]
  %1439 = vmatprep.subr.mxu0 %v740
  %1440 = vmatpush1.msra.mxu0 %v739
  %1441 = vmatprep.subr.mxu0 %v736
  %1442 = vmatpush1.msra.mxu0 %v735
  %1443 = vmatprep.subr.mxu0 %v732
  %1444 = vmatpush1.msra.mxu0 %v731
  %1445 = vmatprep.subr.mxu0 %v728
  %1446 = vmatpush1.msra.mxu0 %v727
  %1447 = vmatprep.subr.mxu0 %v724
  %1448 = vmatpush1.msra.mxu0 %v723
  %1449 = vmatprep.subr.mxu0 %v720
  %1450 = vmatpush1.msra.mxu0 %v719
  %1451 = vmatprep.subr.mxu0 %v716
  %1452 = vmatpush1.msra.mxu0 %v715
  %1453 = vmatprep.subr.mxu0 %v712
  %1454 = vmatpush1.msra.mxu0 %v711
  %1455 = vmatprep.subr.mxu0 %v708
  %1456 = vmatpush1.msra.mxu0 %v707
  %1457 = vmatprep.subr.mxu0 %v704
  %1458 = vmatpush1.msra.mxu0 %v703
  %1459 = vmatprep.subr.mxu0 %v700
  %1460 = vmatpush1.msra.mxu0 %v699
  %1461 = vmatprep.subr.mxu0 %v696
  %1462 = vmatpush1.msra.mxu0 %v695
  %1463 = vmatprep.subr.mxu0 %v692
  %1464 = vmatpush1.msra.mxu0 %v691
  %1465 = vmatprep.subr.mxu0 %v688
  %1466 = vmatpush1.msra.mxu0 %v687
  %1467 = vmatprep.subr.mxu0 %v684
  %1468 = vmatpush1.msra.mxu0 %v683
  %1469 = vmatprep.subr.mxu0 %v680
  %1470 = vmatpush1.msra.mxu0 %v679
  %1471 = vmatprep.subr.mxu0 0.0
  %1472 = vmatpush2.msra.mxu0 0.0
  %1473 = vmatprep.subr.mxu0 0.0
  %1474 = vmatpush2.msra.mxu0 0.0
  %1475 = vmatprep.subr.mxu0 0.0
  %1476 = vmatpush2.msra.mxu0 0.0
  %1477 = vmatprep.subr.mxu0 0.0
  %1478 = vmatpush2.msra.mxu0 0.0
  %1479 = vmatprep.subr.mxu0 0.0
  %1480 = vmatpush2.msra.mxu0 0.0
  %1481 = vmatprep.subr.mxu0 0.0
  %1482 = vmatpush2.msra.mxu0 0.0
  %1483 = vmatprep.subr.mxu0 0.0
  %1484 = vmatpush2.msra.mxu0 0.0
  %1485 = vmatprep.subr.mxu0 0.0
  %1486 = vmatpush2.msra.mxu0 0.0
  %1487 = vmatprep.subr.mxu0 0.0
  %1488 = vmatpush2.msra.mxu0 0.0
  %1489 = vmatprep.subr.mxu0 0.0
  %1490 = vmatpush2.msra.mxu0 0.0
  %1491 = vmatprep.subr.mxu0 0.0
  %1492 = vmatpush2.msra.mxu0 0.0
  %1493 = vmatprep.subr.mxu0 0.0
  %1494 = vmatpush2.msra.mxu0 0.0
  %1495 = vmatprep.subr.mxu0 0.0
  %1496 = vmatpush2.msra.mxu0 0.0
  %1497 = vmatprep.subr.mxu0 0.0
  %1498 = vmatpush2.msra.mxu0 0.0
  %1499 = vmatprep.subr.mxu0 0.0
  %1500 = vmatpush2.msra.mxu0 0.0
  %1501 = vmatprep.subr.mxu0 0.0
  %1502 = vmatpush2.msra.mxu0 0.0
  %1503 = vmatprep.mubr.f32.mxu0 0.0
  %1504 = vmatmul.mubr.f32.gmra.mxu0 %v1434
  %v1505 = vpop.f32.mrf.mxu0
  %v1506 = vadd.f32 0.0, %v1505
  %v1507 = vpop.f32.mrf.mxu0
  %v1508 = vadd.f32 0.0, %v1507
  %1509 = vdwg.mxu0
  %1510 = vmatprep.subr.mxu0 %v742
  %1511 = vmatpush1.msra.mxu0 %v741
  %1512 = vmatprep.subr.mxu0 %v738
  %1513 = vmatpush1.msra.mxu0 %v737
  %1514 = vmatprep.subr.mxu0 %v734
  %1515 = vmatpush1.msra.mxu0 %v733
  %1516 = vmatprep.subr.mxu0 %v730
  %1517 = vmatpush1.msra.mxu0 %v729
  %1518 = vmatprep.subr.mxu0 %v726
  %1519 = vmatpush1.msra.mxu0 %v725
  %1520 = vmatprep.subr.mxu0 %v722
  %1521 = vmatpush1.msra.mxu0 %v721
  %1522 = vmatprep.subr.mxu0 %v718
  %1523 = vmatpush1.msra.mxu0 %v717
  %1524 = vmatprep.subr.mxu0 %v714
  %1525 = vmatpush1.msra.mxu0 %v713
  %1526 = vmatprep.subr.mxu0 %v710
  %1527 = vmatpush1.msra.mxu0 %v709
  %1528 = vmatprep.subr.mxu0 %v706
  %1529 = vmatpush1.msra.mxu0 %v705
  %1530 = vmatprep.subr.mxu0 %v702
  %1531 = vmatpush1.msra.mxu0 %v701
  %1532 = vmatprep.subr.mxu0 %v698
  %1533 = vmatpush1.msra.mxu0 %v697
  %1534 = vmatprep.subr.mxu0 %v694
  %1535 = vmatpush1.msra.mxu0 %v693
  %1536 = vmatprep.subr.mxu0 %v690
  %1537 = vmatpush1.msra.mxu0 %v689
  %1538 = vmatprep.subr.mxu0 %v686
  %1539 = vmatpush1.msra.mxu0 %v685
  %1540 = vmatprep.subr.mxu0 %v682
  %1541 = vmatpush1.msra.mxu0 %v681
  %1542 = vmatprep.subr.mxu0 0.0
  %1543 = vmatpush2.msra.mxu0 0.0
  %1544 = vmatprep.subr.mxu0 0.0
  %1545 = vmatpush2.msra.mxu0 0.0
  %1546 = vmatprep.subr.mxu0 0.0
  %1547 = vmatpush2.msra.mxu0 0.0
  %1548 = vmatprep.subr.mxu0 0.0
  %1549 = vmatpush2.msra.mxu0 0.0
  %1550 = vmatprep.subr.mxu0 0.0
  %1551 = vmatpush2.msra.mxu0 0.0
  %1552 = vmatprep.subr.mxu0 0.0
  %1553 = vmatpush2.msra.mxu0 0.0
  %1554 = vmatprep.subr.mxu0 0.0
  %1555 = vmatpush2.msra.mxu0 0.0
  %1556 = vmatprep.subr.mxu0 0.0
  %1557 = vmatpush2.msra.mxu0 0.0
  %1558 = vmatprep.subr.mxu0 0.0
  %1559 = vmatpush2.msra.mxu0 0.0
  %1560 = vmatprep.subr.mxu0 0.0
  %1561 = vmatpush2.msra.mxu0 0.0
  %1562 = vmatprep.subr.mxu0 0.0
  %1563 = vmatpush2.msra.mxu0 0.0
  %1564 = vmatprep.subr.mxu0 0.0
  %1565 = vmatpush2.msra.mxu0 0.0
  %1566 = vmatprep.subr.mxu0 0.0
  %1567 = vmatpush2.msra.mxu0 0.0
  %1568 = vmatprep.subr.mxu0 0.0
  %1569 = vmatpush2.msra.mxu0 0.0
  %1570 = vmatprep.subr.mxu0 0.0
  %1571 = vmatpush2.msra.mxu0 0.0
  %1572 = vmatprep.subr.mxu0 0.0
  %1573 = vmatpush2.msra.mxu0 0.0
  %1574 = vmatprep.mubr.f32.mxu0 0.0
  %1575 = vmatmul.mubr.f32.gmra.mxu0 %v1434
  %v1576 = vpop.f32.mrf.mxu0
  %v1577 = vadd.f32 0.0, %v1576
  %v1578 = vpop.f32.mrf.mxu0
  %v1579 = vadd.f32 0.0, %v1578
  %1580 = vdwg.mxu0
  %v1581 = vadd.f32 %v1435, %v1506
  %v1582 = vadd.f32 %v1436, %v1508
  %v1583 = vadd.f32 %v1437, %v1577
  %v1584 = vadd.f32 %v1438, %v1579
  %v1585 = vxor.u32 %v1581, 2147483648
  %v1586 = vmul.f32 %v1585, 1.442695
  %v1587 = vpow.pop %v1586
  %v1588 = vadd.f32 %v1587, 1.0
  %v1589 = vrcp.pop %v1588
  %v1590 = vmul.f32 1.0, %v1589
  %v1591 = vxor.u32 %v1582, 2147483648
  %v1592 = vmul.f32 %v1591, 1.442695
  %v1593 = vpow.pop %v1592
  %v1594 = vadd.f32 %v1593, 1.0
  %v1595 = vrcp.pop %v1594
  %v1596 = vmul.f32 1.0, %v1595
  %v1597 = vtanh.pop %v1583
  %v1598 = vxor.u32 %v1584, 2147483648
  %v1599 = vmul.f32 %v1598, 1.442695
  %v1600 = vpow.pop %v1599
  %v1601 = vadd.f32 %v1600, 1.0
  %v1602 = vrcp.pop %v1601
  %v1603 = vmul.f32 1.0, %v1602
  %v1604 = vmul.f32 %v1596, %v1432
  %v1605 = vmul.f32 %v1590, %v1597
  %v1606 = vadd.f32 %v1604, %v1605
  %v1607 = vtanh.pop %v1606
  %v1608 = vmul.f32 %v1603, %v1607
  %v1609 = vld [vmem:[#allocation2 + $0x180] sm:$0xff]
  %v1610 = vld [vmem:[#allocation2 + $0x188] sm:$0xff]
  %v1611 = vld [vmem:[#allocation2 + $0x190] sm:$0xff]
  %v1612 = vld [vmem:[#allocation2 + $0x198] sm:$0xff]
  %1613 = vmatprep.subr.mxu0 %v740
  %1614 = vmatpush1.msra.mxu0 %v739
  %1615 = vmatprep.subr.mxu0 %v736
  %1616 = vmatpush1.msra.mxu0 %v735
  %1617 = vmatprep.subr.mxu0 %v732
  %1618 = vmatpush1.msra.mxu0 %v731
  %1619 = vmatprep.subr.mxu0 %v728
  %1620 = vmatpush1.msra.mxu0 %v727
  %1621 = vmatprep.subr.mxu0 %v724
  %1622 = vmatpush1.msra.mxu0 %v723
  %1623 = vmatprep.subr.mxu0 %v720
  %1624 = vmatpush1.msra.mxu0 %v719
  %1625 = vmatprep.subr.mxu0 %v716
  %1626 = vmatpush1.msra.mxu0 %v715
  %1627 = vmatprep.subr.mxu0 %v712
  %1628 = vmatpush1.msra.mxu0 %v711
  %1629 = vmatprep.subr.mxu0 %v708
  %1630 = vmatpush1.msra.mxu0 %v707
  %1631 = vmatprep.subr.mxu0 %v704
  %1632 = vmatpush1.msra.mxu0 %v703
  %1633 = vmatprep.subr.mxu0 %v700
  %1634 = vmatpush1.msra.mxu0 %v699
  %1635 = vmatprep.subr.mxu0 %v696
  %1636 = vmatpush1.msra.mxu0 %v695
  %1637 = vmatprep.subr.mxu0 %v692
  %1638 = vmatpush1.msra.mxu0 %v691
  %1639 = vmatprep.subr.mxu0 %v688
  %1640 = vmatpush1.msra.mxu0 %v687
  %1641 = vmatprep.subr.mxu0 %v684
  %1642 = vmatpush1.msra.mxu0 %v683
  %1643 = vmatprep.subr.mxu0 %v680
  %1644 = vmatpush1.msra.mxu0 %v679
  %1645 = vmatprep.subr.mxu0 0.0
  %1646 = vmatpush2.msra.mxu0 0.0
  %1647 = vmatprep.subr.mxu0 0.0
  %1648 = vmatpush2.msra.mxu0 0.0
  %1649 = vmatprep.subr.mxu0 0.0
  %1650 = vmatpush2.msra.mxu0 0.0
  %1651 = vmatprep.subr.mxu0 0.0
  %1652 = vmatpush2.msra.mxu0 0.0
  %1653 = vmatprep.subr.mxu0 0.0
  %1654 = vmatpush2.msra.mxu0 0.0
  %1655 = vmatprep.subr.mxu0 0.0
  %1656 = vmatpush2.msra.mxu0 0.0
  %1657 = vmatprep.subr.mxu0 0.0
  %1658 = vmatpush2.msra.mxu0 0.0
  %1659 = vmatprep.subr.mxu0 0.0
  %1660 = vmatpush2.msra.mxu0 0.0
  %1661 = vmatprep.subr.mxu0 0.0
  %1662 = vmatpush2.msra.mxu0 0.0
  %1663 = vmatprep.subr.mxu0 0.0
  %1664 = vmatpush2.msra.mxu0 0.0
  %1665 = vmatprep.subr.mxu0 0.0
  %1666 = vmatpush2.msra.mxu0 0.0
  %1667 = vmatprep.subr.mxu0 0.0
  %1668 = vmatpush2.msra.mxu0 0.0
  %1669 = vmatprep.subr.mxu0 0.0
  %1670 = vmatpush2.msra.mxu0 0.0
  %1671 = vmatprep.subr.mxu0 0.0
  %1672 = vmatpush2.msra.mxu0 0.0
  %1673 = vmatprep.subr.mxu0 0.0
  %1674 = vmatpush2.msra.mxu0 0.0
  %1675 = vmatprep.subr.mxu0 0.0
  %1676 = vmatpush2.msra.mxu0 0.0
  %1677 = vmatprep.mubr.f32.mxu0 0.0
  %1678 = vmatmul.mubr.f32.gmra.mxu0 %v1608
  %v1679 = vpop.f32.mrf.mxu0
  %v1680 = vadd.f32 0.0, %v1679
  %v1681 = vpop.f32.mrf.mxu0
  %v1682 = vadd.f32 0.0, %v1681
  %1683 = vdwg.mxu0
  %1684 = vmatprep.subr.mxu0 %v742
  %1685 = vmatpush1.msra.mxu0 %v741
  %1686 = vmatprep.subr.mxu0 %v738
  %1687 = vmatpush1.msra.mxu0 %v737
  %1688 = vmatprep.subr.mxu0 %v734
  %1689 = vmatpush1.msra.mxu0 %v733
  %1690 = vmatprep.subr.mxu0 %v730
  %1691 = vmatpush1.msra.mxu0 %v729
  %1692 = vmatprep.subr.mxu0 %v726
  %1693 = vmatpush1.msra.mxu0 %v725
  %1694 = vmatprep.subr.mxu0 %v722
  %1695 = vmatpush1.msra.mxu0 %v721
  %1696 = vmatprep.subr.mxu0 %v718
  %1697 = vmatpush1.msra.mxu0 %v717
  %1698 = vmatprep.subr.mxu0 %v714
  %1699 = vmatpush1.msra.mxu0 %v713
  %1700 = vmatprep.subr.mxu0 %v710
  %1701 = vmatpush1.msra.mxu0 %v709
  %1702 = vmatprep.subr.mxu0 %v706
  %1703 = vmatpush1.msra.mxu0 %v705
  %1704 = vmatprep.subr.mxu0 %v702
  %1705 = vmatpush1.msra.mxu0 %v701
  %1706 = vmatprep.subr.mxu0 %v698
  %1707 = vmatpush1.msra.mxu0 %v697
  %1708 = vmatprep.subr.mxu0 %v694
  %1709 = vmatpush1.msra.mxu0 %v693
  %1710 = vmatprep.subr.mxu0 %v690
  %1711 = vmatpush1.msra.mxu0 %v689
  %1712 = vmatprep.subr.mxu0 %v686
  %1713 = vmatpush1.msra.mxu0 %v685
  %1714 = vmatprep.subr.mxu0 %v682
  %1715 = vmatpush1.msra.mxu0 %v681
  %1716 = vmatprep.subr.mxu0 0.0
  %1717 = vmatpush2.msra.mxu0 0.0
  %1718 = vmatprep.subr.mxu0 0.0
  %1719 = vmatpush2.msra.mxu0 0.0
  %1720 = vmatprep.subr.mxu0 0.0
  %1721 = vmatpush2.msra.mxu0 0.0
  %1722 = vmatprep.subr.mxu0 0.0
  %1723 = vmatpush2.msra.mxu0 0.0
  %1724 = vmatprep.subr.mxu0 0.0
  %1725 = vmatpush2.msra.mxu0 0.0
  %1726 = vmatprep.subr.mxu0 0.0
  %1727 = vmatpush2.msra.mxu0 0.0
  %1728 = vmatprep.subr.mxu0 0.0
  %1729 = vmatpush2.msra.mxu0 0.0
  %1730 = vmatprep.subr.mxu0 0.0
  %1731 = vmatpush2.msra.mxu0 0.0
  %1732 = vmatprep.subr.mxu0 0.0
  %1733 = vmatpush2.msra.mxu0 0.0
  %1734 = vmatprep.subr.mxu0 0.0
  %1735 = vmatpush2.msra.mxu0 0.0
  %1736 = vmatprep.subr.mxu0 0.0
  %1737 = vmatpush2.msra.mxu0 0.0
  %1738 = vmatprep.subr.mxu0 0.0
  %1739 = vmatpush2.msra.mxu0 0.0
  %1740 = vmatprep.subr.mxu0 0.0
  %1741 = vmatpush2.msra.mxu0 0.0
  %1742 = vmatprep.subr.mxu0 0.0
  %1743 = vmatpush2.msra.mxu0 0.0
  %1744 = vmatprep.subr.mxu0 0.0
  %1745 = vmatpush2.msra.mxu0 0.0
  %1746 = vmatprep.subr.mxu0 0.0
  %1747 = vmatpush2.msra.mxu0 0.0
  %1748 = vmatprep.mubr.f32.mxu0 0.0
  %1749 = vmatmul.mubr.f32.gmra.mxu0 %v1608
  %v1750 = vpop.f32.mrf.mxu0
  %v1751 = vadd.f32 0.0, %v1750
  %v1752 = vpop.f32.mrf.mxu0
  %v1753 = vadd.f32 0.0, %v1752
  %1754 = vdwg.mxu0
  %v1755 = vadd.f32 %v1609, %v1680
  %v1756 = vadd.f32 %v1610, %v1682
  %v1757 = vadd.f32 %v1611, %v1751
  %v1758 = vadd.f32 %v1612, %v1753
  %v1759 = vxor.u32 %v1755, 2147483648
  %v1760 = vmul.f32 %v1759, 1.442695
  %v1761 = vpow.pop %v1760
  %v1762 = vadd.f32 %v1761, 1.0
  %v1763 = vrcp.pop %v1762
  %v1764 = vmul.f32 1.0, %v1763
  %v1765 = vxor.u32 %v1756, 2147483648
  %v1766 = vmul.f32 %v1765, 1.442695
  %v1767 = vpow.pop %v1766
  %v1768 = vadd.f32 %v1767, 1.0
  %v1769 = vrcp.pop %v1768
  %v1770 = vmul.f32 1.0, %v1769
  %v1771 = vtanh.pop %v1757
  %v1772 = vxor.u32 %v1758, 2147483648
  %v1773 = vmul.f32 %v1772, 1.442695
  %v1774 = vpow.pop %v1773
  %v1775 = vadd.f32 %v1774, 1.0
  %v1776 = vrcp.pop %v1775
  %v1777 = vmul.f32 1.0, %v1776
  %v1778 = vmul.f32 %v1770, %v1606
  %v1779 = vmul.f32 %v1764, %v1771
  %v1780 = vadd.f32 %v1778, %v1779
  %v1781 = vtanh.pop %v1780
  %v1782 = vmul.f32 %v1777, %v1781
  %v1783 = vld [vmem:[#allocation2 + $0x1c0] sm:$0xff]
  %v1784 = vld [vmem:[#allocation2 + $0x1c8] sm:$0xff]
  %v1785 = vld [vmem:[#allocation2 + $0x1d0] sm:$0xff]
  %v1786 = vld [vmem:[#allocation2 + $0x1d8] sm:$0xff]
  %1787 = vmatprep.subr.mxu0 %v740
  %1788 = vmatpush1.msra.mxu0 %v739
  %1789 = vmatprep.subr.mxu0 %v736
  %1790 = vmatpush1.msra.mxu0 %v735
  %1791 = vmatprep.subr.mxu0 %v732
  %1792 = vmatpush1.msra.mxu0 %v731
  %1793 = vmatprep.subr.mxu0 %v728
  %1794 = vmatpush1.msra.mxu0 %v727
  %1795 = vmatprep.subr.mxu0 %v724
  %1796 = vmatpush1.msra.mxu0 %v723
  %1797 = vmatprep.subr.mxu0 %v720
  %1798 = vmatpush1.msra.mxu0 %v719
  %1799 = vmatprep.subr.mxu0 %v716
  %1800 = vmatpush1.msra.mxu0 %v715
  %1801 = vmatprep.subr.mxu0 %v712
  %1802 = vmatpush1.msra.mxu0 %v711
  %1803 = vmatprep.subr.mxu0 %v708
  %1804 = vmatpush1.msra.mxu0 %v707
  %1805 = vmatprep.subr.mxu0 %v704
  %1806 = vmatpush1.msra.mxu0 %v703
  %1807 = vmatprep.subr.mxu0 %v700
  %1808 = vmatpush1.msra.mxu0 %v699
  %1809 = vmatprep.subr.mxu0 %v696
  %1810 = vmatpush1.msra.mxu0 %v695
  %1811 = vmatprep.subr.mxu0 %v692
  %1812 = vmatpush1.msra.mxu0 %v691
  %1813 = vmatprep.subr.mxu0 %v688
  %1814 = vmatpush1.msra.mxu0 %v687
  %1815 = vmatprep.subr.mxu0 %v684
  %1816 = vmatpush1.msra.mxu0 %v683
  %1817 = vmatprep.subr.mxu0 %v680
  %1818 = vmatpush1.msra.mxu0 %v679
  %1819 = vmatprep.subr.mxu0 0.0
  %1820 = vmatpush2.msra.mxu0 0.0
  %1821 = vmatprep.subr.mxu0 0.0
  %1822 = vmatpush2.msra.mxu0 0.0
  %1823 = vmatprep.subr.mxu0 0.0
  %1824 = vmatpush2.msra.mxu0 0.0
  %1825 = vmatprep.subr.mxu0 0.0
  %1826 = vmatpush2.msra.mxu0 0.0
  %1827 = vmatprep.subr.mxu0 0.0
  %1828 = vmatpush2.msra.mxu0 0.0
  %1829 = vmatprep.subr.mxu0 0.0
  %1830 = vmatpush2.msra.mxu0 0.0
  %1831 = vmatprep.subr.mxu0 0.0
  %1832 = vmatpush2.msra.mxu0 0.0
  %1833 = vmatprep.subr.mxu0 0.0
  %1834 = vmatpush2.msra.mxu0 0.0
  %1835 = vmatprep.subr.mxu0 0.0
  %1836 = vmatpush2.msra.mxu0 0.0
  %1837 = vmatprep.subr.mxu0 0.0
  %1838 = vmatpush2.msra.mxu0 0.0
  %1839 = vmatprep.subr.mxu0 0.0
  %1840 = vmatpush2.msra.mxu0 0.0
  %1841 = vmatprep.subr.mxu0 0.0
  %1842 = vmatpush2.msra.mxu0 0.0
  %1843 = vmatprep.subr.mxu0 0.0
  %1844 = vmatpush2.msra.mxu0 0.0
  %1845 = vmatprep.subr.mxu0 0.0
  %1846 = vmatpush2.msra.mxu0 0.0
  %1847 = vmatprep.subr.mxu0 0.0
  %1848 = vmatpush2.msra.mxu0 0.0
  %1849 = vmatprep.subr.mxu0 0.0
  %1850 = vmatpush2.msra.mxu0 0.0
  %1851 = vmatprep.mubr.f32.mxu0 0.0
  %1852 = vmatmul.mubr.f32.gmra.mxu0 %v1782
  %v1853 = vpop.f32.mrf.mxu0
  %v1854 = vadd.f32 0.0, %v1853
  %v1855 = vpop.f32.mrf.mxu0
  %v1856 = vadd.f32 0.0, %v1855
  %1857 = vdwg.mxu0
  %1858 = vmatprep.subr.mxu0 %v742
  %1859 = vmatpush1.msra.mxu0 %v741
  %1860 = vmatprep.subr.mxu0 %v738
  %1861 = vmatpush1.msra.mxu0 %v737
  %1862 = vmatprep.subr.mxu0 %v734
  %1863 = vmatpush1.msra.mxu0 %v733
  %1864 = vmatprep.subr.mxu0 %v730
  %1865 = vmatpush1.msra.mxu0 %v729
  %1866 = vmatprep.subr.mxu0 %v726
  %1867 = vmatpush1.msra.mxu0 %v725
  %1868 = vmatprep.subr.mxu0 %v722
  %1869 = vmatpush1.msra.mxu0 %v721
  %1870 = vmatprep.subr.mxu0 %v718
  %1871 = vmatpush1.msra.mxu0 %v717
  %1872 = vmatprep.subr.mxu0 %v714
  %1873 = vmatpush1.msra.mxu0 %v713
  %1874 = vmatprep.subr.mxu0 %v710
  %1875 = vmatpush1.msra.mxu0 %v709
  %1876 = vmatprep.subr.mxu0 %v706
  %1877 = vmatpush1.msra.mxu0 %v705
  %1878 = vmatprep.subr.mxu0 %v702
  %1879 = vmatpush1.msra.mxu0 %v701
  %1880 = vmatprep.subr.mxu0 %v698
  %1881 = vmatpush1.msra.mxu0 %v697
  %1882 = vmatprep.subr.mxu0 %v694
  %1883 = vmatpush1.msra.mxu0 %v693
  %1884 = vmatprep.subr.mxu0 %v690
  %1885 = vmatpush1.msra.mxu0 %v689
  %1886 = vmatprep.subr.mxu0 %v686
  %1887 = vmatpush1.msra.mxu0 %v685
  %1888 = vmatprep.subr.mxu0 %v682
  %1889 = vmatpush1.msra.mxu0 %v681
  %1890 = vmatprep.subr.mxu0 0.0
  %1891 = vmatpush2.msra.mxu0 0.0
  %1892 = vmatprep.subr.mxu0 0.0
  %1893 = vmatpush2.msra.mxu0 0.0
  %1894 = vmatprep.subr.mxu0 0.0
  %1895 = vmatpush2.msra.mxu0 0.0
  %1896 = vmatprep.subr.mxu0 0.0
  %1897 = vmatpush2.msra.mxu0 0.0
  %1898 = vmatprep.subr.mxu0 0.0
  %1899 = vmatpush2.msra.mxu0 0.0
  %1900 = vmatprep.subr.mxu0 0.0
  %1901 = vmatpush2.msra.mxu0 0.0
  %1902 = vmatprep.subr.mxu0 0.0
  %1903 = vmatpush2.msra.mxu0 0.0
  %1904 = vmatprep.subr.mxu0 0.0
  %1905 = vmatpush2.msra.mxu0 0.0
  %1906 = vmatprep.subr.mxu0 0.0
  %1907 = vmatpush2.msra.mxu0 0.0
  %1908 = vmatprep.subr.mxu0 0.0
  %1909 = vmatpush2.msra.mxu0 0.0
  %1910 = vmatprep.subr.mxu0 0.0
  %1911 = vmatpush2.msra.mxu0 0.0
  %1912 = vmatprep.subr.mxu0 0.0
  %1913 = vmatpush2.msra.mxu0 0.0
  %1914 = vmatprep.subr.mxu0 0.0
  %1915 = vmatpush2.msra.mxu0 0.0
  %1916 = vmatprep.subr.mxu0 0.0
  %1917 = vmatpush2.msra.mxu0 0.0
  %1918 = vmatprep.subr.mxu0 0.0
  %1919 = vmatpush2.msra.mxu0 0.0
  %1920 = vmatprep.subr.mxu0 0.0
  %1921 = vmatpush2.msra.mxu0 0.0
  %1922 = vmatprep.mubr.f32.mxu0 0.0
  %1923 = vmatmul.mubr.f32.gmra.mxu0 %v1782
  %v1924 = vpop.f32.mrf.mxu0
  %v1925 = vadd.f32 0.0, %v1924
  %v1926 = vpop.f32.mrf.mxu0
  %v1927 = vadd.f32 0.0, %v1926
  %1928 = vdwg.mxu0
  %v1929 = vadd.f32 %v1783, %v1854
  %v1930 = vadd.f32 %v1784, %v1856
  %v1931 = vadd.f32 %v1785, %v1925
  %v1932 = vadd.f32 %v1786, %v1927
  %v1933 = vxor.u32 %v1929, 2147483648
  %v1934 = vmul.f32 %v1933, 1.442695
  %v1935 = vpow.pop %v1934
  %v1936 = vadd.f32 %v1935, 1.0
  %v1937 = vrcp.pop %v1936
  %v1938 = vmul.f32 1.0, %v1937
  %v1939 = vxor.u32 %v1930, 2147483648
  %v1940 = vmul.f32 %v1939, 1.442695
  %v1941 = vpow.pop %v1940
  %v1942 = vadd.f32 %v1941, 1.0
  %v1943 = vrcp.pop %v1942
  %v1944 = vmul.f32 1.0, %v1943
  %v1945 = vtanh.pop %v1931
  %v1946 = vxor.u32 %v1932, 2147483648
  %v1947 = vmul.f32 %v1946, 1.442695
  %v1948 = vpow.pop %v1947
  %v1949 = vadd.f32 %v1948, 1.0
  %v1950 = vrcp.pop %v1949
  %v1951 = vmul.f32 1.0, %v1950
  %v1952 = vmul.f32 %v1944, %v1780
  %v1953 = vmul.f32 %v1938, %v1945
  %v1954 = vadd.f32 %v1952, %v1953
  %v1955 = vtanh.pop %v1954
  %v1956 = vmul.f32 %v1951, %v1955
  %v1957 = vld [vmem:[#allocation2 + $0x1e0] sm:$0xff]
  %v1958 = vld [vmem:[#allocation2 + $0x1f0] sm:$0xff]
  %v1959 = vld [vmem:[#allocation2 + $0x1f8] sm:$0xff]
  %v1960 = vxor.u32 %v1957, 2147483648
  %v1961 = vmul.f32 %v1960, 1.442695
  %v1962 = vpow.pop %v1961
  %v1963 = vadd.f32 %v1962, 1.0
  %v1964 = vrcp.pop %v1963
  %v1965 = vmul.f32 1.0, %v1964
  %v1966 = vtanh.pop %v1958
  %v1967 = vxor.u32 %v1959, 2147483648
  %v1968 = vmul.f32 %v1967, 1.442695
  %v1969 = vpow.pop %v1968
  %v1970 = vadd.f32 %v1969, 1.0
  %v1971 = vrcp.pop %v1970
  %v1972 = vmul.f32 1.0, %v1971
  %v1973 = vmul.f32 %v1965, %v1966
  %v1974 = vtanh.pop %v1973
  %v1975 = vmul.f32 %v1972, %v1974
  %v1976 = vld [vmem:[#allocation2 + $0x1a0] sm:$0xff]
  %v1977 = vld [vmem:[#allocation2 + $0x1a8] sm:$0xff]
  %v1978 = vld [vmem:[#allocation2 + $0x1b0] sm:$0xff]
  %v1979 = vld [vmem:[#allocation2 + $0x1b8] sm:$0xff]
  %v1980 = vld [vmem:[%s4] sm:$0xff]
  %v1981 = vld [vmem:[%s4 + $0x8] sm:$0xff]
  %v1982 = vld [vmem:[%s4 + $0x10] sm:$0xff]
  %v1983 = vld [vmem:[%s4 + $0x18] sm:$0xff]
  %v1984 = vld [vmem:[%s4 + $0x20] sm:$0xff]
  %v1985 = vld [vmem:[%s4 + $0x28] sm:$0xff]
  %v1986 = vld [vmem:[%s4 + $0x30] sm:$0xff]
  %v1987 = vld [vmem:[%s4 + $0x38] sm:$0xff]
  %v1988 = vld [vmem:[%s4 + $0x40] sm:$0xff]
  %v1989 = vld [vmem:[%s4 + $0x48] sm:$0xff]
  %v1990 = vld [vmem:[%s4 + $0x50] sm:$0xff]
  %v1991 = vld [vmem:[%s4 + $0x58] sm:$0xff]
  %v1992 = vld [vmem:[%s4 + $0x60] sm:$0xff]
  %v1993 = vld [vmem:[%s4 + $0x68] sm:$0xff]
  %v1994 = vld [vmem:[%s4 + $0x70] sm:$0xff]
  %v1995 = vld [vmem:[%s4 + $0x78] sm:$0xff]
  %v1996 = vld [vmem:[%s4 + $0x80] sm:$0xff]
  %v1997 = vld [vmem:[%s4 + $0x88] sm:$0xff]
  %v1998 = vld [vmem:[%s4 + $0x90] sm:$0xff]
  %v1999 = vld [vmem:[%s4 + $0x98] sm:$0xff]
  %v2000 = vld [vmem:[%s4 + $0xa0] sm:$0xff]
  %v2001 = vld [vmem:[%s4 + $0xa8] sm:$0xff]
  %v2002 = vld [vmem:[%s4 + $0xb0] sm:$0xff]
  %v2003 = vld [vmem:[%s4 + $0xb8] sm:$0xff]
  %v2004 = vld [vmem:[%s4 + $0xc0] sm:$0xff]
  %v2005 = vld [vmem:[%s4 + $0xc8] sm:$0xff]
  %v2006 = vld [vmem:[%s4 + $0xd0] sm:$0xff]
  %v2007 = vld [vmem:[%s4 + $0xd8] sm:$0xff]
  %v2008 = vld [vmem:[%s4 + $0xe0] sm:$0xff]
  %v2009 = vld [vmem:[%s4 + $0xe8] sm:$0xff]
  %v2010 = vld [vmem:[%s4 + $0xf0] sm:$0xff]
  %v2011 = vld [vmem:[%s4 + $0xf8] sm:$0xff]
  %v2012 = vld [vmem:[%s4 + $0x100] sm:$0xff]
  %v2013 = vld [vmem:[%s4 + $0x108] sm:$0xff]
  %v2014 = vld [vmem:[%s4 + $0x110] sm:$0xff]
  %v2015 = vld [vmem:[%s4 + $0x118] sm:$0xff]
  %v2016 = vld [vmem:[%s4 + $0x120] sm:$0xff]
  %v2017 = vld [vmem:[%s4 + $0x128] sm:$0xff]
  %v2018 = vld [vmem:[%s4 + $0x130] sm:$0xff]
  %v2019 = vld [vmem:[%s4 + $0x138] sm:$0xff]
  %v2020 = vld [vmem:[%s4 + $0x140] sm:$0xff]
  %v2021 = vld [vmem:[%s4 + $0x148] sm:$0xff]
  %v2022 = vld [vmem:[%s4 + $0x150] sm:$0xff]
  %v2023 = vld [vmem:[%s4 + $0x158] sm:$0xff]
  %v2024 = vld [vmem:[%s4 + $0x160] sm:$0xff]
  %v2025 = vld [vmem:[%s4 + $0x168] sm:$0xff]
  %v2026 = vld [vmem:[%s4 + $0x170] sm:$0xff]
  %v2027 = vld [vmem:[%s4 + $0x178] sm:$0xff]
  %v2028 = vld [vmem:[%s4 + $0x180] sm:$0xff]
  %v2029 = vld [vmem:[%s4 + $0x188] sm:$0xff]
  %v2030 = vld [vmem:[%s4 + $0x190] sm:$0xff]
  %v2031 = vld [vmem:[%s4 + $0x198] sm:$0xff]
  %v2032 = vld [vmem:[%s4 + $0x1a0] sm:$0xff]
  %v2033 = vld [vmem:[%s4 + $0x1a8] sm:$0xff]
  %v2034 = vld [vmem:[%s4 + $0x1b0] sm:$0xff]
  %v2035 = vld [vmem:[%s4 + $0x1b8] sm:$0xff]
  %v2036 = vld [vmem:[%s4 + $0x1c0] sm:$0xff]
  %v2037 = vld [vmem:[%s4 + $0x1c8] sm:$0xff]
  %v2038 = vld [vmem:[%s4 + $0x1d0] sm:$0xff]
  %v2039 = vld [vmem:[%s4 + $0x1d8] sm:$0xff]
  %v2040 = vld [vmem:[%s4 + $0x1e0] sm:$0xff]
  %v2041 = vld [vmem:[%s4 + $0x1e8] sm:$0xff]
  %v2042 = vld [vmem:[%s4 + $0x1f0] sm:$0xff]
  %v2043 = vld [vmem:[%s4 + $0x1f8] sm:$0xff]
  %2044 = vmatprep.subr.mxu0 %v2041
  %2045 = vmatpush1.msra.mxu0 %v2040
  %2046 = vmatprep.subr.mxu0 %v2037
  %2047 = vmatpush1.msra.mxu0 %v2036
  %2048 = vmatprep.subr.mxu0 %v2033
  %2049 = vmatpush1.msra.mxu0 %v2032
  %2050 = vmatprep.subr.mxu0 %v2029
  %2051 = vmatpush1.msra.mxu0 %v2028
  %2052 = vmatprep.subr.mxu0 %v2025
  %2053 = vmatpush1.msra.mxu0 %v2024
  %2054 = vmatprep.subr.mxu0 %v2021
  %2055 = vmatpush1.msra.mxu0 %v2020
  %2056 = vmatprep.subr.mxu0 %v2017
  %2057 = vmatpush1.msra.mxu0 %v2016
  %2058 = vmatprep.subr.mxu0 %v2013
  %2059 = vmatpush1.msra.mxu0 %v2012
  %2060 = vmatprep.subr.mxu0 %v2009
  %2061 = vmatpush1.msra.mxu0 %v2008
  %2062 = vmatprep.subr.mxu0 %v2005
  %2063 = vmatpush1.msra.mxu0 %v2004
  %2064 = vmatprep.subr.mxu0 %v2001
  %2065 = vmatpush1.msra.mxu0 %v2000
  %2066 = vmatprep.subr.mxu0 %v1997
  %2067 = vmatpush1.msra.mxu0 %v1996
  %2068 = vmatprep.subr.mxu0 %v1993
  %2069 = vmatpush1.msra.mxu0 %v1992
  %2070 = vmatprep.subr.mxu0 %v1989
  %2071 = vmatpush1.msra.mxu0 %v1988
  %2072 = vmatprep.subr.mxu0 %v1985
  %2073 = vmatpush1.msra.mxu0 %v1984
  %2074 = vmatprep.subr.mxu0 %v1981
  %2075 = vmatpush1.msra.mxu0 %v1980
  %2076 = vmatprep.subr.mxu0 0.0
  %2077 = vmatpush2.msra.mxu0 0.0
  %2078 = vmatprep.subr.mxu0 0.0
  %2079 = vmatpush2.msra.mxu0 0.0
  %2080 = vmatprep.subr.mxu0 0.0
  %2081 = vmatpush2.msra.mxu0 0.0
  %2082 = vmatprep.subr.mxu0 0.0
  %2083 = vmatpush2.msra.mxu0 0.0
  %2084 = vmatprep.subr.mxu0 0.0
  %2085 = vmatpush2.msra.mxu0 0.0
  %2086 = vmatprep.subr.mxu0 0.0
  %2087 = vmatpush2.msra.mxu0 0.0
  %2088 = vmatprep.subr.mxu0 0.0
  %2089 = vmatpush2.msra.mxu0 0.0
  %2090 = vmatprep.subr.mxu0 0.0
  %2091 = vmatpush2.msra.mxu0 0.0
  %2092 = vmatprep.subr.mxu0 0.0
  %2093 = vmatpush2.msra.mxu0 0.0
  %2094 = vmatprep.subr.mxu0 0.0
  %2095 = vmatpush2.msra.mxu0 0.0
  %2096 = vmatprep.subr.mxu0 0.0
  %2097 = vmatpush2.msra.mxu0 0.0
  %2098 = vmatprep.subr.mxu0 0.0
  %2099 = vmatpush2.msra.mxu0 0.0
  %2100 = vmatprep.subr.mxu0 0.0
  %2101 = vmatpush2.msra.mxu0 0.0
  %2102 = vmatprep.subr.mxu0 0.0
  %2103 = vmatpush2.msra.mxu0 0.0
  %2104 = vmatprep.subr.mxu0 0.0
  %2105 = vmatpush2.msra.mxu0 0.0
  %2106 = vmatprep.subr.mxu0 0.0
  %2107 = vmatpush2.msra.mxu0 0.0
  %2108 = vmatprep.mubr.f32.mxu0 0.0
  %2109 = vmatmul.mubr.f32.gmra.mxu0 %v1975
  %v2110 = vpop.f32.mrf.mxu0
  %v2111 = vadd.f32 0.0, %v2110
  %v2112 = vpop.f32.mrf.mxu0
  %v2113 = vadd.f32 0.0, %v2112
  %2114 = vdwg.mxu0
  %2115 = vmatprep.subr.mxu0 %v2043
  %2116 = vmatpush1.msra.mxu0 %v2042
  %2117 = vmatprep.subr.mxu0 %v2039
  %2118 = vmatpush1.msra.mxu0 %v2038
  %2119 = vmatprep.subr.mxu0 %v2035
  %2120 = vmatpush1.msra.mxu0 %v2034
  %2121 = vmatprep.subr.mxu0 %v2031
  %2122 = vmatpush1.msra.mxu0 %v2030
  %2123 = vmatprep.subr.mxu0 %v2027
  %2124 = vmatpush1.msra.mxu0 %v2026
  %2125 = vmatprep.subr.mxu0 %v2023
  %2126 = vmatpush1.msra.mxu0 %v2022
  %2127 = vmatprep.subr.mxu0 %v2019
  %2128 = vmatpush1.msra.mxu0 %v2018
  %2129 = vmatprep.subr.mxu0 %v2015
  %2130 = vmatpush1.msra.mxu0 %v2014
  %2131 = vmatprep.subr.mxu0 %v2011
  %2132 = vmatpush1.msra.mxu0 %v2010
  %2133 = vmatprep.subr.mxu0 %v2007
  %2134 = vmatpush1.msra.mxu0 %v2006
  %2135 = vmatprep.subr.mxu0 %v2003
  %2136 = vmatpush1.msra.mxu0 %v2002
  %2137 = vmatprep.subr.mxu0 %v1999
  %2138 = vmatpush1.msra.mxu0 %v1998
  %2139 = vmatprep.subr.mxu0 %v1995
  %2140 = vmatpush1.msra.mxu0 %v1994
  %2141 = vmatprep.subr.mxu0 %v1991
  %2142 = vmatpush1.msra.mxu0 %v1990
  %2143 = vmatprep.subr.mxu0 %v1987
  %2144 = vmatpush1.msra.mxu0 %v1986
  %2145 = vmatprep.subr.mxu0 %v1983
  %2146 = vmatpush1.msra.mxu0 %v1982
  %2147 = vmatprep.subr.mxu0 0.0
  %2148 = vmatpush2.msra.mxu0 0.0
  %2149 = vmatprep.subr.mxu0 0.0
  %2150 = vmatpush2.msra.mxu0 0.0
  %2151 = vmatprep.subr.mxu0 0.0
  %2152 = vmatpush2.msra.mxu0 0.0
  %2153 = vmatprep.subr.mxu0 0.0
  %2154 = vmatpush2.msra.mxu0 0.0
  %2155 = vmatprep.subr.mxu0 0.0
  %2156 = vmatpush2.msra.mxu0 0.0
  %2157 = vmatprep.subr.mxu0 0.0
  %2158 = vmatpush2.msra.mxu0 0.0
  %2159 = vmatprep.subr.mxu0 0.0
  %2160 = vmatpush2.msra.mxu0 0.0
  %2161 = vmatprep.subr.mxu0 0.0
  %2162 = vmatpush2.msra.mxu0 0.0
  %2163 = vmatprep.subr.mxu0 0.0
  %2164 = vmatpush2.msra.mxu0 0.0
  %2165 = vmatprep.subr.mxu0 0.0
  %2166 = vmatpush2.msra.mxu0 0.0
  %2167 = vmatprep.subr.mxu0 0.0
  %2168 = vmatpush2.msra.mxu0 0.0
  %2169 = vmatprep.subr.mxu0 0.0
  %2170 = vmatpush2.msra.mxu0 0.0
  %2171 = vmatprep.subr.mxu0 0.0
  %2172 = vmatpush2.msra.mxu0 0.0
  %2173 = vmatprep.subr.mxu0 0.0
  %2174 = vmatpush2.msra.mxu0 0.0
  %2175 = vmatprep.subr.mxu0 0.0
  %2176 = vmatpush2.msra.mxu0 0.0
  %2177 = vmatprep.subr.mxu0 0.0
  %2178 = vmatpush2.msra.mxu0 0.0
  %2179 = vmatprep.mubr.f32.mxu0 0.0
  %2180 = vmatmul.mubr.f32.gmra.mxu0 %v1975
  %v2181 = vpop.f32.mrf.mxu0
  %v2182 = vadd.f32 0.0, %v2181
  %v2183 = vpop.f32.mrf.mxu0
  %v2184 = vadd.f32 0.0, %v2183
  %2185 = vdwg.mxu0
  %v2186 = vadd.f32 %v1976, %v2111
  %v2187 = vadd.f32 %v1977, %v2113
  %v2188 = vadd.f32 %v1978, %v2182
  %v2189 = vadd.f32 %v1979, %v2184
  %v2190 = vxor.u32 %v2186, 2147483648
  %v2191 = vmul.f32 %v2190, 1.442695
  %v2192 = vpow.pop %v2191
  %v2193 = vadd.f32 %v2192, 1.0
  %v2194 = vrcp.pop %v2193
  %v2195 = vmul.f32 1.0, %v2194
  %v2196 = vxor.u32 %v2187, 2147483648
  %v2197 = vmul.f32 %v2196, 1.442695
  %v2198 = vpow.pop %v2197
  %v2199 = vadd.f32 %v2198, 1.0
  %v2200 = vrcp.pop %v2199
  %v2201 = vmul.f32 1.0, %v2200
  %v2202 = vtanh.pop %v2188
  %v2203 = vxor.u32 %v2189, 2147483648
  %v2204 = vmul.f32 %v2203, 1.442695
  %v2205 = vpow.pop %v2204
  %v2206 = vadd.f32 %v2205, 1.0
  %v2207 = vrcp.pop %v2206
  %v2208 = vmul.f32 1.0, %v2207
  %v2209 = vmul.f32 %v2201, %v1973
  %v2210 = vmul.f32 %v2195, %v2202
  %v2211 = vadd.f32 %v2209, %v2210
  %v2212 = vtanh.pop %v2211
  %v2213 = vmul.f32 %v2208, %v2212
  %v2214 = vld [vmem:[#allocation2 + $0x160] sm:$0xff]
  %v2215 = vld [vmem:[#allocation2 + $0x168] sm:$0xff]
  %v2216 = vld [vmem:[#allocation2 + $0x170] sm:$0xff]
  %v2217 = vld [vmem:[#allocation2 + $0x178] sm:$0xff]
  %2218 = vmatprep.subr.mxu0 %v2041
  %2219 = vmatpush1.msra.mxu0 %v2040
  %2220 = vmatprep.subr.mxu0 %v2037
  %2221 = vmatpush1.msra.mxu0 %v2036
  %2222 = vmatprep.subr.mxu0 %v2033
  %2223 = vmatpush1.msra.mxu0 %v2032
  %2224 = vmatprep.subr.mxu0 %v2029
  %2225 = vmatpush1.msra.mxu0 %v2028
  %2226 = vmatprep.subr.mxu0 %v2025
  %2227 = vmatpush1.msra.mxu0 %v2024
  %2228 = vmatprep.subr.mxu0 %v2021
  %2229 = vmatpush1.msra.mxu0 %v2020
  %2230 = vmatprep.subr.mxu0 %v2017
  %2231 = vmatpush1.msra.mxu0 %v2016
  %2232 = vmatprep.subr.mxu0 %v2013
  %2233 = vmatpush1.msra.mxu0 %v2012
  %2234 = vmatprep.subr.mxu0 %v2009
  %2235 = vmatpush1.msra.mxu0 %v2008
  %2236 = vmatprep.subr.mxu0 %v2005
  %2237 = vmatpush1.msra.mxu0 %v2004
  %2238 = vmatprep.subr.mxu0 %v2001
  %2239 = vmatpush1.msra.mxu0 %v2000
  %2240 = vmatprep.subr.mxu0 %v1997
  %2241 = vmatpush1.msra.mxu0 %v1996
  %2242 = vmatprep.subr.mxu0 %v1993
  %2243 = vmatpush1.msra.mxu0 %v1992
  %2244 = vmatprep.subr.mxu0 %v1989
  %2245 = vmatpush1.msra.mxu0 %v1988
  %2246 = vmatprep.subr.mxu0 %v1985
  %2247 = vmatpush1.msra.mxu0 %v1984
  %2248 = vmatprep.subr.mxu0 %v1981
  %2249 = vmatpush1.msra.mxu0 %v1980
  %2250 = vmatprep.subr.mxu0 0.0
  %2251 = vmatpush2.msra.mxu0 0.0
  %2252 = vmatprep.subr.mxu0 0.0
  %2253 = vmatpush2.msra.mxu0 0.0
  %2254 = vmatprep.subr.mxu0 0.0
  %2255 = vmatpush2.msra.mxu0 0.0
  %2256 = vmatprep.subr.mxu0 0.0
  %2257 = vmatpush2.msra.mxu0 0.0
  %2258 = vmatprep.subr.mxu0 0.0
  %2259 = vmatpush2.msra.mxu0 0.0
  %2260 = vmatprep.subr.mxu0 0.0
  %2261 = vmatpush2.msra.mxu0 0.0
  %2262 = vmatprep.subr.mxu0 0.0
  %2263 = vmatpush2.msra.mxu0 0.0
  %2264 = vmatprep.subr.mxu0 0.0
  %2265 = vmatpush2.msra.mxu0 0.0
  %2266 = vmatprep.subr.mxu0 0.0
  %2267 = vmatpush2.msra.mxu0 0.0
  %2268 = vmatprep.subr.mxu0 0.0
  %2269 = vmatpush2.msra.mxu0 0.0
  %2270 = vmatprep.subr.mxu0 0.0
  %2271 = vmatpush2.msra.mxu0 0.0
  %2272 = vmatprep.subr.mxu0 0.0
  %2273 = vmatpush2.msra.mxu0 0.0
  %2274 = vmatprep.subr.mxu0 0.0
  %2275 = vmatpush2.msra.mxu0 0.0
  %2276 = vmatprep.subr.mxu0 0.0
  %2277 = vmatpush2.msra.mxu0 0.0
  %2278 = vmatprep.subr.mxu0 0.0
  %2279 = vmatpush2.msra.mxu0 0.0
  %2280 = vmatprep.subr.mxu0 0.0
  %2281 = vmatpush2.msra.mxu0 0.0
  %2282 = vmatprep.mubr.f32.mxu0 0.0
  %2283 = vmatmul.mubr.f32.gmra.mxu0 %v2213
  %v2284 = vpop.f32.mrf.mxu0
  %v2285 = vadd.f32 0.0, %v2284
  %v2286 = vpop.f32.mrf.mxu0
  %v2287 = vadd.f32 0.0, %v2286
  %2288 = vdwg.mxu0
  %2289 = vmatprep.subr.mxu0 %v2043
  %2290 = vmatpush1.msra.mxu0 %v2042
  %2291 = vmatprep.subr.mxu0 %v2039
  %2292 = vmatpush1.msra.mxu0 %v2038
  %2293 = vmatprep.subr.mxu0 %v2035
  %2294 = vmatpush1.msra.mxu0 %v2034
  %2295 = vmatprep.subr.mxu0 %v2031
  %2296 = vmatpush1.msra.mxu0 %v2030
  %2297 = vmatprep.subr.mxu0 %v2027
  %2298 = vmatpush1.msra.mxu0 %v2026
  %2299 = vmatprep.subr.mxu0 %v2023
  %2300 = vmatpush1.msra.mxu0 %v2022
  %2301 = vmatprep.subr.mxu0 %v2019
  %2302 = vmatpush1.msra.mxu0 %v2018
  %2303 = vmatprep.subr.mxu0 %v2015
  %2304 = vmatpush1.msra.mxu0 %v2014
  %2305 = vmatprep.subr.mxu0 %v2011
  %2306 = vmatpush1.msra.mxu0 %v2010
  %2307 = vmatprep.subr.mxu0 %v2007
  %2308 = vmatpush1.msra.mxu0 %v2006
  %2309 = vmatprep.subr.mxu0 %v2003
  %2310 = vmatpush1.msra.mxu0 %v2002
  %2311 = vmatprep.subr.mxu0 %v1999
  %2312 = vmatpush1.msra.mxu0 %v1998
  %2313 = vmatprep.subr.mxu0 %v1995
  %2314 = vmatpush1.msra.mxu0 %v1994
  %2315 = vmatprep.subr.mxu0 %v1991
  %2316 = vmatpush1.msra.mxu0 %v1990
  %2317 = vmatprep.subr.mxu0 %v1987
  %2318 = vmatpush1.msra.mxu0 %v1986
  %2319 = vmatprep.subr.mxu0 %v1983
  %2320 = vmatpush1.msra.mxu0 %v1982
  %2321 = vmatprep.subr.mxu0 0.0
  %2322 = vmatpush2.msra.mxu0 0.0
  %2323 = vmatprep.subr.mxu0 0.0
  %2324 = vmatpush2.msra.mxu0 0.0
  %2325 = vmatprep.subr.mxu0 0.0
  %2326 = vmatpush2.msra.mxu0 0.0
  %2327 = vmatprep.subr.mxu0 0.0
  %2328 = vmatpush2.msra.mxu0 0.0
  %2329 = vmatprep.subr.mxu0 0.0
  %2330 = vmatpush2.msra.mxu0 0.0
  %2331 = vmatprep.subr.mxu0 0.0
  %2332 = vmatpush2.msra.mxu0 0.0
  %2333 = vmatprep.subr.mxu0 0.0
  %2334 = vmatpush2.msra.mxu0 0.0
  %2335 = vmatprep.subr.mxu0 0.0
  %2336 = vmatpush2.msra.mxu0 0.0
  %2337 = vmatprep.subr.mxu0 0.0
  %2338 = vmatpush2.msra.mxu0 0.0
  %2339 = vmatprep.subr.mxu0 0.0
  %2340 = vmatpush2.msra.mxu0 0.0
  %2341 = vmatprep.subr.mxu0 0.0
  %2342 = vmatpush2.msra.mxu0 0.0
  %2343 = vmatprep.subr.mxu0 0.0
  %2344 = vmatpush2.msra.mxu0 0.0
  %2345 = vmatprep.subr.mxu0 0.0
  %2346 = vmatpush2.msra.mxu0 0.0
  %2347 = vmatprep.subr.mxu0 0.0
  %2348 = vmatpush2.msra.mxu0 0.0
  %2349 = vmatprep.subr.mxu0 0.0
  %2350 = vmatpush2.msra.mxu0 0.0
  %2351 = vmatprep.subr.mxu0 0.0
  %2352 = vmatpush2.msra.mxu0 0.0
  %2353 = vmatprep.mubr.f32.mxu0 0.0
  %2354 = vmatmul.mubr.f32.gmra.mxu0 %v2213
  %v2355 = vpop.f32.mrf.mxu0
  %v2356 = vadd.f32 0.0, %v2355
  %v2357 = vpop.f32.mrf.mxu0
  %v2358 = vadd.f32 0.0, %v2357
  %2359 = vdwg.mxu0
  %v2360 = vadd.f32 %v2214, %v2285
  %v2361 = vadd.f32 %v2215, %v2287
  %v2362 = vadd.f32 %v2216, %v2356
  %v2363 = vadd.f32 %v2217, %v2358
  %v2364 = vxor.u32 %v2360, 2147483648
  %v2365 = vmul.f32 %v2364, 1.442695
  %v2366 = vpow.pop %v2365
  %v2367 = vadd.f32 %v2366, 1.0
  %v2368 = vrcp.pop %v2367
  %v2369 = vmul.f32 1.0, %v2368
  %v2370 = vxor.u32 %v2361, 2147483648
  %v2371 = vmul.f32 %v2370, 1.442695
  %v2372 = vpow.pop %v2371
  %v2373 = vadd.f32 %v2372, 1.0
  %v2374 = vrcp.pop %v2373
  %v2375 = vmul.f32 1.0, %v2374
  %v2376 = vtanh.pop %v2362
  %v2377 = vxor.u32 %v2363, 2147483648
  %v2378 = vmul.f32 %v2377, 1.442695
  %v2379 = vpow.pop %v2378
  %v2380 = vadd.f32 %v2379, 1.0
  %v2381 = vrcp.pop %v2380
  %v2382 = vmul.f32 1.0, %v2381
  %v2383 = vmul.f32 %v2375, %v2211
  %v2384 = vmul.f32 %v2369, %v2376
  %v2385 = vadd.f32 %v2383, %v2384
  %v2386 = vtanh.pop %v2385
  %v2387 = vmul.f32 %v2382, %v2386
  %v2388 = vld [vmem:[#allocation2 + $0x120] sm:$0xff]
  %v2389 = vld [vmem:[#allocation2 + $0x128] sm:$0xff]
  %v2390 = vld [vmem:[#allocation2 + $0x130] sm:$0xff]
  %v2391 = vld [vmem:[#allocation2 + $0x138] sm:$0xff]
  %2392 = vmatprep.subr.mxu0 %v2041
  %2393 = vmatpush1.msra.mxu0 %v2040
  %2394 = vmatprep.subr.mxu0 %v2037
  %2395 = vmatpush1.msra.mxu0 %v2036
  %2396 = vmatprep.subr.mxu0 %v2033
  %2397 = vmatpush1.msra.mxu0 %v2032
  %2398 = vmatprep.subr.mxu0 %v2029
  %2399 = vmatpush1.msra.mxu0 %v2028
  %2400 = vmatprep.subr.mxu0 %v2025
  %2401 = vmatpush1.msra.mxu0 %v2024
  %2402 = vmatprep.subr.mxu0 %v2021
  %2403 = vmatpush1.msra.mxu0 %v2020
  %2404 = vmatprep.subr.mxu0 %v2017
  %2405 = vmatpush1.msra.mxu0 %v2016
  %2406 = vmatprep.subr.mxu0 %v2013
  %2407 = vmatpush1.msra.mxu0 %v2012
  %2408 = vmatprep.subr.mxu0 %v2009
  %2409 = vmatpush1.msra.mxu0 %v2008
  %2410 = vmatprep.subr.mxu0 %v2005
  %2411 = vmatpush1.msra.mxu0 %v2004
  %2412 = vmatprep.subr.mxu0 %v2001
  %2413 = vmatpush1.msra.mxu0 %v2000
  %2414 = vmatprep.subr.mxu0 %v1997
  %2415 = vmatpush1.msra.mxu0 %v1996
  %2416 = vmatprep.subr.mxu0 %v1993
  %2417 = vmatpush1.msra.mxu0 %v1992
  %2418 = vmatprep.subr.mxu0 %v1989
  %2419 = vmatpush1.msra.mxu0 %v1988
  %2420 = vmatprep.subr.mxu0 %v1985
  %2421 = vmatpush1.msra.mxu0 %v1984
  %2422 = vmatprep.subr.mxu0 %v1981
  %2423 = vmatpush1.msra.mxu0 %v1980
  %2424 = vmatprep.subr.mxu0 0.0
  %2425 = vmatpush2.msra.mxu0 0.0
  %2426 = vmatprep.subr.mxu0 0.0
  %2427 = vmatpush2.msra.mxu0 0.0
  %2428 = vmatprep.subr.mxu0 0.0
  %2429 = vmatpush2.msra.mxu0 0.0
  %2430 = vmatprep.subr.mxu0 0.0
  %2431 = vmatpush2.msra.mxu0 0.0
  %2432 = vmatprep.subr.mxu0 0.0
  %2433 = vmatpush2.msra.mxu0 0.0
  %2434 = vmatprep.subr.mxu0 0.0
  %2435 = vmatpush2.msra.mxu0 0.0
  %2436 = vmatprep.subr.mxu0 0.0
  %2437 = vmatpush2.msra.mxu0 0.0
  %2438 = vmatprep.subr.mxu0 0.0
  %2439 = vmatpush2.msra.mxu0 0.0
  %2440 = vmatprep.subr.mxu0 0.0
  %2441 = vmatpush2.msra.mxu0 0.0
  %2442 = vmatprep.subr.mxu0 0.0
  %2443 = vmatpush2.msra.mxu0 0.0
  %2444 = vmatprep.subr.mxu0 0.0
  %2445 = vmatpush2.msra.mxu0 0.0
  %2446 = vmatprep.subr.mxu0 0.0
  %2447 = vmatpush2.msra.mxu0 0.0
  %2448 = vmatprep.subr.mxu0 0.0
  %2449 = vmatpush2.msra.mxu0 0.0
  %2450 = vmatprep.subr.mxu0 0.0
  %2451 = vmatpush2.msra.mxu0 0.0
  %2452 = vmatprep.subr.mxu0 0.0
  %2453 = vmatpush2.msra.mxu0 0.0
  %2454 = vmatprep.subr.mxu0 0.0
  %2455 = vmatpush2.msra.mxu0 0.0
  %2456 = vmatprep.mubr.f32.mxu0 0.0
  %2457 = vmatmul.mubr.f32.gmra.mxu0 %v2387
  %v2458 = vpop.f32.mrf.mxu0
  %v2459 = vadd.f32 0.0, %v2458
  %v2460 = vpop.f32.mrf.mxu0
  %v2461 = vadd.f32 0.0, %v2460
  %2462 = vdwg.mxu0
  %2463 = vmatprep.subr.mxu0 %v2043
  %2464 = vmatpush1.msra.mxu0 %v2042
  %2465 = vmatprep.subr.mxu0 %v2039
  %2466 = vmatpush1.msra.mxu0 %v2038
  %2467 = vmatprep.subr.mxu0 %v2035
  %2468 = vmatpush1.msra.mxu0 %v2034
  %2469 = vmatprep.subr.mxu0 %v2031
  %2470 = vmatpush1.msra.mxu0 %v2030
  %2471 = vmatprep.subr.mxu0 %v2027
  %2472 = vmatpush1.msra.mxu0 %v2026
  %2473 = vmatprep.subr.mxu0 %v2023
  %2474 = vmatpush1.msra.mxu0 %v2022
  %2475 = vmatprep.subr.mxu0 %v2019
  %2476 = vmatpush1.msra.mxu0 %v2018
  %2477 = vmatprep.subr.mxu0 %v2015
  %2478 = vmatpush1.msra.mxu0 %v2014
  %2479 = vmatprep.subr.mxu0 %v2011
  %2480 = vmatpush1.msra.mxu0 %v2010
  %2481 = vmatprep.subr.mxu0 %v2007
  %2482 = vmatpush1.msra.mxu0 %v2006
  %2483 = vmatprep.subr.mxu0 %v2003
  %2484 = vmatpush1.msra.mxu0 %v2002
  %2485 = vmatprep.subr.mxu0 %v1999
  %2486 = vmatpush1.msra.mxu0 %v1998
  %2487 = vmatprep.subr.mxu0 %v1995
  %2488 = vmatpush1.msra.mxu0 %v1994
  %2489 = vmatprep.subr.mxu0 %v1991
  %2490 = vmatpush1.msra.mxu0 %v1990
  %2491 = vmatprep.subr.mxu0 %v1987
  %2492 = vmatpush1.msra.mxu0 %v1986
  %2493 = vmatprep.subr.mxu0 %v1983
  %2494 = vmatpush1.msra.mxu0 %v1982
  %2495 = vmatprep.subr.mxu0 0.0
  %2496 = vmatpush2.msra.mxu0 0.0
  %2497 = vmatprep.subr.mxu0 0.0
  %2498 = vmatpush2.msra.mxu0 0.0
  %2499 = vmatprep.subr.mxu0 0.0
  %2500 = vmatpush2.msra.mxu0 0.0
  %2501 = vmatprep.subr.mxu0 0.0
  %2502 = vmatpush2.msra.mxu0 0.0
  %2503 = vmatprep.subr.mxu0 0.0
  %2504 = vmatpush2.msra.mxu0 0.0
  %2505 = vmatprep.subr.mxu0 0.0
  %2506 = vmatpush2.msra.mxu0 0.0
  %2507 = vmatprep.subr.mxu0 0.0
  %2508 = vmatpush2.msra.mxu0 0.0
  %2509 = vmatprep.subr.mxu0 0.0
  %2510 = vmatpush2.msra.mxu0 0.0
  %2511 = vmatprep.subr.mxu0 0.0
  %2512 = vmatpush2.msra.mxu0 0.0
  %2513 = vmatprep.subr.mxu0 0.0
  %2514 = vmatpush2.msra.mxu0 0.0
  %2515 = vmatprep.subr.mxu0 0.0
  %2516 = vmatpush2.msra.mxu0 0.0
  %2517 = vmatprep.subr.mxu0 0.0
  %2518 = vmatpush2.msra.mxu0 0.0
  %2519 = vmatprep.subr.mxu0 0.0
  %2520 = vmatpush2.msra.mxu0 0.0
  %2521 = vmatprep.subr.mxu0 0.0
  %2522 = vmatpush2.msra.mxu0 0.0
  %2523 = vmatprep.subr.mxu0 0.0
  %2524 = vmatpush2.msra.mxu0 0.0
  %2525 = vmatprep.subr.mxu0 0.0
  %2526 = vmatpush2.msra.mxu0 0.0
  %2527 = vmatprep.mubr.f32.mxu0 0.0
  %2528 = vmatmul.mubr.f32.gmra.mxu0 %v2387
  %v2529 = vpop.f32.mrf.mxu0
  %v2530 = vadd.f32 0.0, %v2529
  %v2531 = vpop.f32.mrf.mxu0
  %v2532 = vadd.f32 0.0, %v2531
  %2533 = vdwg.mxu0
  %v2534 = vadd.f32 %v2388, %v2459
  %v2535 = vadd.f32 %v2389, %v2461
  %v2536 = vadd.f32 %v2390, %v2530
  %v2537 = vadd.f32 %v2391, %v2532
  %v2538 = vxor.u32 %v2534, 2147483648
  %v2539 = vmul.f32 %v2538, 1.442695
  %v2540 = vpow.pop %v2539
  %v2541 = vadd.f32 %v2540, 1.0
  %v2542 = vrcp.pop %v2541
  %v2543 = vmul.f32 1.0, %v2542
  %v2544 = vxor.u32 %v2535, 2147483648
  %v2545 = vmul.f32 %v2544, 1.442695
  %v2546 = vpow.pop %v2545
  %v2547 = vadd.f32 %v2546, 1.0
  %v2548 = vrcp.pop %v2547
  %v2549 = vmul.f32 1.0, %v2548
  %v2550 = vtanh.pop %v2536
  %v2551 = vxor.u32 %v2537, 2147483648
  %v2552 = vmul.f32 %v2551, 1.442695
  %v2553 = vpow.pop %v2552
  %v2554 = vadd.f32 %v2553, 1.0
  %v2555 = vrcp.pop %v2554
  %v2556 = vmul.f32 1.0, %v2555
  %v2557 = vmul.f32 %v2549, %v2385
  %v2558 = vmul.f32 %v2543, %v2550
  %v2559 = vadd.f32 %v2557, %v2558
  %v2560 = vtanh.pop %v2559
  %v2561 = vmul.f32 %v2556, %v2560
  %v2562 = vld [vmem:[#allocation2 + $0xe0] sm:$0xff]
  %v2563 = vld [vmem:[#allocation2 + $0xe8] sm:$0xff]
  %v2564 = vld [vmem:[#allocation2 + $0xf0] sm:$0xff]
  %v2565 = vld [vmem:[#allocation2 + $0xf8] sm:$0xff]
  %2566 = vmatprep.subr.mxu0 %v2041
  %2567 = vmatpush1.msra.mxu0 %v2040
  %2568 = vmatprep.subr.mxu0 %v2037
  %2569 = vmatpush1.msra.mxu0 %v2036
  %2570 = vmatprep.subr.mxu0 %v2033
  %2571 = vmatpush1.msra.mxu0 %v2032
  %2572 = vmatprep.subr.mxu0 %v2029
  %2573 = vmatpush1.msra.mxu0 %v2028
  %2574 = vmatprep.subr.mxu0 %v2025
  %2575 = vmatpush1.msra.mxu0 %v2024
  %2576 = vmatprep.subr.mxu0 %v2021
  %2577 = vmatpush1.msra.mxu0 %v2020
  %2578 = vmatprep.subr.mxu0 %v2017
  %2579 = vmatpush1.msra.mxu0 %v2016
  %2580 = vmatprep.subr.mxu0 %v2013
  %2581 = vmatpush1.msra.mxu0 %v2012
  %2582 = vmatprep.subr.mxu0 %v2009
  %2583 = vmatpush1.msra.mxu0 %v2008
  %2584 = vmatprep.subr.mxu0 %v2005
  %2585 = vmatpush1.msra.mxu0 %v2004
  %2586 = vmatprep.subr.mxu0 %v2001
  %2587 = vmatpush1.msra.mxu0 %v2000
  %2588 = vmatprep.subr.mxu0 %v1997
  %2589 = vmatpush1.msra.mxu0 %v1996
  %2590 = vmatprep.subr.mxu0 %v1993
  %2591 = vmatpush1.msra.mxu0 %v1992
  %2592 = vmatprep.subr.mxu0 %v1989
  %2593 = vmatpush1.msra.mxu0 %v1988
  %2594 = vmatprep.subr.mxu0 %v1985
  %2595 = vmatpush1.msra.mxu0 %v1984
  %2596 = vmatprep.subr.mxu0 %v1981
  %2597 = vmatpush1.msra.mxu0 %v1980
  %2598 = vmatprep.subr.mxu0 0.0
  %2599 = vmatpush2.msra.mxu0 0.0
  %2600 = vmatprep.subr.mxu0 0.0
  %2601 = vmatpush2.msra.mxu0 0.0
  %2602 = vmatprep.subr.mxu0 0.0
  %2603 = vmatpush2.msra.mxu0 0.0
  %2604 = vmatprep.subr.mxu0 0.0
  %2605 = vmatpush2.msra.mxu0 0.0
  %2606 = vmatprep.subr.mxu0 0.0
  %2607 = vmatpush2.msra.mxu0 0.0
  %2608 = vmatprep.subr.mxu0 0.0
  %2609 = vmatpush2.msra.mxu0 0.0
  %2610 = vmatprep.subr.mxu0 0.0
  %2611 = vmatpush2.msra.mxu0 0.0
  %2612 = vmatprep.subr.mxu0 0.0
  %2613 = vmatpush2.msra.mxu0 0.0
  %2614 = vmatprep.subr.mxu0 0.0
  %2615 = vmatpush2.msra.mxu0 0.0
  %2616 = vmatprep.subr.mxu0 0.0
  %2617 = vmatpush2.msra.mxu0 0.0
  %2618 = vmatprep.subr.mxu0 0.0
  %2619 = vmatpush2.msra.mxu0 0.0
  %2620 = vmatprep.subr.mxu0 0.0
  %2621 = vmatpush2.msra.mxu0 0.0
  %2622 = vmatprep.subr.mxu0 0.0
  %2623 = vmatpush2.msra.mxu0 0.0
  %2624 = vmatprep.subr.mxu0 0.0
  %2625 = vmatpush2.msra.mxu0 0.0
  %2626 = vmatprep.subr.mxu0 0.0
  %2627 = vmatpush2.msra.mxu0 0.0
  %2628 = vmatprep.subr.mxu0 0.0
  %2629 = vmatpush2.msra.mxu0 0.0
  %2630 = vmatprep.mubr.f32.mxu0 0.0
  %2631 = vmatmul.mubr.f32.gmra.mxu0 %v2561
  %v2632 = vpop.f32.mrf.mxu0
  %v2633 = vadd.f32 0.0, %v2632
  %v2634 = vpop.f32.mrf.mxu0
  %v2635 = vadd.f32 0.0, %v2634
  %2636 = vdwg.mxu0
  %2637 = vmatprep.subr.mxu0 %v2043
  %2638 = vmatpush1.msra.mxu0 %v2042
  %2639 = vmatprep.subr.mxu0 %v2039
  %2640 = vmatpush1.msra.mxu0 %v2038
  %2641 = vmatprep.subr.mxu0 %v2035
  %2642 = vmatpush1.msra.mxu0 %v2034
  %2643 = vmatprep.subr.mxu0 %v2031
  %2644 = vmatpush1.msra.mxu0 %v2030
  %2645 = vmatprep.subr.mxu0 %v2027
  %2646 = vmatpush1.msra.mxu0 %v2026
  %2647 = vmatprep.subr.mxu0 %v2023
  %2648 = vmatpush1.msra.mxu0 %v2022
  %2649 = vmatprep.subr.mxu0 %v2019
  %2650 = vmatpush1.msra.mxu0 %v2018
  %2651 = vmatprep.subr.mxu0 %v2015
  %2652 = vmatpush1.msra.mxu0 %v2014
  %2653 = vmatprep.subr.mxu0 %v2011
  %2654 = vmatpush1.msra.mxu0 %v2010
  %2655 = vmatprep.subr.mxu0 %v2007
  %2656 = vmatpush1.msra.mxu0 %v2006
  %2657 = vmatprep.subr.mxu0 %v2003
  %2658 = vmatpush1.msra.mxu0 %v2002
  %2659 = vmatprep.subr.mxu0 %v1999
  %2660 = vmatpush1.msra.mxu0 %v1998
  %2661 = vmatprep.subr.mxu0 %v1995
  %2662 = vmatpush1.msra.mxu0 %v1994
  %2663 = vmatprep.subr.mxu0 %v1991
  %2664 = vmatpush1.msra.mxu0 %v1990
  %2665 = vmatprep.subr.mxu0 %v1987
  %2666 = vmatpush1.msra.mxu0 %v1986
  %2667 = vmatprep.subr.mxu0 %v1983
  %2668 = vmatpush1.msra.mxu0 %v1982
  %2669 = vmatprep.subr.mxu0 0.0
  %2670 = vmatpush2.msra.mxu0 0.0
  %2671 = vmatprep.subr.mxu0 0.0
  %2672 = vmatpush2.msra.mxu0 0.0
  %2673 = vmatprep.subr.mxu0 0.0
  %2674 = vmatpush2.msra.mxu0 0.0
  %2675 = vmatprep.subr.mxu0 0.0
  %2676 = vmatpush2.msra.mxu0 0.0
  %2677 = vmatprep.subr.mxu0 0.0
  %2678 = vmatpush2.msra.mxu0 0.0
  %2679 = vmatprep.subr.mxu0 0.0
  %2680 = vmatpush2.msra.mxu0 0.0
  %2681 = vmatprep.subr.mxu0 0.0
  %2682 = vmatpush2.msra.mxu0 0.0
  %2683 = vmatprep.subr.mxu0 0.0
  %2684 = vmatpush2.msra.mxu0 0.0
  %2685 = vmatprep.subr.mxu0 0.0
  %2686 = vmatpush2.msra.mxu0 0.0
  %2687 = vmatprep.subr.mxu0 0.0
  %2688 = vmatpush2.msra.mxu0 0.0
  %2689 = vmatprep.subr.mxu0 0.0
  %2690 = vmatpush2.msra.mxu0 0.0
  %2691 = vmatprep.subr.mxu0 0.0
  %2692 = vmatpush2.msra.mxu0 0.0
  %2693 = vmatprep.subr.mxu0 0.0
  %2694 = vmatpush2.msra.mxu0 0.0
  %2695 = vmatprep.subr.mxu0 0.0
  %2696 = vmatpush2.msra.mxu0 0.0
  %2697 = vmatprep.subr.mxu0 0.0
  %2698 = vmatpush2.msra.mxu0 0.0
  %2699 = vmatprep.subr.mxu0 0.0
  %2700 = vmatpush2.msra.mxu0 0.0
  %2701 = vmatprep.mubr.f32.mxu0 0.0
  %2702 = vmatmul.mubr.f32.gmra.mxu0 %v2561
  %v2703 = vpop.f32.mrf.mxu0
  %v2704 = vadd.f32 0.0, %v2703
  %v2705 = vpop.f32.mrf.mxu0
  %v2706 = vadd.f32 0.0, %v2705
  %2707 = vdwg.mxu0
  %v2708 = vadd.f32 %v2562, %v2633
  %v2709 = vadd.f32 %v2563, %v2635
  %v2710 = vadd.f32 %v2564, %v2704
  %v2711 = vadd.f32 %v2565, %v2706
  %v2712 = vxor.u32 %v2708, 2147483648
  %v2713 = vmul.f32 %v2712, 1.442695
  %v2714 = vpow.pop %v2713
  %v2715 = vadd.f32 %v2714, 1.0
  %v2716 = vrcp.pop %v2715
  %v2717 = vmul.f32 1.0, %v2716
  %v2718 = vxor.u32 %v2709, 2147483648
  %v2719 = vmul.f32 %v2718, 1.442695
  %v2720 = vpow.pop %v2719
  %v2721 = vadd.f32 %v2720, 1.0
  %v2722 = vrcp.pop %v2721
  %v2723 = vmul.f32 1.0, %v2722
  %v2724 = vtanh.pop %v2710
  %v2725 = vxor.u32 %v2711, 2147483648
  %v2726 = vmul.f32 %v2725, 1.442695
  %v2727 = vpow.pop %v2726
  %v2728 = vadd.f32 %v2727, 1.0
  %v2729 = vrcp.pop %v2728
  %v2730 = vmul.f32 1.0, %v2729
  %v2731 = vmul.f32 %v2723, %v2559
  %v2732 = vmul.f32 %v2717, %v2724
  %v2733 = vadd.f32 %v2731, %v2732
  %v2734 = vtanh.pop %v2733
  %v2735 = vmul.f32 %v2730, %v2734
  %v2736 = vld [vmem:[#allocation2 + $0xa0] sm:$0xff]
  %v2737 = vld [vmem:[#allocation2 + $0xa8] sm:$0xff]
  %v2738 = vld [vmem:[#allocation2 + $0xb0] sm:$0xff]
  %v2739 = vld [vmem:[#allocation2 + $0xb8] sm:$0xff]
  %2740 = vmatprep.subr.mxu0 %v2041
  %2741 = vmatpush1.msra.mxu0 %v2040
  %2742 = vmatprep.subr.mxu0 %v2037
  %2743 = vmatpush1.msra.mxu0 %v2036
  %2744 = vmatprep.subr.mxu0 %v2033
  %2745 = vmatpush1.msra.mxu0 %v2032
  %2746 = vmatprep.subr.mxu0 %v2029
  %2747 = vmatpush1.msra.mxu0 %v2028
  %2748 = vmatprep.subr.mxu0 %v2025
  %2749 = vmatpush1.msra.mxu0 %v2024
  %2750 = vmatprep.subr.mxu0 %v2021
  %2751 = vmatpush1.msra.mxu0 %v2020
  %2752 = vmatprep.subr.mxu0 %v2017
  %2753 = vmatpush1.msra.mxu0 %v2016
  %2754 = vmatprep.subr.mxu0 %v2013
  %2755 = vmatpush1.msra.mxu0 %v2012
  %2756 = vmatprep.subr.mxu0 %v2009
  %2757 = vmatpush1.msra.mxu0 %v2008
  %2758 = vmatprep.subr.mxu0 %v2005
  %2759 = vmatpush1.msra.mxu0 %v2004
  %2760 = vmatprep.subr.mxu0 %v2001
  %2761 = vmatpush1.msra.mxu0 %v2000
  %2762 = vmatprep.subr.mxu0 %v1997
  %2763 = vmatpush1.msra.mxu0 %v1996
  %2764 = vmatprep.subr.mxu0 %v1993
  %2765 = vmatpush1.msra.mxu0 %v1992
  %2766 = vmatprep.subr.mxu0 %v1989
  %2767 = vmatpush1.msra.mxu0 %v1988
  %2768 = vmatprep.subr.mxu0 %v1985
  %2769 = vmatpush1.msra.mxu0 %v1984
  %2770 = vmatprep.subr.mxu0 %v1981
  %2771 = vmatpush1.msra.mxu0 %v1980
  %2772 = vmatprep.subr.mxu0 0.0
  %2773 = vmatpush2.msra.mxu0 0.0
  %2774 = vmatprep.subr.mxu0 0.0
  %2775 = vmatpush2.msra.mxu0 0.0
  %2776 = vmatprep.subr.mxu0 0.0
  %2777 = vmatpush2.msra.mxu0 0.0
  %2778 = vmatprep.subr.mxu0 0.0
  %2779 = vmatpush2.msra.mxu0 0.0
  %2780 = vmatprep.subr.mxu0 0.0
  %2781 = vmatpush2.msra.mxu0 0.0
  %2782 = vmatprep.subr.mxu0 0.0
  %2783 = vmatpush2.msra.mxu0 0.0
  %2784 = vmatprep.subr.mxu0 0.0
  %2785 = vmatpush2.msra.mxu0 0.0
  %2786 = vmatprep.subr.mxu0 0.0
  %2787 = vmatpush2.msra.mxu0 0.0
  %2788 = vmatprep.subr.mxu0 0.0
  %2789 = vmatpush2.msra.mxu0 0.0
  %2790 = vmatprep.subr.mxu0 0.0
  %2791 = vmatpush2.msra.mxu0 0.0
  %2792 = vmatprep.subr.mxu0 0.0
  %2793 = vmatpush2.msra.mxu0 0.0
  %2794 = vmatprep.subr.mxu0 0.0
  %2795 = vmatpush2.msra.mxu0 0.0
  %2796 = vmatprep.subr.mxu0 0.0
  %2797 = vmatpush2.msra.mxu0 0.0
  %2798 = vmatprep.subr.mxu0 0.0
  %2799 = vmatpush2.msra.mxu0 0.0
  %2800 = vmatprep.subr.mxu0 0.0
  %2801 = vmatpush2.msra.mxu0 0.0
  %2802 = vmatprep.subr.mxu0 0.0
  %2803 = vmatpush2.msra.mxu0 0.0
  %2804 = vmatprep.mubr.f32.mxu0 0.0
  %2805 = vmatmul.mubr.f32.gmra.mxu0 %v2735
  %v2806 = vpop.f32.mrf.mxu0
  %v2807 = vadd.f32 0.0, %v2806
  %v2808 = vpop.f32.mrf.mxu0
  %v2809 = vadd.f32 0.0, %v2808
  %2810 = vdwg.mxu0
  %2811 = vmatprep.subr.mxu0 %v2043
  %2812 = vmatpush1.msra.mxu0 %v2042
  %2813 = vmatprep.subr.mxu0 %v2039
  %2814 = vmatpush1.msra.mxu0 %v2038
  %2815 = vmatprep.subr.mxu0 %v2035
  %2816 = vmatpush1.msra.mxu0 %v2034
  %2817 = vmatprep.subr.mxu0 %v2031
  %2818 = vmatpush1.msra.mxu0 %v2030
  %2819 = vmatprep.subr.mxu0 %v2027
  %2820 = vmatpush1.msra.mxu0 %v2026
  %2821 = vmatprep.subr.mxu0 %v2023
  %2822 = vmatpush1.msra.mxu0 %v2022
  %2823 = vmatprep.subr.mxu0 %v2019
  %2824 = vmatpush1.msra.mxu0 %v2018
  %2825 = vmatprep.subr.mxu0 %v2015
  %2826 = vmatpush1.msra.mxu0 %v2014
  %2827 = vmatprep.subr.mxu0 %v2011
  %2828 = vmatpush1.msra.mxu0 %v2010
  %2829 = vmatprep.subr.mxu0 %v2007
  %2830 = vmatpush1.msra.mxu0 %v2006
  %2831 = vmatprep.subr.mxu0 %v2003
  %2832 = vmatpush1.msra.mxu0 %v2002
  %2833 = vmatprep.subr.mxu0 %v1999
  %2834 = vmatpush1.msra.mxu0 %v1998
  %2835 = vmatprep.subr.mxu0 %v1995
  %2836 = vmatpush1.msra.mxu0 %v1994
  %2837 = vmatprep.subr.mxu0 %v1991
  %2838 = vmatpush1.msra.mxu0 %v1990
  %2839 = vmatprep.subr.mxu0 %v1987
  %2840 = vmatpush1.msra.mxu0 %v1986
  %2841 = vmatprep.subr.mxu0 %v1983
  %2842 = vmatpush1.msra.mxu0 %v1982
  %2843 = vmatprep.subr.mxu0 0.0
  %2844 = vmatpush2.msra.mxu0 0.0
  %2845 = vmatprep.subr.mxu0 0.0
  %2846 = vmatpush2.msra.mxu0 0.0
  %2847 = vmatprep.subr.mxu0 0.0
  %2848 = vmatpush2.msra.mxu0 0.0
  %2849 = vmatprep.subr.mxu0 0.0
  %2850 = vmatpush2.msra.mxu0 0.0
  %2851 = vmatprep.subr.mxu0 0.0
  %2852 = vmatpush2.msra.mxu0 0.0
  %2853 = vmatprep.subr.mxu0 0.0
  %2854 = vmatpush2.msra.mxu0 0.0
  %2855 = vmatprep.subr.mxu0 0.0
  %2856 = vmatpush2.msra.mxu0 0.0
  %2857 = vmatprep.subr.mxu0 0.0
  %2858 = vmatpush2.msra.mxu0 0.0
  %2859 = vmatprep.subr.mxu0 0.0
  %2860 = vmatpush2.msra.mxu0 0.0
  %2861 = vmatprep.subr.mxu0 0.0
  %2862 = vmatpush2.msra.mxu0 0.0
  %2863 = vmatprep.subr.mxu0 0.0
  %2864 = vmatpush2.msra.mxu0 0.0
  %2865 = vmatprep.subr.mxu0 0.0
  %2866 = vmatpush2.msra.mxu0 0.0
  %2867 = vmatprep.subr.mxu0 0.0
  %2868 = vmatpush2.msra.mxu0 0.0
  %2869 = vmatprep.subr.mxu0 0.0
  %2870 = vmatpush2.msra.mxu0 0.0
  %2871 = vmatprep.subr.mxu0 0.0
  %2872 = vmatpush2.msra.mxu0 0.0
  %2873 = vmatprep.subr.mxu0 0.0
  %2874 = vmatpush2.msra.mxu0 0.0
  %2875 = vmatprep.mubr.f32.mxu0 0.0
  %2876 = vmatmul.mubr.f32.gmra.mxu0 %v2735
  %v2877 = vpop.f32.mrf.mxu0
  %v2878 = vadd.f32 0.0, %v2877
  %v2879 = vpop.f32.mrf.mxu0
  %v2880 = vadd.f32 0.0, %v2879
  %2881 = vdwg.mxu0
  %v2882 = vadd.f32 %v2736, %v2807
  %v2883 = vadd.f32 %v2737, %v2809
  %v2884 = vadd.f32 %v2738, %v2878
  %v2885 = vadd.f32 %v2739, %v2880
  %v2886 = vxor.u32 %v2882, 2147483648
  %v2887 = vmul.f32 %v2886, 1.442695
  %v2888 = vpow.pop %v2887
  %v2889 = vadd.f32 %v2888, 1.0
  %v2890 = vrcp.pop %v2889
  %v2891 = vmul.f32 1.0, %v2890
  %v2892 = vxor.u32 %v2883, 2147483648
  %v2893 = vmul.f32 %v2892, 1.442695
  %v2894 = vpow.pop %v2893
  %v2895 = vadd.f32 %v2894, 1.0
  %v2896 = vrcp.pop %v2895
  %v2897 = vmul.f32 1.0, %v2896
  %v2898 = vtanh.pop %v2884
  %v2899 = vxor.u32 %v2885, 2147483648
  %v2900 = vmul.f32 %v2899, 1.442695
  %v2901 = vpow.pop %v2900
  %v2902 = vadd.f32 %v2901, 1.0
  %v2903 = vrcp.pop %v2902
  %v2904 = vmul.f32 1.0, %v2903
  %v2905 = vmul.f32 %v2897, %v2733
  %v2906 = vmul.f32 %v2891, %v2898
  %v2907 = vadd.f32 %v2905, %v2906
  %v2908 = vtanh.pop %v2907
  %v2909 = vmul.f32 %v2904, %v2908
  %v2910 = vld [vmem:[#allocation2 + $0x60] sm:$0xff]
  %v2911 = vld [vmem:[#allocation2 + $0x68] sm:$0xff]
  %v2912 = vld [vmem:[#allocation2 + $0x70] sm:$0xff]
  %v2913 = vld [vmem:[#allocation2 + $0x78] sm:$0xff]
  %2914 = vmatprep.subr.mxu0 %v2041
  %2915 = vmatpush1.msra.mxu0 %v2040
  %2916 = vmatprep.subr.mxu0 %v2037
  %2917 = vmatpush1.msra.mxu0 %v2036
  %2918 = vmatprep.subr.mxu0 %v2033
  %2919 = vmatpush1.msra.mxu0 %v2032
  %2920 = vmatprep.subr.mxu0 %v2029
  %2921 = vmatpush1.msra.mxu0 %v2028
  %2922 = vmatprep.subr.mxu0 %v2025
  %2923 = vmatpush1.msra.mxu0 %v2024
  %2924 = vmatprep.subr.mxu0 %v2021
  %2925 = vmatpush1.msra.mxu0 %v2020
  %2926 = vmatprep.subr.mxu0 %v2017
  %2927 = vmatpush1.msra.mxu0 %v2016
  %2928 = vmatprep.subr.mxu0 %v2013
  %2929 = vmatpush1.msra.mxu0 %v2012
  %2930 = vmatprep.subr.mxu0 %v2009
  %2931 = vmatpush1.msra.mxu0 %v2008
  %2932 = vmatprep.subr.mxu0 %v2005
  %2933 = vmatpush1.msra.mxu0 %v2004
  %2934 = vmatprep.subr.mxu0 %v2001
  %2935 = vmatpush1.msra.mxu0 %v2000
  %2936 = vmatprep.subr.mxu0 %v1997
  %2937 = vmatpush1.msra.mxu0 %v1996
  %2938 = vmatprep.subr.mxu0 %v1993
  %2939 = vmatpush1.msra.mxu0 %v1992
  %2940 = vmatprep.subr.mxu0 %v1989
  %2941 = vmatpush1.msra.mxu0 %v1988
  %2942 = vmatprep.subr.mxu0 %v1985
  %2943 = vmatpush1.msra.mxu0 %v1984
  %2944 = vmatprep.subr.mxu0 %v1981
  %2945 = vmatpush1.msra.mxu0 %v1980
  %2946 = vmatprep.subr.mxu0 0.0
  %2947 = vmatpush2.msra.mxu0 0.0
  %2948 = vmatprep.subr.mxu0 0.0
  %2949 = vmatpush2.msra.mxu0 0.0
  %2950 = vmatprep.subr.mxu0 0.0
  %2951 = vmatpush2.msra.mxu0 0.0
  %2952 = vmatprep.subr.mxu0 0.0
  %2953 = vmatpush2.msra.mxu0 0.0
  %2954 = vmatprep.subr.mxu0 0.0
  %2955 = vmatpush2.msra.mxu0 0.0
  %2956 = vmatprep.subr.mxu0 0.0
  %2957 = vmatpush2.msra.mxu0 0.0
  %2958 = vmatprep.subr.mxu0 0.0
  %2959 = vmatpush2.msra.mxu0 0.0
  %2960 = vmatprep.subr.mxu0 0.0
  %2961 = vmatpush2.msra.mxu0 0.0
  %2962 = vmatprep.subr.mxu0 0.0
  %2963 = vmatpush2.msra.mxu0 0.0
  %2964 = vmatprep.subr.mxu0 0.0
  %2965 = vmatpush2.msra.mxu0 0.0
  %2966 = vmatprep.subr.mxu0 0.0
  %2967 = vmatpush2.msra.mxu0 0.0
  %2968 = vmatprep.subr.mxu0 0.0
  %2969 = vmatpush2.msra.mxu0 0.0
  %2970 = vmatprep.subr.mxu0 0.0
  %2971 = vmatpush2.msra.mxu0 0.0
  %2972 = vmatprep.subr.mxu0 0.0
  %2973 = vmatpush2.msra.mxu0 0.0
  %2974 = vmatprep.subr.mxu0 0.0
  %2975 = vmatpush2.msra.mxu0 0.0
  %2976 = vmatprep.subr.mxu0 0.0
  %2977 = vmatpush2.msra.mxu0 0.0
  %2978 = vmatprep.mubr.f32.mxu0 0.0
  %2979 = vmatmul.mubr.f32.gmra.mxu0 %v2909
  %v2980 = vpop.f32.mrf.mxu0
  %v2981 = vadd.f32 0.0, %v2980
  %v2982 = vpop.f32.mrf.mxu0
  %v2983 = vadd.f32 0.0, %v2982
  %2984 = vdwg.mxu0
  %2985 = vmatprep.subr.mxu0 %v2043
  %2986 = vmatpush1.msra.mxu0 %v2042
  %2987 = vmatprep.subr.mxu0 %v2039
  %2988 = vmatpush1.msra.mxu0 %v2038
  %2989 = vmatprep.subr.mxu0 %v2035
  %2990 = vmatpush1.msra.mxu0 %v2034
  %2991 = vmatprep.subr.mxu0 %v2031
  %2992 = vmatpush1.msra.mxu0 %v2030
  %2993 = vmatprep.subr.mxu0 %v2027
  %2994 = vmatpush1.msra.mxu0 %v2026
  %2995 = vmatprep.subr.mxu0 %v2023
  %2996 = vmatpush1.msra.mxu0 %v2022
  %2997 = vmatprep.subr.mxu0 %v2019
  %2998 = vmatpush1.msra.mxu0 %v2018
  %2999 = vmatprep.subr.mxu0 %v2015
  %3000 = vmatpush1.msra.mxu0 %v2014
  %3001 = vmatprep.subr.mxu0 %v2011
  %3002 = vmatpush1.msra.mxu0 %v2010
  %3003 = vmatprep.subr.mxu0 %v2007
  %3004 = vmatpush1.msra.mxu0 %v2006
  %3005 = vmatprep.subr.mxu0 %v2003
  %3006 = vmatpush1.msra.mxu0 %v2002
  %3007 = vmatprep.subr.mxu0 %v1999
  %3008 = vmatpush1.msra.mxu0 %v1998
  %3009 = vmatprep.subr.mxu0 %v1995
  %3010 = vmatpush1.msra.mxu0 %v1994
  %3011 = vmatprep.subr.mxu0 %v1991
  %3012 = vmatpush1.msra.mxu0 %v1990
  %3013 = vmatprep.subr.mxu0 %v1987
  %3014 = vmatpush1.msra.mxu0 %v1986
  %3015 = vmatprep.subr.mxu0 %v1983
  %3016 = vmatpush1.msra.mxu0 %v1982
  %3017 = vmatprep.subr.mxu0 0.0
  %3018 = vmatpush2.msra.mxu0 0.0
  %3019 = vmatprep.subr.mxu0 0.0
  %3020 = vmatpush2.msra.mxu0 0.0
  %3021 = vmatprep.subr.mxu0 0.0
  %3022 = vmatpush2.msra.mxu0 0.0
  %3023 = vmatprep.subr.mxu0 0.0
  %3024 = vmatpush2.msra.mxu0 0.0
  %3025 = vmatprep.subr.mxu0 0.0
  %3026 = vmatpush2.msra.mxu0 0.0
  %3027 = vmatprep.subr.mxu0 0.0
  %3028 = vmatpush2.msra.mxu0 0.0
  %3029 = vmatprep.subr.mxu0 0.0
  %3030 = vmatpush2.msra.mxu0 0.0
  %3031 = vmatprep.subr.mxu0 0.0
  %3032 = vmatpush2.msra.mxu0 0.0
  %3033 = vmatprep.subr.mxu0 0.0
  %3034 = vmatpush2.msra.mxu0 0.0
  %3035 = vmatprep.subr.mxu0 0.0
  %3036 = vmatpush2.msra.mxu0 0.0
  %3037 = vmatprep.subr.mxu0 0.0
  %3038 = vmatpush2.msra.mxu0 0.0
  %3039 = vmatprep.subr.mxu0 0.0
  %3040 = vmatpush2.msra.mxu0 0.0
  %3041 = vmatprep.subr.mxu0 0.0
  %3042 = vmatpush2.msra.mxu0 0.0
  %3043 = vmatprep.subr.mxu0 0.0
  %3044 = vmatpush2.msra.mxu0 0.0
  %3045 = vmatprep.subr.mxu0 0.0
  %3046 = vmatpush2.msra.mxu0 0.0
  %3047 = vmatprep.subr.mxu0 0.0
  %3048 = vmatpush2.msra.mxu0 0.0
  %3049 = vmatprep.mubr.f32.mxu0 0.0
  %3050 = vmatmul.mubr.f32.gmra.mxu0 %v2909
  %v3051 = vpop.f32.mrf.mxu0
  %v3052 = vadd.f32 0.0, %v3051
  %v3053 = vpop.f32.mrf.mxu0
  %v3054 = vadd.f32 0.0, %v3053
  %3055 = vdwg.mxu0
  %v3056 = vadd.f32 %v2910, %v2981
  %v3057 = vadd.f32 %v2911, %v2983
  %v3058 = vadd.f32 %v2912, %v3052
  %v3059 = vadd.f32 %v2913, %v3054
  %v3060 = vxor.u32 %v3056, 2147483648
  %v3061 = vmul.f32 %v3060, 1.442695
  %v3062 = vpow.pop %v3061
  %v3063 = vadd.f32 %v3062, 1.0
  %v3064 = vrcp.pop %v3063
  %v3065 = vmul.f32 1.0, %v3064
  %v3066 = vxor.u32 %v3057, 2147483648
  %v3067 = vmul.f32 %v3066, 1.442695
  %v3068 = vpow.pop %v3067
  %v3069 = vadd.f32 %v3068, 1.0
  %v3070 = vrcp.pop %v3069
  %v3071 = vmul.f32 1.0, %v3070
  %v3072 = vtanh.pop %v3058
  %v3073 = vxor.u32 %v3059, 2147483648
  %v3074 = vmul.f32 %v3073, 1.442695
  %v3075 = vpow.pop %v3074
  %v3076 = vadd.f32 %v3075, 1.0
  %v3077 = vrcp.pop %v3076
  %v3078 = vmul.f32 1.0, %v3077
  %v3079 = vmul.f32 %v3071, %v2907
  %v3080 = vmul.f32 %v3065, %v3072
  %v3081 = vadd.f32 %v3079, %v3080
  %v3082 = vtanh.pop %v3081
  %v3083 = vmul.f32 %v3078, %v3082
  %v3084 = vld [vmem:[#allocation2 + $0x20] sm:$0xff]
  %v3085 = vld [vmem:[#allocation2 + $0x28] sm:$0xff]
  %v3086 = vld [vmem:[#allocation2 + $0x30] sm:$0xff]
  %v3087 = vld [vmem:[#allocation2 + $0x38] sm:$0xff]
  %3088 = vmatprep.subr.mxu0 %v2041
  %3089 = vmatpush1.msra.mxu0 %v2040
  %3090 = vmatprep.subr.mxu0 %v2037
  %3091 = vmatpush1.msra.mxu0 %v2036
  %3092 = vmatprep.subr.mxu0 %v2033
  %3093 = vmatpush1.msra.mxu0 %v2032
  %3094 = vmatprep.subr.mxu0 %v2029
  %3095 = vmatpush1.msra.mxu0 %v2028
  %3096 = vmatprep.subr.mxu0 %v2025
  %3097 = vmatpush1.msra.mxu0 %v2024
  %3098 = vmatprep.subr.mxu0 %v2021
  %3099 = vmatpush1.msra.mxu0 %v2020
  %3100 = vmatprep.subr.mxu0 %v2017
  %3101 = vmatpush1.msra.mxu0 %v2016
  %3102 = vmatprep.subr.mxu0 %v2013
  %3103 = vmatpush1.msra.mxu0 %v2012
  %3104 = vmatprep.subr.mxu0 %v2009
  %3105 = vmatpush1.msra.mxu0 %v2008
  %3106 = vmatprep.subr.mxu0 %v2005
  %3107 = vmatpush1.msra.mxu0 %v2004
  %3108 = vmatprep.subr.mxu0 %v2001
  %3109 = vmatpush1.msra.mxu0 %v2000
  %3110 = vmatprep.subr.mxu0 %v1997
  %3111 = vmatpush1.msra.mxu0 %v1996
  %3112 = vmatprep.subr.mxu0 %v1993
  %3113 = vmatpush1.msra.mxu0 %v1992
  %3114 = vmatprep.subr.mxu0 %v1989
  %3115 = vmatpush1.msra.mxu0 %v1988
  %3116 = vmatprep.subr.mxu0 %v1985
  %3117 = vmatpush1.msra.mxu0 %v1984
  %3118 = vmatprep.subr.mxu0 %v1981
  %3119 = vmatpush1.msra.mxu0 %v1980
  %3120 = vmatprep.subr.mxu0 0.0
  %3121 = vmatpush2.msra.mxu0 0.0
  %3122 = vmatprep.subr.mxu0 0.0
  %3123 = vmatpush2.msra.mxu0 0.0
  %3124 = vmatprep.subr.mxu0 0.0
  %3125 = vmatpush2.msra.mxu0 0.0
  %3126 = vmatprep.subr.mxu0 0.0
  %3127 = vmatpush2.msra.mxu0 0.0
  %3128 = vmatprep.subr.mxu0 0.0
  %3129 = vmatpush2.msra.mxu0 0.0
  %3130 = vmatprep.subr.mxu0 0.0
  %3131 = vmatpush2.msra.mxu0 0.0
  %3132 = vmatprep.subr.mxu0 0.0
  %3133 = vmatpush2.msra.mxu0 0.0
  %3134 = vmatprep.subr.mxu0 0.0
  %3135 = vmatpush2.msra.mxu0 0.0
  %3136 = vmatprep.subr.mxu0 0.0
  %3137 = vmatpush2.msra.mxu0 0.0
  %3138 = vmatprep.subr.mxu0 0.0
  %3139 = vmatpush2.msra.mxu0 0.0
  %3140 = vmatprep.subr.mxu0 0.0
  %3141 = vmatpush2.msra.mxu0 0.0
  %3142 = vmatprep.subr.mxu0 0.0
  %3143 = vmatpush2.msra.mxu0 0.0
  %3144 = vmatprep.subr.mxu0 0.0
  %3145 = vmatpush2.msra.mxu0 0.0
  %3146 = vmatprep.subr.mxu0 0.0
  %3147 = vmatpush2.msra.mxu0 0.0
  %3148 = vmatprep.subr.mxu0 0.0
  %3149 = vmatpush2.msra.mxu0 0.0
  %3150 = vmatprep.subr.mxu0 0.0
  %3151 = vmatpush2.msra.mxu0 0.0
  %3152 = vmatprep.mubr.f32.mxu0 0.0
  %3153 = vmatmul.mubr.f32.gmra.mxu0 %v3083
  %v3154 = vpop.f32.mrf.mxu0
  %v3155 = vadd.f32 0.0, %v3154
  %v3156 = vpop.f32.mrf.mxu0
  %v3157 = vadd.f32 0.0, %v3156
  %3158 = vdwg.mxu0
  %3159 = vmatprep.subr.mxu0 %v2043
  %3160 = vmatpush1.msra.mxu0 %v2042
  %3161 = vmatprep.subr.mxu0 %v2039
  %3162 = vmatpush1.msra.mxu0 %v2038
  %3163 = vmatprep.subr.mxu0 %v2035
  %3164 = vmatpush1.msra.mxu0 %v2034
  %3165 = vmatprep.subr.mxu0 %v2031
  %3166 = vmatpush1.msra.mxu0 %v2030
  %3167 = vmatprep.subr.mxu0 %v2027
  %3168 = vmatpush1.msra.mxu0 %v2026
  %3169 = vmatprep.subr.mxu0 %v2023
  %3170 = vmatpush1.msra.mxu0 %v2022
  %3171 = vmatprep.subr.mxu0 %v2019
  %3172 = vmatpush1.msra.mxu0 %v2018
  %3173 = vmatprep.subr.mxu0 %v2015
  %3174 = vmatpush1.msra.mxu0 %v2014
  %3175 = vmatprep.subr.mxu0 %v2011
  %3176 = vmatpush1.msra.mxu0 %v2010
  %3177 = vmatprep.subr.mxu0 %v2007
  %3178 = vmatpush1.msra.mxu0 %v2006
  %3179 = vmatprep.subr.mxu0 %v2003
  %3180 = vmatpush1.msra.mxu0 %v2002
  %3181 = vmatprep.subr.mxu0 %v1999
  %3182 = vmatpush1.msra.mxu0 %v1998
  %3183 = vmatprep.subr.mxu0 %v1995
  %3184 = vmatpush1.msra.mxu0 %v1994
  %3185 = vmatprep.subr.mxu0 %v1991
  %3186 = vmatpush1.msra.mxu0 %v1990
  %3187 = vmatprep.subr.mxu0 %v1987
  %3188 = vmatpush1.msra.mxu0 %v1986
  %3189 = vmatprep.subr.mxu0 %v1983
  %3190 = vmatpush1.msra.mxu0 %v1982
  %3191 = vmatprep.subr.mxu0 0.0
  %3192 = vmatpush2.msra.mxu0 0.0
  %3193 = vmatprep.subr.mxu0 0.0
  %3194 = vmatpush2.msra.mxu0 0.0
  %3195 = vmatprep.subr.mxu0 0.0
  %3196 = vmatpush2.msra.mxu0 0.0
  %3197 = vmatprep.subr.mxu0 0.0
  %3198 = vmatpush2.msra.mxu0 0.0
  %3199 = vmatprep.subr.mxu0 0.0
  %3200 = vmatpush2.msra.mxu0 0.0
  %3201 = vmatprep.subr.mxu0 0.0
  %3202 = vmatpush2.msra.mxu0 0.0
  %3203 = vmatprep.subr.mxu0 0.0
  %3204 = vmatpush2.msra.mxu0 0.0
  %3205 = vmatprep.subr.mxu0 0.0
  %3206 = vmatpush2.msra.mxu0 0.0
  %3207 = vmatprep.subr.mxu0 0.0
  %3208 = vmatpush2.msra.mxu0 0.0
  %3209 = vmatprep.subr.mxu0 0.0
  %3210 = vmatpush2.msra.mxu0 0.0
  %3211 = vmatprep.subr.mxu0 0.0
  %3212 = vmatpush2.msra.mxu0 0.0
  %3213 = vmatprep.subr.mxu0 0.0
  %3214 = vmatpush2.msra.mxu0 0.0
  %3215 = vmatprep.subr.mxu0 0.0
  %3216 = vmatpush2.msra.mxu0 0.0
  %3217 = vmatprep.subr.mxu0 0.0
  %3218 = vmatpush2.msra.mxu0 0.0
  %3219 = vmatprep.subr.mxu0 0.0
  %3220 = vmatpush2.msra.mxu0 0.0
  %3221 = vmatprep.subr.mxu0 0.0
  %3222 = vmatpush2.msra.mxu0 0.0
  %3223 = vmatprep.mubr.f32.mxu0 0.0
  %3224 = vmatmul.mubr.f32.gmra.mxu0 %v3083
  %v3225 = vpop.f32.mrf.mxu0
  %v3226 = vadd.f32 0.0, %v3225
  %v3227 = vpop.f32.mrf.mxu0
  %v3228 = vadd.f32 0.0, %v3227
  %3229 = vdwg.mxu0
  %v3230 = vadd.f32 %v3084, %v3155
  %v3231 = vadd.f32 %v3085, %v3157
  %v3232 = vadd.f32 %v3086, %v3226
  %v3233 = vadd.f32 %v3087, %v3228
  %v3234 = vxor.u32 %v3230, 2147483648
  %v3235 = vmul.f32 %v3234, 1.442695
  %v3236 = vpow.pop %v3235
  %v3237 = vadd.f32 %v3236, 1.0
  %v3238 = vrcp.pop %v3237
  %v3239 = vmul.f32 1.0, %v3238
  %v3240 = vxor.u32 %v3231, 2147483648
  %v3241 = vmul.f32 %v3240, 1.442695
  %v3242 = vpow.pop %v3241
  %v3243 = vadd.f32 %v3242, 1.0
  %v3244 = vrcp.pop %v3243
  %v3245 = vmul.f32 1.0, %v3244
  %v3246 = vtanh.pop %v3232
  %v3247 = vxor.u32 %v3233, 2147483648
  %v3248 = vmul.f32 %v3247, 1.442695
  %v3249 = vpow.pop %v3248
  %v3250 = vadd.f32 %v3249, 1.0
  %v3251 = vrcp.pop %v3250
  %v3252 = vmul.f32 1.0, %v3251
  %v3253 = vmul.f32 %v3245, %v3081
  %v3254 = vmul.f32 %v3239, %v3246
  %v3255 = vadd.f32 %v3253, %v3254
  %v3256 = vtanh.pop %v3255
  %v3257 = vmul.f32 %v3252, %v3256
  %v3258 = vld [vmem:[%s5] sm:$0xff]
  %v3259 = vld [vmem:[%s5 + $0x8] sm:$0xff]
  %v3260 = vld [vmem:[%s5 + $0x10] sm:$0xff]
  %v3261 = vld [vmem:[%s5 + $0x18] sm:$0xff]
  %v3262 = vld [vmem:[%s5 + $0x20] sm:$0xff]
  %v3263 = vld [vmem:[%s5 + $0x28] sm:$0xff]
  %v3264 = vld [vmem:[%s5 + $0x30] sm:$0xff]
  %v3265 = vld [vmem:[%s5 + $0x38] sm:$0xff]
  %v3266 = vld [vmem:[%s5 + $0x40] sm:$0xff]
  %v3267 = vld [vmem:[%s5 + $0x48] sm:$0xff]
  %v3268 = vld [vmem:[%s5 + $0x50] sm:$0xff]
  %v3269 = vld [vmem:[%s5 + $0x58] sm:$0xff]
  %v3270 = vld [vmem:[%s5 + $0x60] sm:$0xff]
  %v3271 = vld [vmem:[%s5 + $0x68] sm:$0xff]
  %v3272 = vld [vmem:[%s5 + $0x70] sm:$0xff]
  %v3273 = vld [vmem:[%s5 + $0x78] sm:$0xff]
  %v3274 = vld [vmem:[%s5 + $0x80] sm:$0xff]
  %v3275 = vld [vmem:[%s5 + $0x88] sm:$0xff]
  %v3276 = vld [vmem:[%s5 + $0x90] sm:$0xff]
  %v3277 = vld [vmem:[%s5 + $0x98] sm:$0xff]
  %v3278 = vld [vmem:[%s5 + $0xa0] sm:$0xff]
  %v3279 = vld [vmem:[%s5 + $0xa8] sm:$0xff]
  %v3280 = vld [vmem:[%s5 + $0xb0] sm:$0xff]
  %v3281 = vld [vmem:[%s5 + $0xb8] sm:$0xff]
  %v3282 = vld [vmem:[%s5 + $0xc0] sm:$0xff]
  %v3283 = vld [vmem:[%s5 + $0xc8] sm:$0xff]
  %v3284 = vld [vmem:[%s5 + $0xd0] sm:$0xff]
  %v3285 = vld [vmem:[%s5 + $0xd8] sm:$0xff]
  %v3286 = vld [vmem:[%s5 + $0xe0] sm:$0xff]
  %v3287 = vld [vmem:[%s5 + $0xe8] sm:$0xff]
  %v3288 = vld [vmem:[%s5 + $0xf0] sm:$0xff]
  %v3289 = vld [vmem:[%s5 + $0xf8] sm:$0xff]
  %v3290 = vld [vmem:[%s5 + $0x100] sm:$0xff]
  %v3291 = vld [vmem:[%s5 + $0x108] sm:$0xff]
  %v3292 = vld [vmem:[%s5 + $0x110] sm:$0xff]
  %v3293 = vld [vmem:[%s5 + $0x118] sm:$0xff]
  %v3294 = vld [vmem:[%s5 + $0x120] sm:$0xff]
  %v3295 = vld [vmem:[%s5 + $0x128] sm:$0xff]
  %v3296 = vld [vmem:[%s5 + $0x130] sm:$0xff]
  %v3297 = vld [vmem:[%s5 + $0x138] sm:$0xff]
  %v3298 = vld [vmem:[%s5 + $0x140] sm:$0xff]
  %v3299 = vld [vmem:[%s5 + $0x148] sm:$0xff]
  %v3300 = vld [vmem:[%s5 + $0x150] sm:$0xff]
  %v3301 = vld [vmem:[%s5 + $0x158] sm:$0xff]
  %v3302 = vld [vmem:[%s5 + $0x160] sm:$0xff]
  %v3303 = vld [vmem:[%s5 + $0x168] sm:$0xff]
  %v3304 = vld [vmem:[%s5 + $0x170] sm:$0xff]
  %v3305 = vld [vmem:[%s5 + $0x178] sm:$0xff]
  %v3306 = vld [vmem:[%s5 + $0x180] sm:$0xff]
  %v3307 = vld [vmem:[%s5 + $0x188] sm:$0xff]
  %v3308 = vld [vmem:[%s5 + $0x190] sm:$0xff]
  %v3309 = vld [vmem:[%s5 + $0x198] sm:$0xff]
  %v3310 = vld [vmem:[%s5 + $0x1a0] sm:$0xff]
  %v3311 = vld [vmem:[%s5 + $0x1a8] sm:$0xff]
  %v3312 = vld [vmem:[%s5 + $0x1b0] sm:$0xff]
  %v3313 = vld [vmem:[%s5 + $0x1b8] sm:$0xff]
  %v3314 = vld [vmem:[%s5 + $0x1c0] sm:$0xff]
  %v3315 = vld [vmem:[%s5 + $0x1c8] sm:$0xff]
  %v3316 = vld [vmem:[%s5 + $0x1d0] sm:$0xff]
  %v3317 = vld [vmem:[%s5 + $0x1d8] sm:$0xff]
  %v3318 = vld [vmem:[%s5 + $0x1e0] sm:$0xff]
  %v3319 = vld [vmem:[%s5 + $0x1e8] sm:$0xff]
  %v3320 = vld [vmem:[%s5 + $0x1f0] sm:$0xff]
  %v3321 = vld [vmem:[%s5 + $0x1f8] sm:$0xff]
  %v3322 = vld [vmem:[%s5 + $0x200] sm:$0xff]
  %v3323 = vld [vmem:[%s5 + $0x208] sm:$0xff]
  %v3324 = vld [vmem:[%s5 + $0x210] sm:$0xff]
  %v3325 = vld [vmem:[%s5 + $0x218] sm:$0xff]
  %v3326 = vld [vmem:[%s5 + $0x220] sm:$0xff]
  %v3327 = vld [vmem:[%s5 + $0x228] sm:$0xff]
  %v3328 = vld [vmem:[%s5 + $0x230] sm:$0xff]
  %v3329 = vld [vmem:[%s5 + $0x238] sm:$0xff]
  %v3330 = vld [vmem:[%s5 + $0x240] sm:$0xff]
  %v3331 = vld [vmem:[%s5 + $0x248] sm:$0xff]
  %v3332 = vld [vmem:[%s5 + $0x250] sm:$0xff]
  %v3333 = vld [vmem:[%s5 + $0x258] sm:$0xff]
  %v3334 = vld [vmem:[%s5 + $0x260] sm:$0xff]
  %v3335 = vld [vmem:[%s5 + $0x268] sm:$0xff]
  %v3336 = vld [vmem:[%s5 + $0x270] sm:$0xff]
  %v3337 = vld [vmem:[%s5 + $0x278] sm:$0xff]
  %v3338 = vld [vmem:[%s5 + $0x280] sm:$0xff]
  %v3339 = vld [vmem:[%s5 + $0x288] sm:$0xff]
  %v3340 = vld [vmem:[%s5 + $0x290] sm:$0xff]
  %v3341 = vld [vmem:[%s5 + $0x298] sm:$0xff]
  %v3342 = vld [vmem:[%s5 + $0x2a0] sm:$0xff]
  %v3343 = vld [vmem:[%s5 + $0x2a8] sm:$0xff]
  %v3344 = vld [vmem:[%s5 + $0x2b0] sm:$0xff]
  %v3345 = vld [vmem:[%s5 + $0x2b8] sm:$0xff]
  %v3346 = vld [vmem:[%s5 + $0x2c0] sm:$0xff]
  %v3347 = vld [vmem:[%s5 + $0x2c8] sm:$0xff]
  %v3348 = vld [vmem:[%s5 + $0x2d0] sm:$0xff]
  %v3349 = vld [vmem:[%s5 + $0x2d8] sm:$0xff]
  %v3350 = vld [vmem:[%s5 + $0x2e0] sm:$0xff]
  %v3351 = vld [vmem:[%s5 + $0x2e8] sm:$0xff]
  %v3352 = vld [vmem:[%s5 + $0x2f0] sm:$0xff]
  %v3353 = vld [vmem:[%s5 + $0x2f8] sm:$0xff]
  %v3354 = vld [vmem:[%s5 + $0x300] sm:$0xff]
  %v3355 = vld [vmem:[%s5 + $0x308] sm:$0xff]
  %v3356 = vld [vmem:[%s5 + $0x310] sm:$0xff]
  %v3357 = vld [vmem:[%s5 + $0x318] sm:$0xff]
  %v3358 = vld [vmem:[%s5 + $0x320] sm:$0xff]
  %v3359 = vld [vmem:[%s5 + $0x328] sm:$0xff]
  %v3360 = vld [vmem:[%s5 + $0x330] sm:$0xff]
  %v3361 = vld [vmem:[%s5 + $0x338] sm:$0xff]
  %v3362 = vld [vmem:[%s5 + $0x340] sm:$0xff]
  %v3363 = vld [vmem:[%s5 + $0x348] sm:$0xff]
  %v3364 = vld [vmem:[%s5 + $0x350] sm:$0xff]
  %v3365 = vld [vmem:[%s5 + $0x358] sm:$0xff]
  %v3366 = vld [vmem:[%s5 + $0x360] sm:$0xff]
  %v3367 = vld [vmem:[%s5 + $0x368] sm:$0xff]
  %v3368 = vld [vmem:[%s5 + $0x370] sm:$0xff]
  %v3369 = vld [vmem:[%s5 + $0x378] sm:$0xff]
  %v3370 = vld [vmem:[%s5 + $0x380] sm:$0xff]
  %v3371 = vld [vmem:[%s5 + $0x388] sm:$0xff]
  %v3372 = vld [vmem:[%s5 + $0x390] sm:$0xff]
  %v3373 = vld [vmem:[%s5 + $0x398] sm:$0xff]
  %v3374 = vld [vmem:[%s5 + $0x3a0] sm:$0xff]
  %v3375 = vld [vmem:[%s5 + $0x3a8] sm:$0xff]
  %v3376 = vld [vmem:[%s5 + $0x3b0] sm:$0xff]
  %v3377 = vld [vmem:[%s5 + $0x3b8] sm:$0xff]
  %v3378 = vld [vmem:[%s5 + $0x3c0] sm:$0xff]
  %v3379 = vld [vmem:[%s5 + $0x3c8] sm:$0xff]
  %v3380 = vld [vmem:[%s5 + $0x3d0] sm:$0xff]
  %v3381 = vld [vmem:[%s5 + $0x3d8] sm:$0xff]
  %v3382 = vld [vmem:[%s5 + $0x3e0] sm:$0xff]
  %v3383 = vld [vmem:[%s5 + $0x3e8] sm:$0xff]
  %v3384 = vld [vmem:[%s5 + $0x3f0] sm:$0xff]
  %v3385 = vld [vmem:[%s5 + $0x3f8] sm:$0xff]
  %3386 = vmatprep.subr.mxu0 %v3383
  %3387 = vmatpush1.msra.mxu0 %v3382
  %3388 = vmatprep.subr.mxu0 %v3379
  %3389 = vmatpush1.msra.mxu0 %v3378
  %3390 = vmatprep.subr.mxu0 %v3375
  %3391 = vmatpush1.msra.mxu0 %v3374
  %3392 = vmatprep.subr.mxu0 %v3371
  %3393 = vmatpush1.msra.mxu0 %v3370
  %3394 = vmatprep.subr.mxu0 %v3367
  %3395 = vmatpush1.msra.mxu0 %v3366
  %3396 = vmatprep.subr.mxu0 %v3363
  %3397 = vmatpush1.msra.mxu0 %v3362
  %3398 = vmatprep.subr.mxu0 %v3359
  %3399 = vmatpush1.msra.mxu0 %v3358
  %3400 = vmatprep.subr.mxu0 %v3355
  %3401 = vmatpush1.msra.mxu0 %v3354
  %3402 = vmatprep.subr.mxu0 %v3351
  %3403 = vmatpush1.msra.mxu0 %v3350
  %3404 = vmatprep.subr.mxu0 %v3347
  %3405 = vmatpush1.msra.mxu0 %v3346
  %3406 = vmatprep.subr.mxu0 %v3343
  %3407 = vmatpush1.msra.mxu0 %v3342
  %3408 = vmatprep.subr.mxu0 %v3339
  %3409 = vmatpush1.msra.mxu0 %v3338
  %3410 = vmatprep.subr.mxu0 %v3335
  %3411 = vmatpush1.msra.mxu0 %v3334
  %3412 = vmatprep.subr.mxu0 %v3331
  %3413 = vmatpush1.msra.mxu0 %v3330
  %3414 = vmatprep.subr.mxu0 %v3327
  %3415 = vmatpush1.msra.mxu0 %v3326
  %3416 = vmatprep.subr.mxu0 %v3323
  %3417 = vmatpush1.msra.mxu0 %v3322
  %3418 = vmatprep.subr.mxu0 0.0
  %3419 = vmatpush2.msra.mxu0 0.0
  %3420 = vmatprep.subr.mxu0 0.0
  %3421 = vmatpush2.msra.mxu0 0.0
  %3422 = vmatprep.subr.mxu0 0.0
  %3423 = vmatpush2.msra.mxu0 0.0
  %3424 = vmatprep.subr.mxu0 0.0
  %3425 = vmatpush2.msra.mxu0 0.0
  %3426 = vmatprep.subr.mxu0 0.0
  %3427 = vmatpush2.msra.mxu0 0.0
  %3428 = vmatprep.subr.mxu0 0.0
  %3429 = vmatpush2.msra.mxu0 0.0
  %3430 = vmatprep.subr.mxu0 0.0
  %3431 = vmatpush2.msra.mxu0 0.0
  %3432 = vmatprep.subr.mxu0 0.0
  %3433 = vmatpush2.msra.mxu0 0.0
  %3434 = vmatprep.subr.mxu0 0.0
  %3435 = vmatpush2.msra.mxu0 0.0
  %3436 = vmatprep.subr.mxu0 0.0
  %3437 = vmatpush2.msra.mxu0 0.0
  %3438 = vmatprep.subr.mxu0 0.0
  %3439 = vmatpush2.msra.mxu0 0.0
  %3440 = vmatprep.subr.mxu0 0.0
  %3441 = vmatpush2.msra.mxu0 0.0
  %3442 = vmatprep.subr.mxu0 0.0
  %3443 = vmatpush2.msra.mxu0 0.0
  %3444 = vmatprep.subr.mxu0 0.0
  %3445 = vmatpush2.msra.mxu0 0.0
  %3446 = vmatprep.subr.mxu0 0.0
  %3447 = vmatpush2.msra.mxu0 0.0
  %3448 = vmatprep.subr.mxu0 0.0
  %3449 = vmatpush2.msra.mxu0 0.0
  %3450 = vmatprep.mubr.f32.mxu0 0.0
  %3451 = vmatmul.mubr.f32.gmra.mxu0 %v3257
  %v3452 = vpop.f32.mrf.mxu0
  %v3453 = vadd.f32 0.0, %v3452
  %v3454 = vpop.f32.mrf.mxu0
  %3455 = vdwg.mxu0
  %3456 = vmatprep.subr.mxu0 %v3385
  %3457 = vmatpush1.msra.mxu0 %v3384
  %3458 = vmatprep.subr.mxu0 %v3381
  %3459 = vmatpush1.msra.mxu0 %v3380
  %3460 = vmatprep.subr.mxu0 %v3377
  %3461 = vmatpush1.msra.mxu0 %v3376
  %3462 = vmatprep.subr.mxu0 %v3373
  %3463 = vmatpush1.msra.mxu0 %v3372
  %3464 = vmatprep.subr.mxu0 %v3369
  %3465 = vmatpush1.msra.mxu0 %v3368
  %3466 = vmatprep.subr.mxu0 %v3365
  %3467 = vmatpush1.msra.mxu0 %v3364
  %3468 = vmatprep.subr.mxu0 %v3361
  %3469 = vmatpush1.msra.mxu0 %v3360
  %3470 = vmatprep.subr.mxu0 %v3357
  %3471 = vmatpush1.msra.mxu0 %v3356
  %3472 = vmatprep.subr.mxu0 %v3353
  %3473 = vmatpush1.msra.mxu0 %v3352
  %3474 = vmatprep.subr.mxu0 %v3349
  %3475 = vmatpush1.msra.mxu0 %v3348
  %3476 = vmatprep.subr.mxu0 %v3345
  %3477 = vmatpush1.msra.mxu0 %v3344
  %3478 = vmatprep.subr.mxu0 %v3341
  %3479 = vmatpush1.msra.mxu0 %v3340
  %3480 = vmatprep.subr.mxu0 %v3337
  %3481 = vmatpush1.msra.mxu0 %v3336
  %3482 = vmatprep.subr.mxu0 %v3333
  %3483 = vmatpush1.msra.mxu0 %v3332
  %3484 = vmatprep.subr.mxu0 %v3329
  %3485 = vmatpush1.msra.mxu0 %v3328
  %3486 = vmatprep.subr.mxu0 %v3325
  %3487 = vmatpush1.msra.mxu0 %v3324
  %3488 = vmatprep.subr.mxu0 0.0
  %3489 = vmatpush2.msra.mxu0 0.0
  %3490 = vmatprep.subr.mxu0 0.0
  %3491 = vmatpush2.msra.mxu0 0.0
  %3492 = vmatprep.subr.mxu0 0.0
  %3493 = vmatpush2.msra.mxu0 0.0
  %3494 = vmatprep.subr.mxu0 0.0
  %3495 = vmatpush2.msra.mxu0 0.0
  %3496 = vmatprep.subr.mxu0 0.0
  %3497 = vmatpush2.msra.mxu0 0.0
  %3498 = vmatprep.subr.mxu0 0.0
  %3499 = vmatpush2.msra.mxu0 0.0
  %3500 = vmatprep.subr.mxu0 0.0
  %3501 = vmatpush2.msra.mxu0 0.0
  %3502 = vmatprep.subr.mxu0 0.0
  %3503 = vmatpush2.msra.mxu0 0.0
  %3504 = vmatprep.subr.mxu0 0.0
  %3505 = vmatpush2.msra.mxu0 0.0
  %3506 = vmatprep.subr.mxu0 0.0
  %3507 = vmatpush2.msra.mxu0 0.0
  %3508 = vmatprep.subr.mxu0 0.0
  %3509 = vmatpush2.msra.mxu0 0.0
  %3510 = vmatprep.subr.mxu0 0.0
  %3511 = vmatpush2.msra.mxu0 0.0
  %3512 = vmatprep.subr.mxu0 0.0
  %3513 = vmatpush2.msra.mxu0 0.0
  %3514 = vmatprep.subr.mxu0 0.0
  %3515 = vmatpush2.msra.mxu0 0.0
  %3516 = vmatprep.subr.mxu0 0.0
  %3517 = vmatpush2.msra.mxu0 0.0
  %3518 = vmatprep.subr.mxu0 0.0
  %3519 = vmatpush2.msra.mxu0 0.0
  %3520 = vmatprep.mubr.f32.mxu0 0.0
  %3521 = vmatmul.mubr.f32.gmra.mxu0 %v3257
  %v3522 = vpop.f32.mrf.mxu0
  %v3523 = vadd.f32 0.0, %v3522
  %v3524 = vpop.f32.mrf.mxu0
  %v3525 = vadd.f32 0.0, %v3524
  %3526 = vdwg.mxu0
  %3527 = vmatprep.subr.mxu0 %v3319
  %3528 = vmatpush1.msra.mxu0 %v3318
  %3529 = vmatprep.subr.mxu0 %v3315
  %3530 = vmatpush1.msra.mxu0 %v3314
  %3531 = vmatprep.subr.mxu0 %v3311
  %3532 = vmatpush1.msra.mxu0 %v3310
  %3533 = vmatprep.subr.mxu0 %v3307
  %3534 = vmatpush1.msra.mxu0 %v3306
  %3535 = vmatprep.subr.mxu0 %v3303
  %3536 = vmatpush1.msra.mxu0 %v3302
  %3537 = vmatprep.subr.mxu0 %v3299
  %3538 = vmatpush1.msra.mxu0 %v3298
  %3539 = vmatprep.subr.mxu0 %v3295
  %3540 = vmatpush1.msra.mxu0 %v3294
  %3541 = vmatprep.subr.mxu0 %v3291
  %3542 = vmatpush1.msra.mxu0 %v3290
  %3543 = vmatprep.subr.mxu0 %v3287
  %3544 = vmatpush1.msra.mxu0 %v3286
  %3545 = vmatprep.subr.mxu0 %v3283
  %3546 = vmatpush1.msra.mxu0 %v3282
  %3547 = vmatprep.subr.mxu0 %v3279
  %3548 = vmatpush1.msra.mxu0 %v3278
  %3549 = vmatprep.subr.mxu0 %v3275
  %3550 = vmatpush1.msra.mxu0 %v3274
  %3551 = vmatprep.subr.mxu0 %v3271
  %3552 = vmatpush1.msra.mxu0 %v3270
  %3553 = vmatprep.subr.mxu0 %v3267
  %3554 = vmatpush1.msra.mxu0 %v3266
  %3555 = vmatprep.subr.mxu0 %v3263
  %3556 = vmatpush1.msra.mxu0 %v3262
  %3557 = vmatprep.subr.mxu0 %v3259
  %3558 = vmatpush1.msra.mxu0 %v3258
  %3559 = vmatprep.subr.mxu0 0.0
  %3560 = vmatpush2.msra.mxu0 0.0
  %3561 = vmatprep.subr.mxu0 0.0
  %3562 = vmatpush2.msra.mxu0 0.0
  %3563 = vmatprep.subr.mxu0 0.0
  %3564 = vmatpush2.msra.mxu0 0.0
  %3565 = vmatprep.subr.mxu0 0.0
  %3566 = vmatpush2.msra.mxu0 0.0
  %3567 = vmatprep.subr.mxu0 0.0
  %3568 = vmatpush2.msra.mxu0 0.0
  %3569 = vmatprep.subr.mxu0 0.0
  %3570 = vmatpush2.msra.mxu0 0.0
  %3571 = vmatprep.subr.mxu0 0.0
  %3572 = vmatpush2.msra.mxu0 0.0
  %3573 = vmatprep.subr.mxu0 0.0
  %3574 = vmatpush2.msra.mxu0 0.0
  %3575 = vmatprep.subr.mxu0 0.0
  %3576 = vmatpush2.msra.mxu0 0.0
  %3577 = vmatprep.subr.mxu0 0.0
  %3578 = vmatpush2.msra.mxu0 0.0
  %3579 = vmatprep.subr.mxu0 0.0
  %3580 = vmatpush2.msra.mxu0 0.0
  %3581 = vmatprep.subr.mxu0 0.0
  %3582 = vmatpush2.msra.mxu0 0.0
  %3583 = vmatprep.subr.mxu0 0.0
  %3584 = vmatpush2.msra.mxu0 0.0
  %3585 = vmatprep.subr.mxu0 0.0
  %3586 = vmatpush2.msra.mxu0 0.0
  %3587 = vmatprep.subr.mxu0 0.0
  %3588 = vmatpush2.msra.mxu0 0.0
  %3589 = vmatprep.subr.mxu0 0.0
  %3590 = vmatpush2.msra.mxu0 0.0
  %3591 = vmatprep.mubr.f32.mxu0 0.0
  %3592 = vmatmul.mubr.f32.gmra.mxu0 %v674
  %v3593 = vpop.f32.mrf.mxu0
  %v3594 = vadd.f32 %v3453, %v3593
  %v3595 = vpop.f32.mrf.mxu0
  %3596 = vdwg.mxu0
  %3597 = vmatprep.subr.mxu0 %v3321
  %3598 = vmatpush1.msra.mxu0 %v3320
  %3599 = vmatprep.subr.mxu0 %v3317
  %3600 = vmatpush1.msra.mxu0 %v3316
  %3601 = vmatprep.subr.mxu0 %v3313
  %3602 = vmatpush1.msra.mxu0 %v3312
  %3603 = vmatprep.subr.mxu0 %v3309
  %3604 = vmatpush1.msra.mxu0 %v3308
  %3605 = vmatprep.subr.mxu0 %v3305
  %3606 = vmatpush1.msra.mxu0 %v3304
  %3607 = vmatprep.subr.mxu0 %v3301
  %3608 = vmatpush1.msra.mxu0 %v3300
  %3609 = vmatprep.subr.mxu0 %v3297
  %3610 = vmatpush1.msra.mxu0 %v3296
  %3611 = vmatprep.subr.mxu0 %v3293
  %3612 = vmatpush1.msra.mxu0 %v3292
  %3613 = vmatprep.subr.mxu0 %v3289
  %3614 = vmatpush1.msra.mxu0 %v3288
  %3615 = vmatprep.subr.mxu0 %v3285
  %3616 = vmatpush1.msra.mxu0 %v3284
  %3617 = vmatprep.subr.mxu0 %v3281
  %3618 = vmatpush1.msra.mxu0 %v3280
  %3619 = vmatprep.subr.mxu0 %v3277
  %3620 = vmatpush1.msra.mxu0 %v3276
  %3621 = vmatprep.subr.mxu0 %v3273
  %3622 = vmatpush1.msra.mxu0 %v3272
  %3623 = vmatprep.subr.mxu0 %v3269
  %3624 = vmatpush1.msra.mxu0 %v3268
  %3625 = vmatprep.subr.mxu0 %v3265
  %3626 = vmatpush1.msra.mxu0 %v3264
  %3627 = vmatprep.subr.mxu0 %v3261
  %3628 = vmatpush1.msra.mxu0 %v3260
  %3629 = vmatprep.subr.mxu0 0.0
  %3630 = vmatpush2.msra.mxu0 0.0
  %3631 = vmatprep.subr.mxu0 0.0
  %3632 = vmatpush2.msra.mxu0 0.0
  %3633 = vmatprep.subr.mxu0 0.0
  %3634 = vmatpush2.msra.mxu0 0.0
  %3635 = vmatprep.subr.mxu0 0.0
  %3636 = vmatpush2.msra.mxu0 0.0
  %3637 = vmatprep.subr.mxu0 0.0
  %3638 = vmatpush2.msra.mxu0 0.0
  %3639 = vmatprep.subr.mxu0 0.0
  %3640 = vmatpush2.msra.mxu0 0.0
  %3641 = vmatprep.subr.mxu0 0.0
  %3642 = vmatpush2.msra.mxu0 0.0
  %3643 = vmatprep.subr.mxu0 0.0
  %3644 = vmatpush2.msra.mxu0 0.0
  %3645 = vmatprep.subr.mxu0 0.0
  %3646 = vmatpush2.msra.mxu0 0.0
  %3647 = vmatprep.subr.mxu0 0.0
  %3648 = vmatpush2.msra.mxu0 0.0
  %3649 = vmatprep.subr.mxu0 0.0
  %3650 = vmatpush2.msra.mxu0 0.0
  %3651 = vmatprep.subr.mxu0 0.0
  %3652 = vmatpush2.msra.mxu0 0.0
  %3653 = vmatprep.subr.mxu0 0.0
  %3654 = vmatpush2.msra.mxu0 0.0
  %3655 = vmatprep.subr.mxu0 0.0
  %3656 = vmatpush2.msra.mxu0 0.0
  %3657 = vmatprep.subr.mxu0 0.0
  %3658 = vmatpush2.msra.mxu0 0.0
  %3659 = vmatprep.subr.mxu0 0.0
  %3660 = vmatpush2.msra.mxu0 0.0
  %3661 = vmatprep.mubr.f32.mxu0 0.0
  %3662 = vmatmul.mubr.f32.gmra.mxu0 %v674
  %v3663 = vpop.f32.mrf.mxu0
  %v3664 = vadd.f32 %v3523, %v3663
  %v3665 = vpop.f32.mrf.mxu0
  %v3666 = vadd.f32 %v3525, %v3665
  %3667 = vdwg.mxu0
  %v3668 = vld [vmem:[%s6] sm:$0xf]
  %v3670 = vlaneseq
  %v3671 = vshrl.u32 %v3670, 7
  %v3672 = vsub.s32 0, %v3671
  %v3673 = vrot.slane %v3668, %v3672
  %v3674 = vlaneseq
  %v3675 = vshrl.u32 %v3674, 7
  %v3676 = vsub.s32 2, %v3675
  %v3677 = vrot.slane %v3668, %v3676
  %v3678 = vlaneseq
  %v3679 = vshrl.u32 %v3678, 7
  %v3680 = vsub.s32 3, %v3679
  %v3681 = vrot.slane %v3668, %v3680
  %v3685 = vadd.f32 %v3594, %v3673
  %v3686 = vadd.f32 %v3664, %v3677
  %v3687 = vadd.f32 %v3666, %v3681
  %v3688 = vxor.u32 %v3685, 2147483648
  %v3689 = vmul.f32 %v3688, 1.442695
  %v3690 = vpow.pop %v3689
  %v3691 = vadd.f32 %v3690, 1.0
  %v3692 = vrcp.pop %v3691
  %v3693 = vmul.f32 1.0, %v3692
  %v3694 = vtanh.pop %v3686
  %v3695 = vxor.u32 %v3687, 2147483648
  %v3696 = vmul.f32 %v3695, 1.442695
  %v3697 = vpow.pop %v3696
  %v3698 = vadd.f32 %v3697, 1.0
  %v3699 = vrcp.pop %v3698
  %v3700 = vmul.f32 1.0, %v3699
  %v3701 = vmul.f32 %v3693, %v3694
  %v3702 = vtanh.pop %v3701
  %v3703 = vmul.f32 %v3700, %v3702
  %v3704 = vld [vmem:[%s7] sm:$0xff]
  %v3705 = vld [vmem:[%s7 + $0x8] sm:$0xff]
  %v3706 = vld [vmem:[%s7 + $0x10] sm:$0xff]
  %v3707 = vld [vmem:[%s7 + $0x18] sm:$0xff]
  %v3708 = vld [vmem:[%s7 + $0x20] sm:$0xff]
  %v3709 = vld [vmem:[%s7 + $0x28] sm:$0xff]
  %v3710 = vld [vmem:[%s7 + $0x30] sm:$0xff]
  %v3711 = vld [vmem:[%s7 + $0x38] sm:$0xff]
  %v3712 = vld [vmem:[%s7 + $0x40] sm:$0xff]
  %v3713 = vld [vmem:[%s7 + $0x48] sm:$0xff]
  %v3714 = vld [vmem:[%s7 + $0x50] sm:$0xff]
  %v3715 = vld [vmem:[%s7 + $0x58] sm:$0xff]
  %v3716 = vld [vmem:[%s7 + $0x60] sm:$0xff]
  %v3717 = vld [vmem:[%s7 + $0x68] sm:$0xff]
  %v3718 = vld [vmem:[%s7 + $0x70] sm:$0xff]
  %v3719 = vld [vmem:[%s7 + $0x78] sm:$0xff]
  %v3720 = vld [vmem:[%s7 + $0x80] sm:$0xff]
  %v3721 = vld [vmem:[%s7 + $0x88] sm:$0xff]
  %v3722 = vld [vmem:[%s7 + $0x90] sm:$0xff]
  %v3723 = vld [vmem:[%s7 + $0x98] sm:$0xff]
  %v3724 = vld [vmem:[%s7 + $0xa0] sm:$0xff]
  %v3725 = vld [vmem:[%s7 + $0xa8] sm:$0xff]
  %v3726 = vld [vmem:[%s7 + $0xb0] sm:$0xff]
  %v3727 = vld [vmem:[%s7 + $0xb8] sm:$0xff]
  %v3728 = vld [vmem:[%s7 + $0xc0] sm:$0xff]
  %v3729 = vld [vmem:[%s7 + $0xc8] sm:$0xff]
  %v3730 = vld [vmem:[%s7 + $0xd0] sm:$0xff]
  %v3731 = vld [vmem:[%s7 + $0xd8] sm:$0xff]
  %v3732 = vld [vmem:[%s7 + $0xe0] sm:$0xff]
  %v3733 = vld [vmem:[%s7 + $0xe8] sm:$0xff]
  %v3734 = vld [vmem:[%s7 + $0xf0] sm:$0xff]
  %v3735 = vld [vmem:[%s7 + $0xf8] sm:$0xff]
  %v3736 = vld [vmem:[%s7 + $0x100] sm:$0xff]
  %v3737 = vld [vmem:[%s7 + $0x108] sm:$0xff]
  %v3738 = vld [vmem:[%s7 + $0x110] sm:$0xff]
  %v3739 = vld [vmem:[%s7 + $0x118] sm:$0xff]
  %v3740 = vld [vmem:[%s7 + $0x120] sm:$0xff]
  %v3741 = vld [vmem:[%s7 + $0x128] sm:$0xff]
  %v3742 = vld [vmem:[%s7 + $0x130] sm:$0xff]
  %v3743 = vld [vmem:[%s7 + $0x138] sm:$0xff]
  %v3744 = vld [vmem:[%s7 + $0x140] sm:$0xff]
  %v3745 = vld [vmem:[%s7 + $0x148] sm:$0xff]
  %v3746 = vld [vmem:[%s7 + $0x150] sm:$0xff]
  %v3747 = vld [vmem:[%s7 + $0x158] sm:$0xff]
  %v3748 = vld [vmem:[%s7 + $0x160] sm:$0xff]
  %v3749 = vld [vmem:[%s7 + $0x168] sm:$0xff]
  %v3750 = vld [vmem:[%s7 + $0x170] sm:$0xff]
  %v3751 = vld [vmem:[%s7 + $0x178] sm:$0xff]
  %v3752 = vld [vmem:[%s7 + $0x180] sm:$0xff]
  %v3753 = vld [vmem:[%s7 + $0x188] sm:$0xff]
  %v3754 = vld [vmem:[%s7 + $0x190] sm:$0xff]
  %v3755 = vld [vmem:[%s7 + $0x198] sm:$0xff]
  %v3756 = vld [vmem:[%s7 + $0x1a0] sm:$0xff]
  %v3757 = vld [vmem:[%s7 + $0x1a8] sm:$0xff]
  %v3758 = vld [vmem:[%s7 + $0x1b0] sm:$0xff]
  %v3759 = vld [vmem:[%s7 + $0x1b8] sm:$0xff]
  %v3760 = vld [vmem:[%s7 + $0x1c0] sm:$0xff]
  %v3761 = vld [vmem:[%s7 + $0x1c8] sm:$0xff]
  %v3762 = vld [vmem:[%s7 + $0x1d0] sm:$0xff]
  %v3763 = vld [vmem:[%s7 + $0x1d8] sm:$0xff]
  %v3764 = vld [vmem:[%s7 + $0x1e0] sm:$0xff]
  %v3765 = vld [vmem:[%s7 + $0x1e8] sm:$0xff]
  %v3766 = vld [vmem:[%s7 + $0x1f0] sm:$0xff]
  %v3767 = vld [vmem:[%s7 + $0x1f8] sm:$0xff]
  %v3768 = vld [vmem:[%s7 + $0x200] sm:$0xff]
  %v3769 = vld [vmem:[%s7 + $0x208] sm:$0xff]
  %v3770 = vld [vmem:[%s7 + $0x210] sm:$0xff]
  %v3771 = vld [vmem:[%s7 + $0x218] sm:$0xff]
  %v3772 = vld [vmem:[%s7 + $0x220] sm:$0xff]
  %v3773 = vld [vmem:[%s7 + $0x228] sm:$0xff]
  %v3774 = vld [vmem:[%s7 + $0x230] sm:$0xff]
  %v3775 = vld [vmem:[%s7 + $0x238] sm:$0xff]
  %v3776 = vld [vmem:[%s7 + $0x240] sm:$0xff]
  %v3777 = vld [vmem:[%s7 + $0x248] sm:$0xff]
  %v3778 = vld [vmem:[%s7 + $0x250] sm:$0xff]
  %v3779 = vld [vmem:[%s7 + $0x258] sm:$0xff]
  %v3780 = vld [vmem:[%s7 + $0x260] sm:$0xff]
  %v3781 = vld [vmem:[%s7 + $0x268] sm:$0xff]
  %v3782 = vld [vmem:[%s7 + $0x270] sm:$0xff]
  %v3783 = vld [vmem:[%s7 + $0x278] sm:$0xff]
  %v3784 = vld [vmem:[%s7 + $0x280] sm:$0xff]
  %v3785 = vld [vmem:[%s7 + $0x288] sm:$0xff]
  %v3786 = vld [vmem:[%s7 + $0x290] sm:$0xff]
  %v3787 = vld [vmem:[%s7 + $0x298] sm:$0xff]
  %v3788 = vld [vmem:[%s7 + $0x2a0] sm:$0xff]
  %v3789 = vld [vmem:[%s7 + $0x2a8] sm:$0xff]
  %v3790 = vld [vmem:[%s7 + $0x2b0] sm:$0xff]
  %v3791 = vld [vmem:[%s7 + $0x2b8] sm:$0xff]
  %v3792 = vld [vmem:[%s7 + $0x2c0] sm:$0xff]
  %v3793 = vld [vmem:[%s7 + $0x2c8] sm:$0xff]
  %v3794 = vld [vmem:[%s7 + $0x2d0] sm:$0xff]
  %v3795 = vld [vmem:[%s7 + $0x2d8] sm:$0xff]
  %v3796 = vld [vmem:[%s7 + $0x2e0] sm:$0xff]
  %v3797 = vld [vmem:[%s7 + $0x2e8] sm:$0xff]
  %v3798 = vld [vmem:[%s7 + $0x2f0] sm:$0xff]
  %v3799 = vld [vmem:[%s7 + $0x2f8] sm:$0xff]
  %v3800 = vld [vmem:[%s7 + $0x300] sm:$0xff]
  %v3801 = vld [vmem:[%s7 + $0x308] sm:$0xff]
  %v3802 = vld [vmem:[%s7 + $0x310] sm:$0xff]
  %v3803 = vld [vmem:[%s7 + $0x318] sm:$0xff]
  %v3804 = vld [vmem:[%s7 + $0x320] sm:$0xff]
  %v3805 = vld [vmem:[%s7 + $0x328] sm:$0xff]
  %v3806 = vld [vmem:[%s7 + $0x330] sm:$0xff]
  %v3807 = vld [vmem:[%s7 + $0x338] sm:$0xff]
  %v3808 = vld [vmem:[%s7 + $0x340] sm:$0xff]
  %v3809 = vld [vmem:[%s7 + $0x348] sm:$0xff]
  %v3810 = vld [vmem:[%s7 + $0x350] sm:$0xff]
  %v3811 = vld [vmem:[%s7 + $0x358] sm:$0xff]
  %v3812 = vld [vmem:[%s7 + $0x360] sm:$0xff]
  %v3813 = vld [vmem:[%s7 + $0x368] sm:$0xff]
  %v3814 = vld [vmem:[%s7 + $0x370] sm:$0xff]
  %v3815 = vld [vmem:[%s7 + $0x378] sm:$0xff]
  %v3816 = vld [vmem:[%s7 + $0x380] sm:$0xff]
  %v3817 = vld [vmem:[%s7 + $0x388] sm:$0xff]
  %v3818 = vld [vmem:[%s7 + $0x390] sm:$0xff]
  %v3819 = vld [vmem:[%s7 + $0x398] sm:$0xff]
  %v3820 = vld [vmem:[%s7 + $0x3a0] sm:$0xff]
  %v3821 = vld [vmem:[%s7 + $0x3a8] sm:$0xff]
  %v3822 = vld [vmem:[%s7 + $0x3b0] sm:$0xff]
  %v3823 = vld [vmem:[%s7 + $0x3b8] sm:$0xff]
  %v3824 = vld [vmem:[%s7 + $0x3c0] sm:$0xff]
  %v3825 = vld [vmem:[%s7 + $0x3c8] sm:$0xff]
  %v3826 = vld [vmem:[%s7 + $0x3d0] sm:$0xff]
  %v3827 = vld [vmem:[%s7 + $0x3d8] sm:$0xff]
  %v3828 = vld [vmem:[%s7 + $0x3e0] sm:$0xff]
  %v3829 = vld [vmem:[%s7 + $0x3e8] sm:$0xff]
  %v3830 = vld [vmem:[%s7 + $0x3f0] sm:$0xff]
  %v3831 = vld [vmem:[%s7 + $0x3f8] sm:$0xff]
  %3832 = vmatprep.subr.mxu0 %v3829
  %3833 = vmatpush1.msra.mxu0 %v3828
  %3834 = vmatprep.subr.mxu0 %v3825
  %3835 = vmatpush1.msra.mxu0 %v3824
  %3836 = vmatprep.subr.mxu0 %v3821
  %3837 = vmatpush1.msra.mxu0 %v3820
  %3838 = vmatprep.subr.mxu0 %v3817
  %3839 = vmatpush1.msra.mxu0 %v3816
  %3840 = vmatprep.subr.mxu0 %v3813
  %3841 = vmatpush1.msra.mxu0 %v3812
  %3842 = vmatprep.subr.mxu0 %v3809
  %3843 = vmatpush1.msra.mxu0 %v3808
  %3844 = vmatprep.subr.mxu0 %v3805
  %3845 = vmatpush1.msra.mxu0 %v3804
  %3846 = vmatprep.subr.mxu0 %v3801
  %3847 = vmatpush1.msra.mxu0 %v3800
  %3848 = vmatprep.subr.mxu0 %v3797
  %3849 = vmatpush1.msra.mxu0 %v3796
  %3850 = vmatprep.subr.mxu0 %v3793
  %3851 = vmatpush1.msra.mxu0 %v3792
  %3852 = vmatprep.subr.mxu0 %v3789
  %3853 = vmatpush1.msra.mxu0 %v3788
  %3854 = vmatprep.subr.mxu0 %v3785
  %3855 = vmatpush1.msra.mxu0 %v3784
  %3856 = vmatprep.subr.mxu0 %v3781
  %3857 = vmatpush1.msra.mxu0 %v3780
  %3858 = vmatprep.subr.mxu0 %v3777
  %3859 = vmatpush1.msra.mxu0 %v3776
  %3860 = vmatprep.subr.mxu0 %v3773
  %3861 = vmatpush1.msra.mxu0 %v3772
  %3862 = vmatprep.subr.mxu0 %v3769
  %3863 = vmatpush1.msra.mxu0 %v3768
  %3864 = vmatprep.subr.mxu0 0.0
  %3865 = vmatpush2.msra.mxu0 0.0
  %3866 = vmatprep.subr.mxu0 0.0
  %3867 = vmatpush2.msra.mxu0 0.0
  %3868 = vmatprep.subr.mxu0 0.0
  %3869 = vmatpush2.msra.mxu0 0.0
  %3870 = vmatprep.subr.mxu0 0.0
  %3871 = vmatpush2.msra.mxu0 0.0
  %3872 = vmatprep.subr.mxu0 0.0
  %3873 = vmatpush2.msra.mxu0 0.0
  %3874 = vmatprep.subr.mxu0 0.0
  %3875 = vmatpush2.msra.mxu0 0.0
  %3876 = vmatprep.subr.mxu0 0.0
  %3877 = vmatpush2.msra.mxu0 0.0
  %3878 = vmatprep.subr.mxu0 0.0
  %3879 = vmatpush2.msra.mxu0 0.0
  %3880 = vmatprep.subr.mxu0 0.0
  %3881 = vmatpush2.msra.mxu0 0.0
  %3882 = vmatprep.subr.mxu0 0.0
  %3883 = vmatpush2.msra.mxu0 0.0
  %3884 = vmatprep.subr.mxu0 0.0
  %3885 = vmatpush2.msra.mxu0 0.0
  %3886 = vmatprep.subr.mxu0 0.0
  %3887 = vmatpush2.msra.mxu0 0.0
  %3888 = vmatprep.subr.mxu0 0.0
  %3889 = vmatpush2.msra.mxu0 0.0
  %3890 = vmatprep.subr.mxu0 0.0
  %3891 = vmatpush2.msra.mxu0 0.0
  %3892 = vmatprep.subr.mxu0 0.0
  %3893 = vmatpush2.msra.mxu0 0.0
  %3894 = vmatprep.subr.mxu0 0.0
  %3895 = vmatpush2.msra.mxu0 0.0
  %3896 = vmatprep.mubr.f32.mxu0 0.0
  %3897 = vmatmul.mubr.f32.gmra.mxu0 %v1975
  %v3898 = vpop.f32.mrf.mxu0
  %v3899 = vadd.f32 0.0, %v3898
  %v3900 = vpop.f32.mrf.mxu0
  %3901 = vdwg.mxu0
  %3902 = vmatprep.subr.mxu0 %v3831
  %3903 = vmatpush1.msra.mxu0 %v3830
  %3904 = vmatprep.subr.mxu0 %v3827
  %3905 = vmatpush1.msra.mxu0 %v3826
  %3906 = vmatprep.subr.mxu0 %v3823
  %3907 = vmatpush1.msra.mxu0 %v3822
  %3908 = vmatprep.subr.mxu0 %v3819
  %3909 = vmatpush1.msra.mxu0 %v3818
  %3910 = vmatprep.subr.mxu0 %v3815
  %3911 = vmatpush1.msra.mxu0 %v3814
  %3912 = vmatprep.subr.mxu0 %v3811
  %3913 = vmatpush1.msra.mxu0 %v3810
  %3914 = vmatprep.subr.mxu0 %v3807
  %3915 = vmatpush1.msra.mxu0 %v3806
  %3916 = vmatprep.subr.mxu0 %v3803
  %3917 = vmatpush1.msra.mxu0 %v3802
  %3918 = vmatprep.subr.mxu0 %v3799
  %3919 = vmatpush1.msra.mxu0 %v3798
  %3920 = vmatprep.subr.mxu0 %v3795
  %3921 = vmatpush1.msra.mxu0 %v3794
  %3922 = vmatprep.subr.mxu0 %v3791
  %3923 = vmatpush1.msra.mxu0 %v3790
  %3924 = vmatprep.subr.mxu0 %v3787
  %3925 = vmatpush1.msra.mxu0 %v3786
  %3926 = vmatprep.subr.mxu0 %v3783
  %3927 = vmatpush1.msra.mxu0 %v3782
  %3928 = vmatprep.subr.mxu0 %v3779
  %3929 = vmatpush1.msra.mxu0 %v3778
  %3930 = vmatprep.subr.mxu0 %v3775
  %3931 = vmatpush1.msra.mxu0 %v3774
  %3932 = vmatprep.subr.mxu0 %v3771
  %3933 = vmatpush1.msra.mxu0 %v3770
  %3934 = vmatprep.subr.mxu0 0.0
  %3935 = vmatpush2.msra.mxu0 0.0
  %3936 = vmatprep.subr.mxu0 0.0
  %3937 = vmatpush2.msra.mxu0 0.0
  %3938 = vmatprep.subr.mxu0 0.0
  %3939 = vmatpush2.msra.mxu0 0.0
  %3940 = vmatprep.subr.mxu0 0.0
  %3941 = vmatpush2.msra.mxu0 0.0
  %3942 = vmatprep.subr.mxu0 0.0
  %3943 = vmatpush2.msra.mxu0 0.0
  %3944 = vmatprep.subr.mxu0 0.0
  %3945 = vmatpush2.msra.mxu0 0.0
  %3946 = vmatprep.subr.mxu0 0.0
  %3947 = vmatpush2.msra.mxu0 0.0
  %3948 = vmatprep.subr.mxu0 0.0
  %3949 = vmatpush2.msra.mxu0 0.0
  %3950 = vmatprep.subr.mxu0 0.0
  %3951 = vmatpush2.msra.mxu0 0.0
  %3952 = vmatprep.subr.mxu0 0.0
  %3953 = vmatpush2.msra.mxu0 0.0
  %3954 = vmatprep.subr.mxu0 0.0
  %3955 = vmatpush2.msra.mxu0 0.0
  %3956 = vmatprep.subr.mxu0 0.0
  %3957 = vmatpush2.msra.mxu0 0.0
  %3958 = vmatprep.subr.mxu0 0.0
  %3959 = vmatpush2.msra.mxu0 0.0
  %3960 = vmatprep.subr.mxu0 0.0
  %3961 = vmatpush2.msra.mxu0 0.0
  %3962 = vmatprep.subr.mxu0 0.0
  %3963 = vmatpush2.msra.mxu0 0.0
  %3964 = vmatprep.subr.mxu0 0.0
  %3965 = vmatpush2.msra.mxu0 0.0
  %3966 = vmatprep.mubr.f32.mxu0 0.0
  %3967 = vmatmul.mubr.f32.gmra.mxu0 %v1975
  %v3968 = vpop.f32.mrf.mxu0
  %v3969 = vadd.f32 0.0, %v3968
  %v3970 = vpop.f32.mrf.mxu0
  %v3971 = vadd.f32 0.0, %v3970
  %3972 = vdwg.mxu0
  %3973 = vmatprep.subr.mxu0 %v3765
  %3974 = vmatpush1.msra.mxu0 %v3764
  %3975 = vmatprep.subr.mxu0 %v3761
  %3976 = vmatpush1.msra.mxu0 %v3760
  %3977 = vmatprep.subr.mxu0 %v3757
  %3978 = vmatpush1.msra.mxu0 %v3756
  %3979 = vmatprep.subr.mxu0 %v3753
  %3980 = vmatpush1.msra.mxu0 %v3752
  %3981 = vmatprep.subr.mxu0 %v3749
  %3982 = vmatpush1.msra.mxu0 %v3748
  %3983 = vmatprep.subr.mxu0 %v3745
  %3984 = vmatpush1.msra.mxu0 %v3744
  %3985 = vmatprep.subr.mxu0 %v3741
  %3986 = vmatpush1.msra.mxu0 %v3740
  %3987 = vmatprep.subr.mxu0 %v3737
  %3988 = vmatpush1.msra.mxu0 %v3736
  %3989 = vmatprep.subr.mxu0 %v3733
  %3990 = vmatpush1.msra.mxu0 %v3732
  %3991 = vmatprep.subr.mxu0 %v3729
  %3992 = vmatpush1.msra.mxu0 %v3728
  %3993 = vmatprep.subr.mxu0 %v3725
  %3994 = vmatpush1.msra.mxu0 %v3724
  %3995 = vmatprep.subr.mxu0 %v3721
  %3996 = vmatpush1.msra.mxu0 %v3720
  %3997 = vmatprep.subr.mxu0 %v3717
  %3998 = vmatpush1.msra.mxu0 %v3716
  %3999 = vmatprep.subr.mxu0 %v3713
  %4000 = vmatpush1.msra.mxu0 %v3712
  %4001 = vmatprep.subr.mxu0 %v3709
  %4002 = vmatpush1.msra.mxu0 %v3708
  %4003 = vmatprep.subr.mxu0 %v3705
  %4004 = vmatpush1.msra.mxu0 %v3704
  %4005 = vmatprep.subr.mxu0 0.0
  %4006 = vmatpush2.msra.mxu0 0.0
  %4007 = vmatprep.subr.mxu0 0.0
  %4008 = vmatpush2.msra.mxu0 0.0
  %4009 = vmatprep.subr.mxu0 0.0
  %4010 = vmatpush2.msra.mxu0 0.0
  %4011 = vmatprep.subr.mxu0 0.0
  %4012 = vmatpush2.msra.mxu0 0.0
  %4013 = vmatprep.subr.mxu0 0.0
  %4014 = vmatpush2.msra.mxu0 0.0
  %4015 = vmatprep.subr.mxu0 0.0
  %4016 = vmatpush2.msra.mxu0 0.0
  %4017 = vmatprep.subr.mxu0 0.0
  %4018 = vmatpush2.msra.mxu0 0.0
  %4019 = vmatprep.subr.mxu0 0.0
  %4020 = vmatpush2.msra.mxu0 0.0
  %4021 = vmatprep.subr.mxu0 0.0
  %4022 = vmatpush2.msra.mxu0 0.0
  %4023 = vmatprep.subr.mxu0 0.0
  %4024 = vmatpush2.msra.mxu0 0.0
  %4025 = vmatprep.subr.mxu0 0.0
  %4026 = vmatpush2.msra.mxu0 0.0
  %4027 = vmatprep.subr.mxu0 0.0
  %4028 = vmatpush2.msra.mxu0 0.0
  %4029 = vmatprep.subr.mxu0 0.0
  %4030 = vmatpush2.msra.mxu0 0.0
  %4031 = vmatprep.subr.mxu0 0.0
  %4032 = vmatpush2.msra.mxu0 0.0
  %4033 = vmatprep.subr.mxu0 0.0
  %4034 = vmatpush2.msra.mxu0 0.0
  %4035 = vmatprep.subr.mxu0 0.0
  %4036 = vmatpush2.msra.mxu0 0.0
  %4037 = vmatprep.mubr.f32.mxu0 0.0
  %4038 = vmatmul.mubr.f32.gmra.mxu0 %v1956
  %v4039 = vpop.f32.mrf.mxu0
  %v4040 = vadd.f32 %v3899, %v4039
  %v4041 = vpop.f32.mrf.mxu0
  %4042 = vdwg.mxu0
  %4043 = vmatprep.subr.mxu0 %v3767
  %4044 = vmatpush1.msra.mxu0 %v3766
  %4045 = vmatprep.subr.mxu0 %v3763
  %4046 = vmatpush1.msra.mxu0 %v3762
  %4047 = vmatprep.subr.mxu0 %v3759
  %4048 = vmatpush1.msra.mxu0 %v3758
  %4049 = vmatprep.subr.mxu0 %v3755
  %4050 = vmatpush1.msra.mxu0 %v3754
  %4051 = vmatprep.subr.mxu0 %v3751
  %4052 = vmatpush1.msra.mxu0 %v3750
  %4053 = vmatprep.subr.mxu0 %v3747
  %4054 = vmatpush1.msra.mxu0 %v3746
  %4055 = vmatprep.subr.mxu0 %v3743
  %4056 = vmatpush1.msra.mxu0 %v3742
  %4057 = vmatprep.subr.mxu0 %v3739
  %4058 = vmatpush1.msra.mxu0 %v3738
  %4059 = vmatprep.subr.mxu0 %v3735
  %4060 = vmatpush1.msra.mxu0 %v3734
  %4061 = vmatprep.subr.mxu0 %v3731
  %4062 = vmatpush1.msra.mxu0 %v3730
  %4063 = vmatprep.subr.mxu0 %v3727
  %4064 = vmatpush1.msra.mxu0 %v3726
  %4065 = vmatprep.subr.mxu0 %v3723
  %4066 = vmatpush1.msra.mxu0 %v3722
  %4067 = vmatprep.subr.mxu0 %v3719
  %4068 = vmatpush1.msra.mxu0 %v3718
  %4069 = vmatprep.subr.mxu0 %v3715
  %4070 = vmatpush1.msra.mxu0 %v3714
  %4071 = vmatprep.subr.mxu0 %v3711
  %4072 = vmatpush1.msra.mxu0 %v3710
  %4073 = vmatprep.subr.mxu0 %v3707
  %4074 = vmatpush1.msra.mxu0 %v3706
  %4075 = vmatprep.subr.mxu0 0.0
  %4076 = vmatpush2.msra.mxu0 0.0
  %4077 = vmatprep.subr.mxu0 0.0
  %4078 = vmatpush2.msra.mxu0 0.0
  %4079 = vmatprep.subr.mxu0 0.0
  %4080 = vmatpush2.msra.mxu0 0.0
  %4081 = vmatprep.subr.mxu0 0.0
  %4082 = vmatpush2.msra.mxu0 0.0
  %4083 = vmatprep.subr.mxu0 0.0
  %4084 = vmatpush2.msra.mxu0 0.0
  %4085 = vmatprep.subr.mxu0 0.0
  %4086 = vmatpush2.msra.mxu0 0.0
  %4087 = vmatprep.subr.mxu0 0.0
  %4088 = vmatpush2.msra.mxu0 0.0
  %4089 = vmatprep.subr.mxu0 0.0
  %4090 = vmatpush2.msra.mxu0 0.0
  %4091 = vmatprep.subr.mxu0 0.0
  %4092 = vmatpush2.msra.mxu0 0.0
  %4093 = vmatprep.subr.mxu0 0.0
  %4094 = vmatpush2.msra.mxu0 0.0
  %4095 = vmatprep.subr.mxu0 0.0
  %4096 = vmatpush2.msra.mxu0 0.0
  %4097 = vmatprep.subr.mxu0 0.0
  %4098 = vmatpush2.msra.mxu0 0.0
  %4099 = vmatprep.subr.mxu0 0.0
  %4100 = vmatpush2.msra.mxu0 0.0
  %4101 = vmatprep.subr.mxu0 0.0
  %4102 = vmatpush2.msra.mxu0 0.0
  %4103 = vmatprep.subr.mxu0 0.0
  %4104 = vmatpush2.msra.mxu0 0.0
  %4105 = vmatprep.subr.mxu0 0.0
  %4106 = vmatpush2.msra.mxu0 0.0
  %4107 = vmatprep.mubr.f32.mxu0 0.0
  %4108 = vmatmul.mubr.f32.gmra.mxu0 %v1956
  %v4109 = vpop.f32.mrf.mxu0
  %v4110 = vadd.f32 %v3969, %v4109
  %v4111 = vpop.f32.mrf.mxu0
  %v4112 = vadd.f32 %v3971, %v4111
  %4113 = vdwg.mxu0
  %v4114 = vld [vmem:[%s8] sm:$0xf]
  %v4116 = vlaneseq
  %v4117 = vshrl.u32 %v4116, 7
  %v4118 = vsub.s32 0, %v4117
  %v4119 = vrot.slane %v4114, %v4118
  %v4120 = vlaneseq
  %v4121 = vshrl.u32 %v4120, 7
  %v4122 = vsub.s32 2, %v4121
  %v4123 = vrot.slane %v4114, %v4122
  %v4124 = vlaneseq
  %v4125 = vshrl.u32 %v4124, 7
  %v4126 = vsub.s32 3, %v4125
  %v4127 = vrot.slane %v4114, %v4126
  %v4131 = vadd.f32 %v4040, %v4119
  %v4132 = vadd.f32 %v4110, %v4123
  %v4133 = vadd.f32 %v4112, %v4127
  %v4134 = vxor.u32 %v4131, 2147483648
  %v4135 = vmul.f32 %v4134, 1.442695
  %v4136 = vpow.pop %v4135
  %v4137 = vadd.f32 %v4136, 1.0
  %v4138 = vrcp.pop %v4137
  %v4139 = vmul.f32 1.0, %v4138
  %v4140 = vtanh.pop %v4132
  %v4141 = vxor.u32 %v4133, 2147483648
  %v4142 = vmul.f32 %v4141, 1.442695
  %v4143 = vpow.pop %v4142
  %v4144 = vadd.f32 %v4143, 1.0
  %v4145 = vrcp.pop %v4144
  %v4146 = vmul.f32 1.0, %v4145
  %v4147 = vmul.f32 %v4139, %v4140
  %v4148 = vtanh.pop %v4147
  %v4149 = vmul.f32 %v4146, %v4148
  %4150 = vst [vmem:[%s9] sm:$0xff] %v3703
  %4151 = vst [vmem:[%s9 + $0x8] sm:$0xff] %v4149
  // Predicated region
  $region38: #{inertial_encoder_forward.1} parent=0 // pred_check
    _
  $region39: #{inertial_encoder_forward.1} parent=0 // pred_check_branch
    %4153 = sbr.rel (0) target = $region41
  $region40: #{inertial_encoder_forward.1} parent=0 // pred_region
    _
  $region41: #{inertial_encoder_forward.1} parent=0 // pred_fallthru
    _
  // Predicated region
  $region42: #{inertial_encoder_forward.1} parent=0 // pred_check
    _
  $region43: #{inertial_encoder_forward.1} parent=0 // pred_check_branch
    %4155 = sbr.rel (0) target = $region45
  $region44: #{inertial_encoder_forward.1} parent=0 // pred_region
    _
  $region45: #{inertial_encoder_forward.1} parent=0 // pred_fallthru
    _

</llo_original>
